<compile_context>
chip_gen: v7x
topology: tpu7x:2x2x1
jax: 0.10.0
libtpu: 0.0.40
codegen_flags: <defaults>
</compile_context>

<pallas_src>
import jax
import jax.numpy as jnp
from jax import lax
from jax.experimental import pallas as pl
from jax.experimental.pallas import tpu as pltpu

IN_FEATURES = 6373
HIDDEN = 256
OUT_FEATURES = 2       # task != 'regression' -> 2 logits
EPS = 1e-5             # torch.nn.LayerNorm default eps

IN_PAD = 6400          # next multiple of 128 >= 6373 (50 * 128)
OUT_PAD = 128          # lane-dense output width
PARAM_ROWS = 8         # row 0 = b1, 1 = gamma, 2 = beta, 3 = b2 (first lanes)
MAX_B_TILE = 128       # keeps x/w1 double-buffered footprint ~19 MiB


def _round_up(n, m):
    return ((n + m - 1) // m) * m


def _cdiv(a, b):
    return (a + b - 1) // b


def mlp_kernel(x_ref, w1_ref, params_ref, w2_ref, o_ref):
    # Linear(6373 -> 256): w1 is a single VMEM-resident block (constant
    # index_map), so only x streams per batch tile.
    h = jnp.dot(x_ref[...], w1_ref[...], preferred_element_type=jnp.float32)

    p = params_ref[...]                           # [PARAM_ROWS, 256] f32
    h = h + p[0:1, :]                             # + b1

    # LayerNorm(256) over the (unpadded) hidden dim.
    mean = jnp.mean(h, axis=-1, keepdims=True)
    centered = h - mean
    var = jnp.mean(centered * centered, axis=-1, keepdims=True)
    hn = centered * lax.rsqrt(var + EPS)
    hn = hn * p[1:2, :] + p[2:3, :]               # * gamma + beta
    hn = jnp.maximum(hn, 0.0)                     # ReLU

    # Linear(256 -> 2), padded to 128 output lanes; b2 lives in params row 3.
    o_ref[...] = (jnp.dot(hn, w2_ref[...], preferred_element_type=jnp.float32)
                  + p[3:4, :OUT_PAD])


def prepare_params(w1, b1, gamma, beta, w2, b2, *, use_bf16_w1=False):
    """Pad / pack module parameters ONCE (call at init, reuse per forward).

    w1: [6373, 256], w2: [256, 2] stored as [in, out] (transposed vs. the
    PyTorch nn.Linear [out, in] convention).
    """
    w_dtype = jnp.bfloat16 if use_bf16_w1 else jnp.float32
    w1_p = jnp.zeros((IN_PAD, HIDDEN), w_dtype).at[:IN_FEATURES, :].set(
        w1.astype(w_dtype))

    params_p = jnp.zeros((PARAM_ROWS, HIDDEN), jnp.float32)
    params_p = params_p.at[0, :].set(b1.astype(jnp.float32))
    params_p = params_p.at[1, :].set(gamma.astype(jnp.float32))
    params_p = params_p.at[2, :].set(beta.astype(jnp.float32))
    params_p = params_p.at[3, :OUT_FEATURES].set(b2.astype(jnp.float32))

    w2_p = jnp.zeros((HIDDEN, OUT_PAD), jnp.float32).at[:, :OUT_FEATURES].set(
        w2.astype(jnp.float32))
    return w1_p, params_p, w2_p


def audio_open_smile_forward(audio_features, w1_p, params_p, w2_p):
    """audio_features: [B, 6373]. Returns [B, 2] f32 logits."""
    B = audio_features.shape[0]

    # Batch tiling: single tile for small batches; otherwise cdiv(B, 128)
    # tiles so v7x megacore gets >=2 parallel tiles and the tail tile is
    # never mostly padding.
    if B <= MAX_B_TILE:
        n_tiles = 1
        b_tile = _round_up(B, 8)
    else:
        n_tiles = _cdiv(B, MAX_B_TILE)
        b_tile = _round_up(_cdiv(B, n_tiles), 8)
    b_pad = n_tiles * b_tile

    # Match x dtype to w1 (bf16 halves the x stream when use_bf16_w1=True).
    x = audio_features.astype(w1_p.dtype)
    # Single pad op instead of zero-slab + scatter; padded feature columns are
    # don't-care because the corresponding w1 rows are zero.
    x_p = jnp.pad(x, ((0, b_pad - B), (0, IN_PAD - IN_FEATURES)))

    out_padded = pl.pallas_call(
        mlp_kernel,
        out_shape=jax.ShapeDtypeStruct((b_pad, OUT_PAD), jnp.float32),
        grid_spec=pltpu.PrefetchScalarGridSpec(
            num_scalar_prefetch=0,
            grid=(n_tiles,),
            in_specs=[
                # activations: tiled over the batch only
                pl.BlockSpec((b_tile, IN_PAD), lambda b: (b, 0)),
                # w1: one block, constant index -> fetched once, VMEM-resident
                pl.BlockSpec((IN_PAD, HIDDEN), lambda b: (0, 0)),
                # packed b1 / gamma / beta / b2
                pl.BlockSpec((PARAM_ROWS, HIDDEN), lambda b: (0, 0)),
                # second linear weight
                pl.BlockSpec((HIDDEN, OUT_PAD), lambda b: (0, 0)),
            ],
            out_specs=pl.BlockSpec((b_tile, OUT_PAD), lambda b: (b, 0)),
        ),
        compiler_params=pltpu.CompilerParams(
            dimension_semantics=("parallel",),
            # Needed on v5e (16 MiB default scope); <= default on v6e/v7x and
            # well under v7x's 64 MiB physical VMEM.
            vmem_limit_bytes=32 << 20),
    )(x_p, w1_p, params_p, w2_p)

    return out_padded[:B, :OUT_FEATURES]


def _xavier_uniform(key, fan_in, fan_out):
    bound = (6.0 / (fan_in + fan_out)) ** 0.5
    # stored as [in, out] (transposed vs. PyTorch); same xavier bound either way
    return jax.random.uniform(key, (fan_in, fan_out), jnp.float32, -bound, bound)


def init_params(key):
    k1, k2 = jax.random.split(key, 2)
    w1 = _xavier_uniform(k1, IN_FEATURES, HIDDEN)
    b1 = jnp.zeros((HIDDEN,), jnp.float32)
    gamma = jnp.ones((HIDDEN,), jnp.float32)      # LayerNorm weight init
    beta = jnp.zeros((HIDDEN,), jnp.float32)      # LayerNorm bias init
    w2 = _xavier_uniform(k2, HIDDEN, OUT_FEATURES)
    b2 = jnp.zeros((OUT_FEATURES,), jnp.float32)
    return w1, b1, gamma, beta, w2, b2


def _reference(audio_features, w1, b1, gamma, beta, w2, b2):
    h = audio_features @ w1 + b1
    mean = jnp.mean(h, axis=-1, keepdims=True)
    var = jnp.mean((h - mean) ** 2, axis=-1, keepdims=True)
    h = (h - mean) * lax.rsqrt(var + EPS) * gamma + beta
    h = jnp.maximum(h, 0.0)
    return h @ w2 + b2


if __name__ == "__main__":
    key = jax.random.PRNGKey(0)
    k_params, k_x = jax.random.split(key)

    raw_params = init_params(k_params)
    padded_params = prepare_params(*raw_params)   # hoisted: done once at init

    batch = 2
    # a, b, c, d of the PyTorch forward are unused; only audio_features matters.
    audio_features = jax.random.normal(k_x, (batch, IN_FEATURES), jnp.float32)

    fwd = jax.jit(audio_open_smile_forward)
    out = fwd(audio_features, *padded_params)
    out = jax.block_until_ready(out)

    ref = _reference(audio_features, *raw_params)
    assert out.shape == (batch, OUT_FEATURES)
    assert jnp.allclose(out, ref, atol=5e-4, rtol=5e-4), (
        float(jnp.max(jnp.abs(out - ref))))

    print("KERNEL_OK")
</pallas_src>

<mosaic_0001>
module attributes {stable_mosaic.version = 11 : i64} {
  func.func @mlp_kernel(%arg0: i32, %arg1: memref<8x6400xf32, #tpu.memory_space<vmem>>, %arg2: memref<6400x256xf32, #tpu.memory_space<vmem>>, %arg3: memref<8x256xf32, #tpu.memory_space<vmem>>, %arg4: memref<256x128xf32, #tpu.memory_space<vmem>>, %arg5: memref<8x128xf32, #tpu.memory_space<vmem>>) attributes {dimension_semantics = [#tpu.dimension_semantics<parallel>], iteration_bounds = array<i64: 1>, scalar_prefetch = 0 : i64, scratch_operands = 0 : i64, tpu.core_type = #tpu.core_type<tc>, window_params = [{transform_indices = @transform_0, window_bounds = array<i64: 8, 6400>}, {pipeline_mode = #tpu.pipeline_mode<synchronous>, transform_indices = @transform_1, window_bounds = array<i64: 6400, 256>}, {pipeline_mode = #tpu.pipeline_mode<synchronous>, transform_indices = @transform_2, window_bounds = array<i64: 8, 256>}, {pipeline_mode = #tpu.pipeline_mode<synchronous>, transform_indices = @transform_3, window_bounds = array<i64: 256, 128>}, {transform_indices = @transform_4, window_bounds = array<i64: 8, 128>}]} {
    %c0 = arith.constant 0 : index
    %c0_0 = arith.constant 0 : index
    %0 = vector.load %arg1[%c0, %c0_0] : memref<8x6400xf32, #tpu.memory_space<vmem>>, vector<8x6400xf32>
    %c0_1 = arith.constant 0 : index
    %c0_2 = arith.constant 0 : index
    %1 = vector.load %arg2[%c0_1, %c0_2] : memref<6400x256xf32, #tpu.memory_space<vmem>>, vector<6400x256xf32>
    %cst = arith.constant dense<0.000000e+00> : vector<8x256xf32>
    %2 = tpu.matmul %0, %1, %cst {dimension_numbers = #tpu.dot_dimension_numbers<[1], [0], [0], [1], [0, 0, 1, 1], [], []>} : vector<8x6400xf32>, vector<6400x256xf32>, vector<8x256xf32> -> vector<8x256xf32>
    %c0_3 = arith.constant 0 : index
    %c0_4 = arith.constant 0 : index
    %3 = vector.load %arg3[%c0_3, %c0_4] : memref<8x256xf32, #tpu.memory_space<vmem>>, vector<8x256xf32>
    %4 = vector.extract_strided_slice %3 {offsets = [0, 0], sizes = [1, 256], strides = [1, 1]} : vector<8x256xf32> to vector<1x256xf32>
    %5 = vector.broadcast %4 : vector<1x256xf32> to vector<8x256xf32>
    %6 = arith.addf %2, %5 : vector<8x256xf32>
    %cst_5 = arith.constant dense<0.000000e+00> : vector<8xf32>
    %7 = vector.multi_reduction <add>, %6, %cst_5 [1] : vector<8x256xf32> to vector<8xf32>
    %8 = vector.shape_cast %7 : vector<8xf32> to vector<8x1xf32>
    %cst_6 = arith.constant 2.560000e+02 : f32
    %9 = vector.broadcast %cst_6 : f32 to vector<8x1xf32>
    %10 = arith.divf %8, %9 : vector<8x1xf32>
    %11 = vector.broadcast %10 : vector<8x1xf32> to vector<8x256xf32>
    %12 = arith.subf %6, %11 : vector<8x256xf32>
    %13 = arith.mulf %12, %12 : vector<8x256xf32>
    %cst_7 = arith.constant dense<0.000000e+00> : vector<8xf32>
    %14 = vector.multi_reduction <add>, %13, %cst_7 [1] : vector<8x256xf32> to vector<8xf32>
    %15 = vector.shape_cast %14 : vector<8xf32> to vector<8x1xf32>
    %cst_8 = arith.constant 2.560000e+02 : f32
    %16 = vector.broadcast %cst_8 : f32 to vector<8x1xf32>
    %17 = arith.divf %15, %16 : vector<8x1xf32>
    %cst_9 = arith.constant 9.99999974E-6 : f32
    %18 = vector.broadcast %cst_9 : f32 to vector<8x1xf32>
    %19 = arith.addf %17, %18 : vector<8x1xf32>
    %20 = math.rsqrt %19 : vector<8x1xf32>
    %21 = vector.broadcast %20 : vector<8x1xf32> to vector<8x256xf32>
    %22 = arith.mulf %12, %21 : vector<8x256xf32>
    %23 = vector.extract_strided_slice %3 {offsets = [1, 0], sizes = [1, 256], strides = [1, 1]} : vector<8x256xf32> to vector<1x256xf32>
    %24 = vector.broadcast %23 : vector<1x256xf32> to vector<8x256xf32>
    %25 = arith.mulf %22, %24 : vector<8x256xf32>
    %26 = vector.extract_strided_slice %3 {offsets = [2, 0], sizes = [1, 256], strides = [1, 1]} : vector<8x256xf32> to vector<1x256xf32>
    %27 = vector.broadcast %26 : vector<1x256xf32> to vector<8x256xf32>
    %28 = arith.addf %25, %27 : vector<8x256xf32>
    %cst_10 = arith.constant 0.000000e+00 : f32
    %29 = vector.broadcast %cst_10 : f32 to vector<8x256xf32>
    %30 = arith.maximumf %28, %29 : vector<8x256xf32>
    %c0_11 = arith.constant 0 : index
    %c0_12 = arith.constant 0 : index
    %31 = vector.load %arg4[%c0_11, %c0_12] : memref<256x128xf32, #tpu.memory_space<vmem>>, vector<256x128xf32>
    %cst_13 = arith.constant dense<0.000000e+00> : vector<8x128xf32>
    %32 = tpu.matmul %30, %31, %cst_13 {dimension_numbers = #tpu.dot_dimension_numbers<[1], [0], [0], [1], [0, 0, 1, 1], [], []>} : vector<8x256xf32>, vector<256x128xf32>, vector<8x128xf32> -> vector<8x128xf32>
    %33 = vector.extract_strided_slice %3 {offsets = [3, 0], sizes = [1, 128], strides = [1, 1]} : vector<8x256xf32> to vector<1x128xf32>
    %34 = vector.broadcast %33 : vector<1x128xf32> to vector<8x128xf32>
    %35 = arith.addf %32, %34 : vector<8x128xf32>
    %c0_14 = arith.constant 0 : index
    %c0_15 = arith.constant 0 : index
    %36 = vector.load %arg5[%c0_14, %c0_15] : memref<8x128xf32, #tpu.memory_space<vmem>>, vector<8x128xf32>
    tpu.vector_store %arg5[%c0_14, %c0_15], %35 {strides = array<i32>} : memref<8x128xf32, #tpu.memory_space<vmem>>, vector<8x128xf32>,
    return
  }
  func.func @transform_0(%arg0: i32) -> (i32, i32) {
    %c0_i32 = arith.constant 0 : i32
    %c0_i32_0 = arith.constant 0 : i32
    return %arg0, %c0_i32 : i32, i32
  }
  func.func @transform_1(%arg0: i32) -> (i32, i32) {
    %c0_i32 = arith.constant 0 : i32
    %c0_i32_0 = arith.constant 0 : i32
    %c0_i32_1 = arith.constant 0 : i32
    return %c0_i32, %c0_i32_0 : i32, i32
  }
  func.func @transform_2(%arg0: i32) -> (i32, i32) {
    %c0_i32 = arith.constant 0 : i32
    %c0_i32_0 = arith.constant 0 : i32
    %c0_i32_1 = arith.constant 0 : i32
    return %c0_i32, %c0_i32_0 : i32, i32
  }
  func.func @transform_3(%arg0: i32) -> (i32, i32) {
    %c0_i32 = arith.constant 0 : i32
    %c0_i32_0 = arith.constant 0 : i32
    %c0_i32_1 = arith.constant 0 : i32
    return %c0_i32, %c0_i32_0 : i32, i32
  }
  func.func @transform_4(%arg0: i32) -> (i32, i32) {
    %c0_i32 = arith.constant 0 : i32
    %c0_i32_0 = arith.constant 0 : i32
    return %arg0, %c0_i32 : i32, i32
  }
}

</mosaic_0001>

<llo_original>
// kernel: audio_open_smile_forward.1
$region0: #{audio_open_smile_forward.1}
  #allocation0 [shape = 'u32[]', space=smem, size = 0x4, offset = 0x4, fixed_abs, tag = 'smem constant byte address 0x4 - core index']
  #allocation1 [shape = 'u32[144,128]{1,0:T(1,128)}', space=vmem, size = 0x12000, scoped, tag = 'internal scratch']
  %s0 = inlined_call_operand.vmem [shape: f32[8,6400], index: 0, kind: input, shape index: {}]
  %s1 = inlined_call_operand.hbm [shape: f32[6400,256], index: 1, kind: input, shape index: {}]
  %s2 = inlined_call_operand.hbm [shape: f32[8,256], index: 2, kind: input, shape index: {}]
  %s3 = inlined_call_operand.hbm [shape: f32[256,128], index: 3, kind: input, shape index: {}]
  %s4 = inlined_call_operand.vmem [shape: f32[8,128], index: 4, kind: output, shape index: {}]
  %s5 = sld [smem:[#allocation0]]
  $region38: #{audio_open_smile_forward.1} parent=0
    _
  %s7 = ssub.s32 1, %s5
  %s8 = scalar_select 0, %s7, %s5
  $region1: #{audio_open_smile_forward.1} parent=0
    #allocation2 [shape = 'u8[6553600]{0}', space=vmem, size = 0x640000, scoped, tag = 'input window, operand 1, single buffered']
    #allocation3 [shape = 's32[1]{0}', space=sflag, size = 0x4, scoped, tag = 'scoped memory for audio_open_smile_forward.1']
    #allocation4 [shape = 'u8[8192]{0}', space=vmem, size = 0x2000, scoped, tag = 'input window, operand 2, single buffered']
    #allocation5 [shape = 's32[1]{0}', space=sflag, size = 0x4, scoped, tag = 'scoped memory for audio_open_smile_forward.1']
    #allocation6 [shape = 'u8[131072]{0}', space=vmem, size = 0x20000, scoped, tag = 'input window, operand 3, single buffered']
    %9 = vsyncpa [#allocation3], 0
    %10 = vsyncpa [#allocation5], 0
    // Predicated region
    $region2: #{audio_open_smile_forward.1} parent=1 // pred_check
      _
    $region3: #{audio_open_smile_forward.1} parent=1 // pred_check_branch
      %12 = sbr.rel (0) target = $region5
    $region4: #{audio_open_smile_forward.1} parent=1 // pred_region
      _
    $region5: #{audio_open_smile_forward.1} parent=1 // pred_fallthru
      _
    // Predicated region
    $region6: #{audio_open_smile_forward.1} parent=1 // pred_check
      _
    $region7: #{audio_open_smile_forward.1} parent=1 // pred_check_branch
      %14 = sbr.rel (0) target = $region9
    $region8: #{audio_open_smile_forward.1} parent=1 // pred_region
      %s16 = ssub.s32 204800, 204800
      %17 = vsyncadd [#allocation3], %s16
      %s18 = sshll.u32 [#allocation2], 4
      %s19 = int_to_ptr.vmem [resolvable:$true] %s18
      %24 = dma.hbm_to_vmem [thread:$0]  %s1, 204800, %s19, [#allocation3], 256, 256, 16
    $region9: #{audio_open_smile_forward.1} parent=1 // pred_fallthru
      _
    // Predicated region
    $region10: #{audio_open_smile_forward.1} parent=1 // pred_check
      _
    $region11: #{audio_open_smile_forward.1} parent=1 // pred_check_branch
      %26 = sbr.rel (0) target = $region13
    $region12: #{audio_open_smile_forward.1} parent=1 // pred_region
      %s28 = ssub.s32 256, 256
      %29 = vsyncadd [#allocation5], %s28
      %s31 = sshll.u32 [#allocation4], 4
      %s32 = int_to_ptr.vmem [resolvable:$true] %s31
      %34 = dma.hbm_to_vmem [thread:$0]  %s2, 256, %s32, [#allocation5]
    $region13: #{audio_open_smile_forward.1} parent=1 // pred_fallthru
      _
    // Predicated region
    $region14: #{audio_open_smile_forward.1} parent=1 // pred_check
      _
    $region15: #{audio_open_smile_forward.1} parent=1 // pred_check_branch
      %36 = sbr.rel (0) target = $region17
    $region16: #{audio_open_smile_forward.1} parent=1 // pred_region
      %s38 = ssub.s32 4096, 4096
      %39 = vsyncadd [#allocation5], %s38
      %s40 = sshll.u32 [#allocation6], 4
      %s41 = int_to_ptr.vmem [resolvable:$true] %s40
      %46 = dma.hbm_to_vmem [thread:$0]  %s3, 4096, %s41, [#allocation5], 128, 128, 8
    $region17: #{audio_open_smile_forward.1} parent=1 // pred_fallthru
      _
    // Predicated region
    $region18: #{audio_open_smile_forward.1} parent=1 // pred_check
      _
    $region19: #{audio_open_smile_forward.1} parent=1 // pred_check_branch
      %48 = sbr.rel (0) target = $region21
    $region20: #{audio_open_smile_forward.1} parent=1 // pred_region
      %49 = dma.done [#allocation3], 204800
    $region21: #{audio_open_smile_forward.1} parent=1 // pred_fallthru
      _
    // Predicated region
    $region22: #{audio_open_smile_forward.1} parent=1 // pred_check
      _
    $region23: #{audio_open_smile_forward.1} parent=1 // pred_check_branch
      %51 = sbr.rel (0) target = $region25
    $region24: #{audio_open_smile_forward.1} parent=1 // pred_region
      %52 = dma.done [#allocation5], 256
    $region25: #{audio_open_smile_forward.1} parent=1 // pred_fallthru
      _
    // Predicated region
    $region26: #{audio_open_smile_forward.1} parent=1 // pred_check
      _
    $region27: #{audio_open_smile_forward.1} parent=1 // pred_check_branch
      %54 = sbr.rel (0) target = $region29
    $region28: #{audio_open_smile_forward.1} parent=1 // pred_region
      %55 = dma.done [#allocation5], 4096
    $region29: #{audio_open_smile_forward.1} parent=1 // pred_fallthru
      _
    %v56 = vld [vmem:[%s0] sm:$0xff]
    %v57 = vld [vmem:[%s0 + $0x8] sm:$0xff]
    %v58 = vld [vmem:[%s0 + $0x10] sm:$0xff]
    %v59 = vld [vmem:[%s0 + $0x18] sm:$0xff]
    %v60 = vld [vmem:[%s0 + $0x20] sm:$0xff]
    %v61 = vld [vmem:[%s0 + $0x28] sm:$0xff]
    %v62 = vld [vmem:[%s0 + $0x30] sm:$0xff]
    %v63 = vld [vmem:[%s0 + $0x38] sm:$0xff]
    %v64 = vld [vmem:[%s0 + $0x40] sm:$0xff]
    %v65 = vld [vmem:[%s0 + $0x48] sm:$0xff]
    %v66 = vld [vmem:[%s0 + $0x50] sm:$0xff]
    %v67 = vld [vmem:[%s0 + $0x58] sm:$0xff]
    %v68 = vld [vmem:[%s0 + $0x60] sm:$0xff]
    %v69 = vld [vmem:[%s0 + $0x68] sm:$0xff]
    %v70 = vld [vmem:[%s0 + $0x70] sm:$0xff]
    %v71 = vld [vmem:[%s0 + $0x78] sm:$0xff]
    %v72 = vld [vmem:[%s0 + $0x80] sm:$0xff]
    %v73 = vld [vmem:[%s0 + $0x88] sm:$0xff]
    %v74 = vld [vmem:[%s0 + $0x90] sm:$0xff]
    %v75 = vld [vmem:[%s0 + $0x98] sm:$0xff]
    %v76 = vld [vmem:[%s0 + $0xa0] sm:$0xff]
    %v77 = vld [vmem:[%s0 + $0xa8] sm:$0xff]
    %v78 = vld [vmem:[%s0 + $0xb0] sm:$0xff]
    %v79 = vld [vmem:[%s0 + $0xb8] sm:$0xff]
    %v80 = vld [vmem:[%s0 + $0xc0] sm:$0xff]
    %v81 = vld [vmem:[%s0 + $0xc8] sm:$0xff]
    %v82 = vld [vmem:[%s0 + $0xd0] sm:$0xff]
    %v83 = vld [vmem:[%s0 + $0xd8] sm:$0xff]
    %v84 = vld [vmem:[%s0 + $0xe0] sm:$0xff]
    %v85 = vld [vmem:[%s0 + $0xe8] sm:$0xff]
    %v86 = vld [vmem:[%s0 + $0xf0] sm:$0xff]
    %v87 = vld [vmem:[%s0 + $0xf8] sm:$0xff]
    %v88 = vld [vmem:[%s0 + $0x100] sm:$0xff]
    %v89 = vld [vmem:[%s0 + $0x108] sm:$0xff]
    %v90 = vld [vmem:[%s0 + $0x110] sm:$0xff]
    %v91 = vld [vmem:[%s0 + $0x118] sm:$0xff]
    %v92 = vld [vmem:[%s0 + $0x120] sm:$0xff]
    %v93 = vld [vmem:[%s0 + $0x128] sm:$0xff]
    %v94 = vld [vmem:[%s0 + $0x130] sm:$0xff]
    %v95 = vld [vmem:[%s0 + $0x138] sm:$0xff]
    %v96 = vld [vmem:[%s0 + $0x140] sm:$0xff]
    %v97 = vld [vmem:[%s0 + $0x148] sm:$0xff]
    %v98 = vld [vmem:[%s0 + $0x150] sm:$0xff]
    %v99 = vld [vmem:[%s0 + $0x158] sm:$0xff]
    %v100 = vld [vmem:[%s0 + $0x160] sm:$0xff]
    %v101 = vld [vmem:[%s0 + $0x168] sm:$0xff]
    %v102 = vld [vmem:[%s0 + $0x170] sm:$0xff]
    %v103 = vld [vmem:[%s0 + $0x178] sm:$0xff]
    %v104 = vld [vmem:[%s0 + $0x180] sm:$0xff]
    %v105 = vld [vmem:[%s0 + $0x188] sm:$0xff]
    %v106 = vld [vmem:[#allocation2] sm:$0xff]
    %v107 = vld [vmem:[#allocation2 + $0x8] sm:$0xff]
    %v108 = vld [vmem:[#allocation2 + $0x10] sm:$0xff]
    %v109 = vld [vmem:[#allocation2 + $0x18] sm:$0xff]
    %v110 = vld [vmem:[#allocation2 + $0x20] sm:$0xff]
    %v111 = vld [vmem:[#allocation2 + $0x28] sm:$0xff]
    %v112 = vld [vmem:[#allocation2 + $0x30] sm:$0xff]
    %v113 = vld [vmem:[#allocation2 + $0x38] sm:$0xff]
    %v114 = vld [vmem:[#allocation2 + $0x40] sm:$0xff]
    %v115 = vld [vmem:[#allocation2 + $0x48] sm:$0xff]
    %v116 = vld [vmem:[#allocation2 + $0x50] sm:$0xff]
    %v117 = vld [vmem:[#allocation2 + $0x58] sm:$0xff]
    %v118 = vld [vmem:[#allocation2 + $0x60] sm:$0xff]
    %v119 = vld [vmem:[#allocation2 + $0x68] sm:$0xff]
    %v120 = vld [vmem:[#allocation2 + $0x70] sm:$0xff]
    %v121 = vld [vmem:[#allocation2 + $0x78] sm:$0xff]
    %v122 = vld [vmem:[#allocation2 + $0x80] sm:$0xff]
    %v123 = vld [vmem:[#allocation2 + $0x88] sm:$0xff]
    %v124 = vld [vmem:[#allocation2 + $0x90] sm:$0xff]
    %v125 = vld [vmem:[#allocation2 + $0x98] sm:$0xff]
    %v126 = vld [vmem:[#allocation2 + $0xa0] sm:$0xff]
    %v127 = vld [vmem:[#allocation2 + $0xa8] sm:$0xff]
    %v128 = vld [vmem:[#allocation2 + $0xb0] sm:$0xff]
    %v129 = vld [vmem:[#allocation2 + $0xb8] sm:$0xff]
    %v130 = vld [vmem:[#allocation2 + $0xc0] sm:$0xff]
    %v131 = vld [vmem:[#allocation2 + $0xc8] sm:$0xff]
    %v132 = vld [vmem:[#allocation2 + $0xd0] sm:$0xff]
    %v133 = vld [vmem:[#allocation2 + $0xd8] sm:$0xff]
    %v134 = vld [vmem:[#allocation2 + $0xe0] sm:$0xff]
    %v135 = vld [vmem:[#allocation2 + $0xe8] sm:$0xff]
    %v136 = vld [vmem:[#allocation2 + $0xf0] sm:$0xff]
    %v137 = vld [vmem:[#allocation2 + $0xf8] sm:$0xff]
    %v138 = vld [vmem:[#allocation2 + $0x100] sm:$0xff]
    %v139 = vld [vmem:[#allocation2 + $0x108] sm:$0xff]
    %v140 = vld [vmem:[#allocation2 + $0x110] sm:$0xff]
    %v141 = vld [vmem:[#allocation2 + $0x118] sm:$0xff]
    %v142 = vld [vmem:[#allocation2 + $0x120] sm:$0xff]
    %v143 = vld [vmem:[#allocation2 + $0x128] sm:$0xff]
    %v144 = vld [vmem:[#allocation2 + $0x130] sm:$0xff]
    %v145 = vld [vmem:[#allocation2 + $0x138] sm:$0xff]
    %v146 = vld [vmem:[#allocation2 + $0x140] sm:$0xff]
    %v147 = vld [vmem:[#allocation2 + $0x148] sm:$0xff]
    %v148 = vld [vmem:[#allocation2 + $0x150] sm:$0xff]
    %v149 = vld [vmem:[#allocation2 + $0x158] sm:$0xff]
    %v150 = vld [vmem:[#allocation2 + $0x160] sm:$0xff]
    %v151 = vld [vmem:[#allocation2 + $0x168] sm:$0xff]
    %v152 = vld [vmem:[#allocation2 + $0x170] sm:$0xff]
    %v153 = vld [vmem:[#allocation2 + $0x178] sm:$0xff]
    %v154 = vld [vmem:[#allocation2 + $0x180] sm:$0xff]
    %v155 = vld [vmem:[#allocation2 + $0x188] sm:$0xff]
    %v156 = vld [vmem:[#allocation2 + $0x190] sm:$0xff]
    %v157 = vld [vmem:[#allocation2 + $0x198] sm:$0xff]
    %v158 = vld [vmem:[#allocation2 + $0x1a0] sm:$0xff]
    %v159 = vld [vmem:[#allocation2 + $0x1a8] sm:$0xff]
    %v160 = vld [vmem:[#allocation2 + $0x1b0] sm:$0xff]
    %v161 = vld [vmem:[#allocation2 + $0x1b8] sm:$0xff]
    %v162 = vld [vmem:[#allocation2 + $0x1c0] sm:$0xff]
    %v163 = vld [vmem:[#allocation2 + $0x1c8] sm:$0xff]
    %v164 = vld [vmem:[#allocation2 + $0x1d0] sm:$0xff]
    %v165 = vld [vmem:[#allocation2 + $0x1d8] sm:$0xff]
    %v166 = vld [vmem:[#allocation2 + $0x1e0] sm:$0xff]
    %v167 = vld [vmem:[#allocation2 + $0x1e8] sm:$0xff]
    %v168 = vld [vmem:[#allocation2 + $0x1f0] sm:$0xff]
    %v169 = vld [vmem:[#allocation2 + $0x1f8] sm:$0xff]
    %v170 = vld [vmem:[#allocation2 + $0x200] sm:$0xff]
    %v171 = vld [vmem:[#allocation2 + $0x208] sm:$0xff]
    %v172 = vld [vmem:[#allocation2 + $0x210] sm:$0xff]
    %v173 = vld [vmem:[#allocation2 + $0x218] sm:$0xff]
    %v174 = vld [vmem:[#allocation2 + $0x220] sm:$0xff]
    %v175 = vld [vmem:[#allocation2 + $0x228] sm:$0xff]
    %v176 = vld [vmem:[#allocation2 + $0x230] sm:$0xff]
    %v177 = vld [vmem:[#allocation2 + $0x238] sm:$0xff]
    %v178 = vld [vmem:[#allocation2 + $0x240] sm:$0xff]
    %v179 = vld [vmem:[#allocation2 + $0x248] sm:$0xff]
    %v180 = vld [vmem:[#allocation2 + $0x250] sm:$0xff]
    %v181 = vld [vmem:[#allocation2 + $0x258] sm:$0xff]
    %v182 = vld [vmem:[#allocation2 + $0x260] sm:$0xff]
    %v183 = vld [vmem:[#allocation2 + $0x268] sm:$0xff]
    %v184 = vld [vmem:[#allocation2 + $0x270] sm:$0xff]
    %v185 = vld [vmem:[#allocation2 + $0x278] sm:$0xff]
    %v186 = vld [vmem:[#allocation2 + $0x280] sm:$0xff]
    %v187 = vld [vmem:[#allocation2 + $0x288] sm:$0xff]
    %v188 = vld [vmem:[#allocation2 + $0x290] sm:$0xff]
    %v189 = vld [vmem:[#allocation2 + $0x298] sm:$0xff]
    %v190 = vld [vmem:[#allocation2 + $0x2a0] sm:$0xff]
    %v191 = vld [vmem:[#allocation2 + $0x2a8] sm:$0xff]
    %v192 = vld [vmem:[#allocation2 + $0x2b0] sm:$0xff]
    %v193 = vld [vmem:[#allocation2 + $0x2b8] sm:$0xff]
    %v194 = vld [vmem:[#allocation2 + $0x2c0] sm:$0xff]
    %v195 = vld [vmem:[#allocation2 + $0x2c8] sm:$0xff]
    %v196 = vld [vmem:[#allocation2 + $0x2d0] sm:$0xff]
    %v197 = vld [vmem:[#allocation2 + $0x2d8] sm:$0xff]
    %v198 = vld [vmem:[#allocation2 + $0x2e0] sm:$0xff]
    %v199 = vld [vmem:[#allocation2 + $0x2e8] sm:$0xff]
    %v200 = vld [vmem:[#allocation2 + $0x2f0] sm:$0xff]
    %v201 = vld [vmem:[#allocation2 + $0x2f8] sm:$0xff]
    %v202 = vld [vmem:[#allocation2 + $0x300] sm:$0xff]
    %v203 = vld [vmem:[#allocation2 + $0x308] sm:$0xff]
    %v204 = vld [vmem:[#allocation2 + $0x310] sm:$0xff]
    %v205 = vld [vmem:[#allocation2 + $0x318] sm:$0xff]
    %v206 = vld [vmem:[#allocation2 + $0x320] sm:$0xff]
    %v207 = vld [vmem:[#allocation2 + $0x328] sm:$0xff]
    %v208 = vld [vmem:[#allocation2 + $0x330] sm:$0xff]
    %v209 = vld [vmem:[#allocation2 + $0x338] sm:$0xff]
    %v210 = vld [vmem:[#allocation2 + $0x340] sm:$0xff]
    %v211 = vld [vmem:[#allocation2 + $0x348] sm:$0xff]
    %v212 = vld [vmem:[#allocation2 + $0x350] sm:$0xff]
    %v213 = vld [vmem:[#allocation2 + $0x358] sm:$0xff]
    %v214 = vld [vmem:[#allocation2 + $0x360] sm:$0xff]
    %v215 = vld [vmem:[#allocation2 + $0x368] sm:$0xff]
    %v216 = vld [vmem:[#allocation2 + $0x370] sm:$0xff]
    %v217 = vld [vmem:[#allocation2 + $0x378] sm:$0xff]
    %v218 = vld [vmem:[#allocation2 + $0x380] sm:$0xff]
    %v219 = vld [vmem:[#allocation2 + $0x388] sm:$0xff]
    %v220 = vld [vmem:[#allocation2 + $0x390] sm:$0xff]
    %v221 = vld [vmem:[#allocation2 + $0x398] sm:$0xff]
    %v222 = vld [vmem:[#allocation2 + $0x3a0] sm:$0xff]
    %v223 = vld [vmem:[#allocation2 + $0x3a8] sm:$0xff]
    %v224 = vld [vmem:[#allocation2 + $0x3b0] sm:$0xff]
    %v225 = vld [vmem:[#allocation2 + $0x3b8] sm:$0xff]
    %v226 = vld [vmem:[#allocation2 + $0x3c0] sm:$0xff]
    %v227 = vld [vmem:[#allocation2 + $0x3c8] sm:$0xff]
    %v228 = vld [vmem:[#allocation2 + $0x3d0] sm:$0xff]
    %v229 = vld [vmem:[#allocation2 + $0x3d8] sm:$0xff]
    %v230 = vld [vmem:[#allocation2 + $0x3e0] sm:$0xff]
    %v231 = vld [vmem:[#allocation2 + $0x3e8] sm:$0xff]
    %v232 = vld [vmem:[#allocation2 + $0x3f0] sm:$0xff]
    %v233 = vld [vmem:[#allocation2 + $0x3f8] sm:$0xff]
    %v234 = vld [vmem:[#allocation2 + $0x400] sm:$0xff]
    %v235 = vld [vmem:[#allocation2 + $0x408] sm:$0xff]
    %v236 = vld [vmem:[#allocation2 + $0x410] sm:$0xff]
    %v237 = vld [vmem:[#allocation2 + $0x418] sm:$0xff]
    %v238 = vld [vmem:[#allocation2 + $0x420] sm:$0xff]
    %v239 = vld [vmem:[#allocation2 + $0x428] sm:$0xff]
    %v240 = vld [vmem:[#allocation2 + $0x430] sm:$0xff]
    %v241 = vld [vmem:[#allocation2 + $0x438] sm:$0xff]
    %v242 = vld [vmem:[#allocation2 + $0x440] sm:$0xff]
    %v243 = vld [vmem:[#allocation2 + $0x448] sm:$0xff]
    %v244 = vld [vmem:[#allocation2 + $0x450] sm:$0xff]
    %v245 = vld [vmem:[#allocation2 + $0x458] sm:$0xff]
    %v246 = vld [vmem:[#allocation2 + $0x460] sm:$0xff]
    %v247 = vld [vmem:[#allocation2 + $0x468] sm:$0xff]
    %v248 = vld [vmem:[#allocation2 + $0x470] sm:$0xff]
    %v249 = vld [vmem:[#allocation2 + $0x478] sm:$0xff]
    %v250 = vld [vmem:[#allocation2 + $0x480] sm:$0xff]
    %v251 = vld [vmem:[#allocation2 + $0x488] sm:$0xff]
    %v252 = vld [vmem:[#allocation2 + $0x490] sm:$0xff]
    %v253 = vld [vmem:[#allocation2 + $0x498] sm:$0xff]
    %v254 = vld [vmem:[#allocation2 + $0x4a0] sm:$0xff]
    %v255 = vld [vmem:[#allocation2 + $0x4a8] sm:$0xff]
    %v256 = vld [vmem:[#allocation2 + $0x4b0] sm:$0xff]
    %v257 = vld [vmem:[#allocation2 + $0x4b8] sm:$0xff]
    %v258 = vld [vmem:[#allocation2 + $0x4c0] sm:$0xff]
    %v259 = vld [vmem:[#allocation2 + $0x4c8] sm:$0xff]
    %v260 = vld [vmem:[#allocation2 + $0x4d0] sm:$0xff]
    %v261 = vld [vmem:[#allocation2 + $0x4d8] sm:$0xff]
    %v262 = vld [vmem:[#allocation2 + $0x4e0] sm:$0xff]
    %v263 = vld [vmem:[#allocation2 + $0x4e8] sm:$0xff]
    %v264 = vld [vmem:[#allocation2 + $0x4f0] sm:$0xff]
    %v265 = vld [vmem:[#allocation2 + $0x4f8] sm:$0xff]
    %v266 = vld [vmem:[#allocation2 + $0x500] sm:$0xff]
    %v267 = vld [vmem:[#allocation2 + $0x508] sm:$0xff]
    %v268 = vld [vmem:[#allocation2 + $0x510] sm:$0xff]
    %v269 = vld [vmem:[#allocation2 + $0x518] sm:$0xff]
    %v270 = vld [vmem:[#allocation2 + $0x520] sm:$0xff]
    %v271 = vld [vmem:[#allocation2 + $0x528] sm:$0xff]
    %v272 = vld [vmem:[#allocation2 + $0x530] sm:$0xff]
    %v273 = vld [vmem:[#allocation2 + $0x538] sm:$0xff]
    %v274 = vld [vmem:[#allocation2 + $0x540] sm:$0xff]
    %v275 = vld [vmem:[#allocation2 + $0x548] sm:$0xff]
    %v276 = vld [vmem:[#allocation2 + $0x550] sm:$0xff]
    %v277 = vld [vmem:[#allocation2 + $0x558] sm:$0xff]
    %v278 = vld [vmem:[#allocation2 + $0x560] sm:$0xff]
    %v279 = vld [vmem:[#allocation2 + $0x568] sm:$0xff]
    %v280 = vld [vmem:[#allocation2 + $0x570] sm:$0xff]
    %v281 = vld [vmem:[#allocation2 + $0x578] sm:$0xff]
    %v282 = vld [vmem:[#allocation2 + $0x580] sm:$0xff]
    %v283 = vld [vmem:[#allocation2 + $0x588] sm:$0xff]
    %v284 = vld [vmem:[#allocation2 + $0x590] sm:$0xff]
    %v285 = vld [vmem:[#allocation2 + $0x598] sm:$0xff]
    %v286 = vld [vmem:[#allocation2 + $0x5a0] sm:$0xff]
    %v287 = vld [vmem:[#allocation2 + $0x5a8] sm:$0xff]
    %v288 = vld [vmem:[#allocation2 + $0x5b0] sm:$0xff]
    %v289 = vld [vmem:[#allocation2 + $0x5b8] sm:$0xff]
    %v290 = vld [vmem:[#allocation2 + $0x5c0] sm:$0xff]
    %v291 = vld [vmem:[#allocation2 + $0x5c8] sm:$0xff]
    %v292 = vld [vmem:[#allocation2 + $0x5d0] sm:$0xff]
    %v293 = vld [vmem:[#allocation2 + $0x5d8] sm:$0xff]
    %v294 = vld [vmem:[#allocation2 + $0x5e0] sm:$0xff]
    %v295 = vld [vmem:[#allocation2 + $0x5e8] sm:$0xff]
    %v296 = vld [vmem:[#allocation2 + $0x5f0] sm:$0xff]
    %v297 = vld [vmem:[#allocation2 + $0x5f8] sm:$0xff]
    %v298 = vld [vmem:[#allocation2 + $0x600] sm:$0xff]
    %v299 = vld [vmem:[#allocation2 + $0x608] sm:$0xff]
    %v300 = vld [vmem:[#allocation2 + $0x610] sm:$0xff]
    %v301 = vld [vmem:[#allocation2 + $0x618] sm:$0xff]
    %v302 = vld [vmem:[#allocation2 + $0x620] sm:$0xff]
    %v303 = vld [vmem:[#allocation2 + $0x628] sm:$0xff]
    %v304 = vld [vmem:[#allocation2 + $0x630] sm:$0xff]
    %v305 = vld [vmem:[#allocation2 + $0x638] sm:$0xff]
    %v306 = vld [vmem:[#allocation2 + $0x640] sm:$0xff]
    %v307 = vld [vmem:[#allocation2 + $0x648] sm:$0xff]
    %v308 = vld [vmem:[#allocation2 + $0x650] sm:$0xff]
    %v309 = vld [vmem:[#allocation2 + $0x658] sm:$0xff]
    %v310 = vld [vmem:[#allocation2 + $0x660] sm:$0xff]
    %v311 = vld [vmem:[#allocation2 + $0x668] sm:$0xff]
    %v312 = vld [vmem:[#allocation2 + $0x670] sm:$0xff]
    %v313 = vld [vmem:[#allocation2 + $0x678] sm:$0xff]
    %v314 = vld [vmem:[#allocation2 + $0x680] sm:$0xff]
    %v315 = vld [vmem:[#allocation2 + $0x688] sm:$0xff]
    %v316 = vld [vmem:[#allocation2 + $0x690] sm:$0xff]
    %v317 = vld [vmem:[#allocation2 + $0x698] sm:$0xff]
    %v318 = vld [vmem:[#allocation2 + $0x6a0] sm:$0xff]
    %v319 = vld [vmem:[#allocation2 + $0x6a8] sm:$0xff]
    %v320 = vld [vmem:[#allocation2 + $0x6b0] sm:$0xff]
    %v321 = vld [vmem:[#allocation2 + $0x6b8] sm:$0xff]
    %v322 = vld [vmem:[#allocation2 + $0x6c0] sm:$0xff]
    %v323 = vld [vmem:[#allocation2 + $0x6c8] sm:$0xff]
    %v324 = vld [vmem:[#allocation2 + $0x6d0] sm:$0xff]
    %v325 = vld [vmem:[#allocation2 + $0x6d8] sm:$0xff]
    %v326 = vld [vmem:[#allocation2 + $0x6e0] sm:$0xff]
    %v327 = vld [vmem:[#allocation2 + $0x6e8] sm:$0xff]
    %v328 = vld [vmem:[#allocation2 + $0x6f0] sm:$0xff]
    %v329 = vld [vmem:[#allocation2 + $0x6f8] sm:$0xff]
    %v330 = vld [vmem:[#allocation2 + $0x700] sm:$0xff]
    %v331 = vld [vmem:[#allocation2 + $0x708] sm:$0xff]
    %v332 = vld [vmem:[#allocation2 + $0x710] sm:$0xff]
    %v333 = vld [vmem:[#allocation2 + $0x718] sm:$0xff]
    %v334 = vld [vmem:[#allocation2 + $0x720] sm:$0xff]
    %v335 = vld [vmem:[#allocation2 + $0x728] sm:$0xff]
    %v336 = vld [vmem:[#allocation2 + $0x730] sm:$0xff]
    %v337 = vld [vmem:[#allocation2 + $0x738] sm:$0xff]
    %v338 = vld [vmem:[#allocation2 + $0x740] sm:$0xff]
    %v339 = vld [vmem:[#allocation2 + $0x748] sm:$0xff]
    %v340 = vld [vmem:[#allocation2 + $0x750] sm:$0xff]
    %v341 = vld [vmem:[#allocation2 + $0x758] sm:$0xff]
    %v342 = vld [vmem:[#allocation2 + $0x760] sm:$0xff]
    %v343 = vld [vmem:[#allocation2 + $0x768] sm:$0xff]
    %v344 = vld [vmem:[#allocation2 + $0x770] sm:$0xff]
    %v345 = vld [vmem:[#allocation2 + $0x778] sm:$0xff]
    %v346 = vld [vmem:[#allocation2 + $0x780] sm:$0xff]
    %v347 = vld [vmem:[#allocation2 + $0x788] sm:$0xff]
    %v348 = vld [vmem:[#allocation2 + $0x790] sm:$0xff]
    %v349 = vld [vmem:[#allocation2 + $0x798] sm:$0xff]
    %v350 = vld [vmem:[#allocation2 + $0x7a0] sm:$0xff]
    %v351 = vld [vmem:[#allocation2 + $0x7a8] sm:$0xff]
    %v352 = vld [vmem:[#allocation2 + $0x7b0] sm:$0xff]
    %v353 = vld [vmem:[#allocation2 + $0x7b8] sm:$0xff]
    %v354 = vld [vmem:[#allocation2 + $0x7c0] sm:$0xff]
    %v355 = vld [vmem:[#allocation2 + $0x7c8] sm:$0xff]
    %v356 = vld [vmem:[#allocation2 + $0x7d0] sm:$0xff]
    %v357 = vld [vmem:[#allocation2 + $0x7d8] sm:$0xff]
    %v358 = vld [vmem:[#allocation2 + $0x7e0] sm:$0xff]
    %v359 = vld [vmem:[#allocation2 + $0x7e8] sm:$0xff]
    %v360 = vld [vmem:[#allocation2 + $0x7f0] sm:$0xff]
    %v361 = vld [vmem:[#allocation2 + $0x7f8] sm:$0xff]
    %v362 = vld [vmem:[#allocation2 + $0x800] sm:$0xff]
    %v363 = vld [vmem:[#allocation2 + $0x808] sm:$0xff]
    %v364 = vld [vmem:[#allocation2 + $0x810] sm:$0xff]
    %v365 = vld [vmem:[#allocation2 + $0x818] sm:$0xff]
    %v366 = vld [vmem:[#allocation2 + $0x820] sm:$0xff]
    %v367 = vld [vmem:[#allocation2 + $0x828] sm:$0xff]
    %v368 = vld [vmem:[#allocation2 + $0x830] sm:$0xff]
    %v369 = vld [vmem:[#allocation2 + $0x838] sm:$0xff]
    %v370 = vld [vmem:[#allocation2 + $0x840] sm:$0xff]
    %v371 = vld [vmem:[#allocation2 + $0x848] sm:$0xff]
    %v372 = vld [vmem:[#allocation2 + $0x850] sm:$0xff]
    %v373 = vld [vmem:[#allocation2 + $0x858] sm:$0xff]
    %v374 = vld [vmem:[#allocation2 + $0x860] sm:$0xff]
    %v375 = vld [vmem:[#allocation2 + $0x868] sm:$0xff]
    %v376 = vld [vmem:[#allocation2 + $0x870] sm:$0xff]
    %v377 = vld [vmem:[#allocation2 + $0x878] sm:$0xff]
    %v378 = vld [vmem:[#allocation2 + $0x880] sm:$0xff]
    %v379 = vld [vmem:[#allocation2 + $0x888] sm:$0xff]
    %v380 = vld [vmem:[#allocation2 + $0x890] sm:$0xff]
    %v381 = vld [vmem:[#allocation2 + $0x898] sm:$0xff]
    %v382 = vld [vmem:[#allocation2 + $0x8a0] sm:$0xff]
    %v383 = vld [vmem:[#allocation2 + $0x8a8] sm:$0xff]
    %v384 = vld [vmem:[#allocation2 + $0x8b0] sm:$0xff]
    %v385 = vld [vmem:[#allocation2 + $0x8b8] sm:$0xff]
    %v386 = vld [vmem:[#allocation2 + $0x8c0] sm:$0xff]
    %v387 = vld [vmem:[#allocation2 + $0x8c8] sm:$0xff]
    %v388 = vld [vmem:[#allocation2 + $0x8d0] sm:$0xff]
    %v389 = vld [vmem:[#allocation2 + $0x8d8] sm:$0xff]
    %v390 = vld [vmem:[#allocation2 + $0x8e0] sm:$0xff]
    %v391 = vld [vmem:[#allocation2 + $0x8e8] sm:$0xff]
    %v392 = vld [vmem:[#allocation2 + $0x8f0] sm:$0xff]
    %v393 = vld [vmem:[#allocation2 + $0x8f8] sm:$0xff]
    %v394 = vld [vmem:[#allocation2 + $0x900] sm:$0xff]
    %v395 = vld [vmem:[#allocation2 + $0x908] sm:$0xff]
    %v396 = vld [vmem:[#allocation2 + $0x910] sm:$0xff]
    %v397 = vld [vmem:[#allocation2 + $0x918] sm:$0xff]
    %v398 = vld [vmem:[#allocation2 + $0x920] sm:$0xff]
    %v399 = vld [vmem:[#allocation2 + $0x928] sm:$0xff]
    %v400 = vld [vmem:[#allocation2 + $0x930] sm:$0xff]
    %v401 = vld [vmem:[#allocation2 + $0x938] sm:$0xff]
    %v402 = vld [vmem:[#allocation2 + $0x940] sm:$0xff]
    %v403 = vld [vmem:[#allocation2 + $0x948] sm:$0xff]
    %v404 = vld [vmem:[#allocation2 + $0x950] sm:$0xff]
    %v405 = vld [vmem:[#allocation2 + $0x958] sm:$0xff]
    %v406 = vld [vmem:[#allocation2 + $0x960] sm:$0xff]
    %v407 = vld [vmem:[#allocation2 + $0x968] sm:$0xff]
    %v408 = vld [vmem:[#allocation2 + $0x970] sm:$0xff]
    %v409 = vld [vmem:[#allocation2 + $0x978] sm:$0xff]
    %v410 = vld [vmem:[#allocation2 + $0x980] sm:$0xff]
    %v411 = vld [vmem:[#allocation2 + $0x988] sm:$0xff]
    %v412 = vld [vmem:[#allocation2 + $0x990] sm:$0xff]
    %v413 = vld [vmem:[#allocation2 + $0x998] sm:$0xff]
    %v414 = vld [vmem:[#allocation2 + $0x9a0] sm:$0xff]
    %v415 = vld [vmem:[#allocation2 + $0x9a8] sm:$0xff]
    %v416 = vld [vmem:[#allocation2 + $0x9b0] sm:$0xff]
    %v417 = vld [vmem:[#allocation2 + $0x9b8] sm:$0xff]
    %v418 = vld [vmem:[#allocation2 + $0x9c0] sm:$0xff]
    %v419 = vld [vmem:[#allocation2 + $0x9c8] sm:$0xff]
    %v420 = vld [vmem:[#allocation2 + $0x9d0] sm:$0xff]
    %v421 = vld [vmem:[#allocation2 + $0x9d8] sm:$0xff]
    %v422 = vld [vmem:[#allocation2 + $0x9e0] sm:$0xff]
    %v423 = vld [vmem:[#allocation2 + $0x9e8] sm:$0xff]
    %v424 = vld [vmem:[#allocation2 + $0x9f0] sm:$0xff]
    %v425 = vld [vmem:[#allocation2 + $0x9f8] sm:$0xff]
    %v426 = vld [vmem:[#allocation2 + $0xa00] sm:$0xff]
    %v427 = vld [vmem:[#allocation2 + $0xa08] sm:$0xff]
    %v428 = vld [vmem:[#allocation2 + $0xa10] sm:$0xff]
    %v429 = vld [vmem:[#allocation2 + $0xa18] sm:$0xff]
    %v430 = vld [vmem:[#allocation2 + $0xa20] sm:$0xff]
    %v431 = vld [vmem:[#allocation2 + $0xa28] sm:$0xff]
    %v432 = vld [vmem:[#allocation2 + $0xa30] sm:$0xff]
    %v433 = vld [vmem:[#allocation2 + $0xa38] sm:$0xff]
    %v434 = vld [vmem:[#allocation2 + $0xa40] sm:$0xff]
    %v435 = vld [vmem:[#allocation2 + $0xa48] sm:$0xff]
    %v436 = vld [vmem:[#allocation2 + $0xa50] sm:$0xff]
    %v437 = vld [vmem:[#allocation2 + $0xa58] sm:$0xff]
    %v438 = vld [vmem:[#allocation2 + $0xa60] sm:$0xff]
    %v439 = vld [vmem:[#allocation2 + $0xa68] sm:$0xff]
    %v440 = vld [vmem:[#allocation2 + $0xa70] sm:$0xff]
    %v441 = vld [vmem:[#allocation2 + $0xa78] sm:$0xff]
    %v442 = vld [vmem:[#allocation2 + $0xa80] sm:$0xff]
    %v443 = vld [vmem:[#allocation2 + $0xa88] sm:$0xff]
    %v444 = vld [vmem:[#allocation2 + $0xa90] sm:$0xff]
    %v445 = vld [vmem:[#allocation2 + $0xa98] sm:$0xff]
    %v446 = vld [vmem:[#allocation2 + $0xaa0] sm:$0xff]
    %v447 = vld [vmem:[#allocation2 + $0xaa8] sm:$0xff]
    %v448 = vld [vmem:[#allocation2 + $0xab0] sm:$0xff]
    %v449 = vld [vmem:[#allocation2 + $0xab8] sm:$0xff]
    %v450 = vld [vmem:[#allocation2 + $0xac0] sm:$0xff]
    %v451 = vld [vmem:[#allocation2 + $0xac8] sm:$0xff]
    %v452 = vld [vmem:[#allocation2 + $0xad0] sm:$0xff]
    %v453 = vld [vmem:[#allocation2 + $0xad8] sm:$0xff]
    %v454 = vld [vmem:[#allocation2 + $0xae0] sm:$0xff]
    %v455 = vld [vmem:[#allocation2 + $0xae8] sm:$0xff]
    %v456 = vld [vmem:[#allocation2 + $0xaf0] sm:$0xff]
    %v457 = vld [vmem:[#allocation2 + $0xaf8] sm:$0xff]
    %v458 = vld [vmem:[#allocation2 + $0xb00] sm:$0xff]
    %v459 = vld [vmem:[#allocation2 + $0xb08] sm:$0xff]
    %v460 = vld [vmem:[#allocation2 + $0xb10] sm:$0xff]
    %v461 = vld [vmem:[#allocation2 + $0xb18] sm:$0xff]
    %v462 = vld [vmem:[#allocation2 + $0xb20] sm:$0xff]
    %v463 = vld [vmem:[#allocation2 + $0xb28] sm:$0xff]
    %v464 = vld [vmem:[#allocation2 + $0xb30] sm:$0xff]
    %v465 = vld [vmem:[#allocation2 + $0xb38] sm:$0xff]
    %v466 = vld [vmem:[#allocation2 + $0xb40] sm:$0xff]
    %v467 = vld [vmem:[#allocation2 + $0xb48] sm:$0xff]
    %v468 = vld [vmem:[#allocation2 + $0xb50] sm:$0xff]
    %v469 = vld [vmem:[#allocation2 + $0xb58] sm:$0xff]
    %v470 = vld [vmem:[#allocation2 + $0xb60] sm:$0xff]
    %v471 = vld [vmem:[#allocation2 + $0xb68] sm:$0xff]
    %v472 = vld [vmem:[#allocation2 + $0xb70] sm:$0xff]
    %v473 = vld [vmem:[#allocation2 + $0xb78] sm:$0xff]
    %v474 = vld [vmem:[#allocation2 + $0xb80] sm:$0xff]
    %v475 = vld [vmem:[#allocation2 + $0xb88] sm:$0xff]
    %v476 = vld [vmem:[#allocation2 + $0xb90] sm:$0xff]
    %v477 = vld [vmem:[#allocation2 + $0xb98] sm:$0xff]
    %v478 = vld [vmem:[#allocation2 + $0xba0] sm:$0xff]
    %v479 = vld [vmem:[#allocation2 + $0xba8] sm:$0xff]
    %v480 = vld [vmem:[#allocation2 + $0xbb0] sm:$0xff]
    %v481 = vld [vmem:[#allocation2 + $0xbb8] sm:$0xff]
    %v482 = vld [vmem:[#allocation2 + $0xbc0] sm:$0xff]
    %v483 = vld [vmem:[#allocation2 + $0xbc8] sm:$0xff]
    %v484 = vld [vmem:[#allocation2 + $0xbd0] sm:$0xff]
    %v485 = vld [vmem:[#allocation2 + $0xbd8] sm:$0xff]
    %v486 = vld [vmem:[#allocation2 + $0xbe0] sm:$0xff]
    %v487 = vld [vmem:[#allocation2 + $0xbe8] sm:$0xff]
    %v488 = vld [vmem:[#allocation2 + $0xbf0] sm:$0xff]
    %v489 = vld [vmem:[#allocation2 + $0xbf8] sm:$0xff]
    %v490 = vld [vmem:[#allocation2 + $0xc00] sm:$0xff]
    %v491 = vld [vmem:[#allocation2 + $0xc08] sm:$0xff]
    %v492 = vld [vmem:[#allocation2 + $0xc10] sm:$0xff]
    %v493 = vld [vmem:[#allocation2 + $0xc18] sm:$0xff]
    %v494 = vld [vmem:[#allocation2 + $0xc20] sm:$0xff]
    %v495 = vld [vmem:[#allocation2 + $0xc28] sm:$0xff]
    %v496 = vld [vmem:[#allocation2 + $0xc30] sm:$0xff]
    %v497 = vld [vmem:[#allocation2 + $0xc38] sm:$0xff]
    %v498 = vld [vmem:[#allocation2 + $0xc40] sm:$0xff]
    %v499 = vld [vmem:[#allocation2 + $0xc48] sm:$0xff]
    %v500 = vld [vmem:[#allocation2 + $0xc50] sm:$0xff]
    %v501 = vld [vmem:[#allocation2 + $0xc58] sm:$0xff]
    %v502 = vld [vmem:[#allocation2 + $0xc60] sm:$0xff]
    %v503 = vld [vmem:[#allocation2 + $0xc68] sm:$0xff]
    %v504 = vld [vmem:[#allocation2 + $0xc70] sm:$0xff]
    %v505 = vld [vmem:[#allocation2 + $0xc78] sm:$0xff]
    %v506 = vld [vmem:[#allocation2 + $0xc80] sm:$0xff]
    %v507 = vld [vmem:[#allocation2 + $0xc88] sm:$0xff]
    %v508 = vld [vmem:[#allocation2 + $0xc90] sm:$0xff]
    %v509 = vld [vmem:[#allocation2 + $0xc98] sm:$0xff]
    %v510 = vld [vmem:[#allocation2 + $0xca0] sm:$0xff]
    %v511 = vld [vmem:[#allocation2 + $0xca8] sm:$0xff]
    %v512 = vld [vmem:[#allocation2 + $0xcb0] sm:$0xff]
    %v513 = vld [vmem:[#allocation2 + $0xcb8] sm:$0xff]
    %v514 = vld [vmem:[#allocation2 + $0xcc0] sm:$0xff]
    %v515 = vld [vmem:[#allocation2 + $0xcc8] sm:$0xff]
    %v516 = vld [vmem:[#allocation2 + $0xcd0] sm:$0xff]
    %v517 = vld [vmem:[#allocation2 + $0xcd8] sm:$0xff]
    %v518 = vld [vmem:[#allocation2 + $0xce0] sm:$0xff]
    %v519 = vld [vmem:[#allocation2 + $0xce8] sm:$0xff]
    %v520 = vld [vmem:[#allocation2 + $0xcf0] sm:$0xff]
    %v521 = vld [vmem:[#allocation2 + $0xcf8] sm:$0xff]
    %v522 = vld [vmem:[#allocation2 + $0xd00] sm:$0xff]
    %v523 = vld [vmem:[#allocation2 + $0xd08] sm:$0xff]
    %v524 = vld [vmem:[#allocation2 + $0xd10] sm:$0xff]
    %v525 = vld [vmem:[#allocation2 + $0xd18] sm:$0xff]
    %v526 = vld [vmem:[#allocation2 + $0xd20] sm:$0xff]
    %v527 = vld [vmem:[#allocation2 + $0xd28] sm:$0xff]
    %v528 = vld [vmem:[#allocation2 + $0xd30] sm:$0xff]
    %v529 = vld [vmem:[#allocation2 + $0xd38] sm:$0xff]
    %v530 = vld [vmem:[#allocation2 + $0xd40] sm:$0xff]
    %v531 = vld [vmem:[#allocation2 + $0xd48] sm:$0xff]
    %v532 = vld [vmem:[#allocation2 + $0xd50] sm:$0xff]
    %v533 = vld [vmem:[#allocation2 + $0xd58] sm:$0xff]
    %v534 = vld [vmem:[#allocation2 + $0xd60] sm:$0xff]
    %v535 = vld [vmem:[#allocation2 + $0xd68] sm:$0xff]
    %v536 = vld [vmem:[#allocation2 + $0xd70] sm:$0xff]
    %v537 = vld [vmem:[#allocation2 + $0xd78] sm:$0xff]
    %v538 = vld [vmem:[#allocation2 + $0xd80] sm:$0xff]
    %v539 = vld [vmem:[#allocation2 + $0xd88] sm:$0xff]
    %v540 = vld [vmem:[#allocation2 + $0xd90] sm:$0xff]
    %v541 = vld [vmem:[#allocation2 + $0xd98] sm:$0xff]
    %v542 = vld [vmem:[#allocation2 + $0xda0] sm:$0xff]
    %v543 = vld [vmem:[#allocation2 + $0xda8] sm:$0xff]
    %v544 = vld [vmem:[#allocation2 + $0xdb0] sm:$0xff]
    %v545 = vld [vmem:[#allocation2 + $0xdb8] sm:$0xff]
    %v546 = vld [vmem:[#allocation2 + $0xdc0] sm:$0xff]
    %v547 = vld [vmem:[#allocation2 + $0xdc8] sm:$0xff]
    %v548 = vld [vmem:[#allocation2 + $0xdd0] sm:$0xff]
    %v549 = vld [vmem:[#allocation2 + $0xdd8] sm:$0xff]
    %v550 = vld [vmem:[#allocation2 + $0xde0] sm:$0xff]
    %v551 = vld [vmem:[#allocation2 + $0xde8] sm:$0xff]
    %v552 = vld [vmem:[#allocation2 + $0xdf0] sm:$0xff]
    %v553 = vld [vmem:[#allocation2 + $0xdf8] sm:$0xff]
    %v554 = vld [vmem:[#allocation2 + $0xe00] sm:$0xff]
    %v555 = vld [vmem:[#allocation2 + $0xe08] sm:$0xff]
    %v556 = vld [vmem:[#allocation2 + $0xe10] sm:$0xff]
    %v557 = vld [vmem:[#allocation2 + $0xe18] sm:$0xff]
    %v558 = vld [vmem:[#allocation2 + $0xe20] sm:$0xff]
    %v559 = vld [vmem:[#allocation2 + $0xe28] sm:$0xff]
    %v560 = vld [vmem:[#allocation2 + $0xe30] sm:$0xff]
    %v561 = vld [vmem:[#allocation2 + $0xe38] sm:$0xff]
    %v562 = vld [vmem:[#allocation2 + $0xe40] sm:$0xff]
    %v563 = vld [vmem:[#allocation2 + $0xe48] sm:$0xff]
    %v564 = vld [vmem:[#allocation2 + $0xe50] sm:$0xff]
    %v565 = vld [vmem:[#allocation2 + $0xe58] sm:$0xff]
    %v566 = vld [vmem:[#allocation2 + $0xe60] sm:$0xff]
    %v567 = vld [vmem:[#allocation2 + $0xe68] sm:$0xff]
    %v568 = vld [vmem:[#allocation2 + $0xe70] sm:$0xff]
    %v569 = vld [vmem:[#allocation2 + $0xe78] sm:$0xff]
    %v570 = vld [vmem:[#allocation2 + $0xe80] sm:$0xff]
    %v571 = vld [vmem:[#allocation2 + $0xe88] sm:$0xff]
    %v572 = vld [vmem:[#allocation2 + $0xe90] sm:$0xff]
    %v573 = vld [vmem:[#allocation2 + $0xe98] sm:$0xff]
    %v574 = vld [vmem:[#allocation2 + $0xea0] sm:$0xff]
    %v575 = vld [vmem:[#allocation2 + $0xea8] sm:$0xff]
    %v576 = vld [vmem:[#allocation2 + $0xeb0] sm:$0xff]
    %v577 = vld [vmem:[#allocation2 + $0xeb8] sm:$0xff]
    %v578 = vld [vmem:[#allocation2 + $0xec0] sm:$0xff]
    %v579 = vld [vmem:[#allocation2 + $0xec8] sm:$0xff]
    %v580 = vld [vmem:[#allocation2 + $0xed0] sm:$0xff]
    %v581 = vld [vmem:[#allocation2 + $0xed8] sm:$0xff]
    %v582 = vld [vmem:[#allocation2 + $0xee0] sm:$0xff]
    %v583 = vld [vmem:[#allocation2 + $0xee8] sm:$0xff]
    %v584 = vld [vmem:[#allocation2 + $0xef0] sm:$0xff]
    %v585 = vld [vmem:[#allocation2 + $0xef8] sm:$0xff]
    %v586 = vld [vmem:[#allocation2 + $0xf00] sm:$0xff]
    %v587 = vld [vmem:[#allocation2 + $0xf08] sm:$0xff]
    %v588 = vld [vmem:[#allocation2 + $0xf10] sm:$0xff]
    %v589 = vld [vmem:[#allocation2 + $0xf18] sm:$0xff]
    %v590 = vld [vmem:[#allocation2 + $0xf20] sm:$0xff]
    %v591 = vld [vmem:[#allocation2 + $0xf28] sm:$0xff]
    %v592 = vld [vmem:[#allocation2 + $0xf30] sm:$0xff]
    %v593 = vld [vmem:[#allocation2 + $0xf38] sm:$0xff]
    %v594 = vld [vmem:[#allocation2 + $0xf40] sm:$0xff]
    %v595 = vld [vmem:[#allocation2 + $0xf48] sm:$0xff]
    %v596 = vld [vmem:[#allocation2 + $0xf50] sm:$0xff]
    %v597 = vld [vmem:[#allocation2 + $0xf58] sm:$0xff]
    %v598 = vld [vmem:[#allocation2 + $0xf60] sm:$0xff]
    %v599 = vld [vmem:[#allocation2 + $0xf68] sm:$0xff]
    %v600 = vld [vmem:[#allocation2 + $0xf70] sm:$0xff]
    %v601 = vld [vmem:[#allocation2 + $0xf78] sm:$0xff]
    %v602 = vld [vmem:[#allocation2 + $0xf80] sm:$0xff]
    %v603 = vld [vmem:[#allocation2 + $0xf88] sm:$0xff]
    %v604 = vld [vmem:[#allocation2 + $0xf90] sm:$0xff]
    %v605 = vld [vmem:[#allocation2 + $0xf98] sm:$0xff]
    %v606 = vld [vmem:[#allocation2 + $0xfa0] sm:$0xff]
    %v607 = vld [vmem:[#allocation2 + $0xfa8] sm:$0xff]
    %v608 = vld [vmem:[#allocation2 + $0xfb0] sm:$0xff]
    %v609 = vld [vmem:[#allocation2 + $0xfb8] sm:$0xff]
    %v610 = vld [vmem:[#allocation2 + $0xfc0] sm:$0xff]
    %v611 = vld [vmem:[#allocation2 + $0xfc8] sm:$0xff]
    %v612 = vld [vmem:[#allocation2 + $0xfd0] sm:$0xff]
    %v613 = vld [vmem:[#allocation2 + $0xfd8] sm:$0xff]
    %v614 = vld [vmem:[#allocation2 + $0xfe0] sm:$0xff]
    %v615 = vld [vmem:[#allocation2 + $0xfe8] sm:$0xff]
    %v616 = vld [vmem:[#allocation2 + $0xff0] sm:$0xff]
    %v617 = vld [vmem:[#allocation2 + $0xff8] sm:$0xff]
    %v618 = vld [vmem:[#allocation2 + $0x1000] sm:$0xff]
    %v619 = vld [vmem:[#allocation2 + $0x1008] sm:$0xff]
    %v620 = vld [vmem:[#allocation2 + $0x1010] sm:$0xff]
    %v621 = vld [vmem:[#allocation2 + $0x1018] sm:$0xff]
    %v622 = vld [vmem:[#allocation2 + $0x1020] sm:$0xff]
    %v623 = vld [vmem:[#allocation2 + $0x1028] sm:$0xff]
    %v624 = vld [vmem:[#allocation2 + $0x1030] sm:$0xff]
    %v625 = vld [vmem:[#allocation2 + $0x1038] sm:$0xff]
    %v626 = vld [vmem:[#allocation2 + $0x1040] sm:$0xff]
    %v627 = vld [vmem:[#allocation2 + $0x1048] sm:$0xff]
    %v628 = vld [vmem:[#allocation2 + $0x1050] sm:$0xff]
    %v629 = vld [vmem:[#allocation2 + $0x1058] sm:$0xff]
    %v630 = vld [vmem:[#allocation2 + $0x1060] sm:$0xff]
    %v631 = vld [vmem:[#allocation2 + $0x1068] sm:$0xff]
    %v632 = vld [vmem:[#allocation2 + $0x1070] sm:$0xff]
    %v633 = vld [vmem:[#allocation2 + $0x1078] sm:$0xff]
    %v634 = vld [vmem:[#allocation2 + $0x1080] sm:$0xff]
    %v635 = vld [vmem:[#allocation2 + $0x1088] sm:$0xff]
    %v636 = vld [vmem:[#allocation2 + $0x1090] sm:$0xff]
    %v637 = vld [vmem:[#allocation2 + $0x1098] sm:$0xff]
    %v638 = vld [vmem:[#allocation2 + $0x10a0] sm:$0xff]
    %v639 = vld [vmem:[#allocation2 + $0x10a8] sm:$0xff]
    %v640 = vld [vmem:[#allocation2 + $0x10b0] sm:$0xff]
    %v641 = vld [vmem:[#allocation2 + $0x10b8] sm:$0xff]
    %v642 = vld [vmem:[#allocation2 + $0x10c0] sm:$0xff]
    %v643 = vld [vmem:[#allocation2 + $0x10c8] sm:$0xff]
    %v644 = vld [vmem:[#allocation2 + $0x10d0] sm:$0xff]
    %v645 = vld [vmem:[#allocation2 + $0x10d8] sm:$0xff]
    %v646 = vld [vmem:[#allocation2 + $0x10e0] sm:$0xff]
    %v647 = vld [vmem:[#allocation2 + $0x10e8] sm:$0xff]
    %v648 = vld [vmem:[#allocation2 + $0x10f0] sm:$0xff]
    %v649 = vld [vmem:[#allocation2 + $0x10f8] sm:$0xff]
    %v650 = vld [vmem:[#allocation2 + $0x1100] sm:$0xff]
    %v651 = vld [vmem:[#allocation2 + $0x1108] sm:$0xff]
    %v652 = vld [vmem:[#allocation2 + $0x1110] sm:$0xff]
    %v653 = vld [vmem:[#allocation2 + $0x1118] sm:$0xff]
    %v654 = vld [vmem:[#allocation2 + $0x1120] sm:$0xff]
    %v655 = vld [vmem:[#allocation2 + $0x1128] sm:$0xff]
    %v656 = vld [vmem:[#allocation2 + $0x1130] sm:$0xff]
    %v657 = vld [vmem:[#allocation2 + $0x1138] sm:$0xff]
    %v658 = vld [vmem:[#allocation2 + $0x1140] sm:$0xff]
    %v659 = vld [vmem:[#allocation2 + $0x1148] sm:$0xff]
    %v660 = vld [vmem:[#allocation2 + $0x1150] sm:$0xff]
    %v661 = vld [vmem:[#allocation2 + $0x1158] sm:$0xff]
    %v662 = vld [vmem:[#allocation2 + $0x1160] sm:$0xff]
    %v663 = vld [vmem:[#allocation2 + $0x1168] sm:$0xff]
    %v664 = vld [vmem:[#allocation2 + $0x1170] sm:$0xff]
    %v665 = vld [vmem:[#allocation2 + $0x1178] sm:$0xff]
    %v666 = vld [vmem:[#allocation2 + $0x1180] sm:$0xff]
    %v667 = vld [vmem:[#allocation2 + $0x1188] sm:$0xff]
    %v668 = vld [vmem:[#allocation2 + $0x1190] sm:$0xff]
    %v669 = vld [vmem:[#allocation2 + $0x1198] sm:$0xff]
    %v670 = vld [vmem:[#allocation2 + $0x11a0] sm:$0xff]
    %v671 = vld [vmem:[#allocation2 + $0x11a8] sm:$0xff]
    %v672 = vld [vmem:[#allocation2 + $0x11b0] sm:$0xff]
    %v673 = vld [vmem:[#allocation2 + $0x11b8] sm:$0xff]
    %v674 = vld [vmem:[#allocation2 + $0x11c0] sm:$0xff]
    %v675 = vld [vmem:[#allocation2 + $0x11c8] sm:$0xff]
    %v676 = vld [vmem:[#allocation2 + $0x11d0] sm:$0xff]
    %v677 = vld [vmem:[#allocation2 + $0x11d8] sm:$0xff]
    %v678 = vld [vmem:[#allocation2 + $0x11e0] sm:$0xff]
    %v679 = vld [vmem:[#allocation2 + $0x11e8] sm:$0xff]
    %v680 = vld [vmem:[#allocation2 + $0x11f0] sm:$0xff]
    %v681 = vld [vmem:[#allocation2 + $0x11f8] sm:$0xff]
    %v682 = vld [vmem:[#allocation2 + $0x1200] sm:$0xff]
    %v683 = vld [vmem:[#allocation2 + $0x1208] sm:$0xff]
    %v684 = vld [vmem:[#allocation2 + $0x1210] sm:$0xff]
    %v685 = vld [vmem:[#allocation2 + $0x1218] sm:$0xff]
    %v686 = vld [vmem:[#allocation2 + $0x1220] sm:$0xff]
    %v687 = vld [vmem:[#allocation2 + $0x1228] sm:$0xff]
    %v688 = vld [vmem:[#allocation2 + $0x1230] sm:$0xff]
    %v689 = vld [vmem:[#allocation2 + $0x1238] sm:$0xff]
    %v690 = vld [vmem:[#allocation2 + $0x1240] sm:$0xff]
    %v691 = vld [vmem:[#allocation2 + $0x1248] sm:$0xff]
    %v692 = vld [vmem:[#allocation2 + $0x1250] sm:$0xff]
    %v693 = vld [vmem:[#allocation2 + $0x1258] sm:$0xff]
    %v694 = vld [vmem:[#allocation2 + $0x1260] sm:$0xff]
    %v695 = vld [vmem:[#allocation2 + $0x1268] sm:$0xff]
    %v696 = vld [vmem:[#allocation2 + $0x1270] sm:$0xff]
    %v697 = vld [vmem:[#allocation2 + $0x1278] sm:$0xff]
    %v698 = vld [vmem:[#allocation2 + $0x1280] sm:$0xff]
    %v699 = vld [vmem:[#allocation2 + $0x1288] sm:$0xff]
    %v700 = vld [vmem:[#allocation2 + $0x1290] sm:$0xff]
    %v701 = vld [vmem:[#allocation2 + $0x1298] sm:$0xff]
    %v702 = vld [vmem:[#allocation2 + $0x12a0] sm:$0xff]
    %v703 = vld [vmem:[#allocation2 + $0x12a8] sm:$0xff]
    %v704 = vld [vmem:[#allocation2 + $0x12b0] sm:$0xff]
    %v705 = vld [vmem:[#allocation2 + $0x12b8] sm:$0xff]
    %v706 = vld [vmem:[#allocation2 + $0x12c0] sm:$0xff]
    %v707 = vld [vmem:[#allocation2 + $0x12c8] sm:$0xff]
    %v708 = vld [vmem:[#allocation2 + $0x12d0] sm:$0xff]
    %v709 = vld [vmem:[#allocation2 + $0x12d8] sm:$0xff]
    %v710 = vld [vmem:[#allocation2 + $0x12e0] sm:$0xff]
    %v711 = vld [vmem:[#allocation2 + $0x12e8] sm:$0xff]
    %v712 = vld [vmem:[#allocation2 + $0x12f0] sm:$0xff]
    %v713 = vld [vmem:[#allocation2 + $0x12f8] sm:$0xff]
    %v714 = vld [vmem:[#allocation2 + $0x1300] sm:$0xff]
    %v715 = vld [vmem:[#allocation2 + $0x1308] sm:$0xff]
    %v716 = vld [vmem:[#allocation2 + $0x1310] sm:$0xff]
    %v717 = vld [vmem:[#allocation2 + $0x1318] sm:$0xff]
    %v718 = vld [vmem:[#allocation2 + $0x1320] sm:$0xff]
    %v719 = vld [vmem:[#allocation2 + $0x1328] sm:$0xff]
    %v720 = vld [vmem:[#allocation2 + $0x1330] sm:$0xff]
    %v721 = vld [vmem:[#allocation2 + $0x1338] sm:$0xff]
    %v722 = vld [vmem:[#allocation2 + $0x1340] sm:$0xff]
    %v723 = vld [vmem:[#allocation2 + $0x1348] sm:$0xff]
    %v724 = vld [vmem:[#allocation2 + $0x1350] sm:$0xff]
    %v725 = vld [vmem:[#allocation2 + $0x1358] sm:$0xff]
    %v726 = vld [vmem:[#allocation2 + $0x1360] sm:$0xff]
    %v727 = vld [vmem:[#allocation2 + $0x1368] sm:$0xff]
    %v728 = vld [vmem:[#allocation2 + $0x1370] sm:$0xff]
    %v729 = vld [vmem:[#allocation2 + $0x1378] sm:$0xff]
    %v730 = vld [vmem:[#allocation2 + $0x1380] sm:$0xff]
    %v731 = vld [vmem:[#allocation2 + $0x1388] sm:$0xff]
    %v732 = vld [vmem:[#allocation2 + $0x1390] sm:$0xff]
    %v733 = vld [vmem:[#allocation2 + $0x1398] sm:$0xff]
    %v734 = vld [vmem:[#allocation2 + $0x13a0] sm:$0xff]
    %v735 = vld [vmem:[#allocation2 + $0x13a8] sm:$0xff]
    %v736 = vld [vmem:[#allocation2 + $0x13b0] sm:$0xff]
    %v737 = vld [vmem:[#allocation2 + $0x13b8] sm:$0xff]
    %v738 = vld [vmem:[#allocation2 + $0x13c0] sm:$0xff]
    %v739 = vld [vmem:[#allocation2 + $0x13c8] sm:$0xff]
    %v740 = vld [vmem:[#allocation2 + $0x13d0] sm:$0xff]
    %v741 = vld [vmem:[#allocation2 + $0x13d8] sm:$0xff]
    %v742 = vld [vmem:[#allocation2 + $0x13e0] sm:$0xff]
    %v743 = vld [vmem:[#allocation2 + $0x13e8] sm:$0xff]
    %v744 = vld [vmem:[#allocation2 + $0x13f0] sm:$0xff]
    %v745 = vld [vmem:[#allocation2 + $0x13f8] sm:$0xff]
    %v746 = vld [vmem:[#allocation2 + $0x1400] sm:$0xff]
    %v747 = vld [vmem:[#allocation2 + $0x1408] sm:$0xff]
    %v748 = vld [vmem:[#allocation2 + $0x1410] sm:$0xff]
    %v749 = vld [vmem:[#allocation2 + $0x1418] sm:$0xff]
    %v750 = vld [vmem:[#allocation2 + $0x1420] sm:$0xff]
    %v751 = vld [vmem:[#allocation2 + $0x1428] sm:$0xff]
    %v752 = vld [vmem:[#allocation2 + $0x1430] sm:$0xff]
    %v753 = vld [vmem:[#allocation2 + $0x1438] sm:$0xff]
    %v754 = vld [vmem:[#allocation2 + $0x1440] sm:$0xff]
    %v755 = vld [vmem:[#allocation2 + $0x1448] sm:$0xff]
    %v756 = vld [vmem:[#allocation2 + $0x1450] sm:$0xff]
    %v757 = vld [vmem:[#allocation2 + $0x1458] sm:$0xff]
    %v758 = vld [vmem:[#allocation2 + $0x1460] sm:$0xff]
    %v759 = vld [vmem:[#allocation2 + $0x1468] sm:$0xff]
    %v760 = vld [vmem:[#allocation2 + $0x1470] sm:$0xff]
    %v761 = vld [vmem:[#allocation2 + $0x1478] sm:$0xff]
    %v762 = vld [vmem:[#allocation2 + $0x1480] sm:$0xff]
    %v763 = vld [vmem:[#allocation2 + $0x1488] sm:$0xff]
    %v764 = vld [vmem:[#allocation2 + $0x1490] sm:$0xff]
    %v765 = vld [vmem:[#allocation2 + $0x1498] sm:$0xff]
    %v766 = vld [vmem:[#allocation2 + $0x14a0] sm:$0xff]
    %v767 = vld [vmem:[#allocation2 + $0x14a8] sm:$0xff]
    %v768 = vld [vmem:[#allocation2 + $0x14b0] sm:$0xff]
    %v769 = vld [vmem:[#allocation2 + $0x14b8] sm:$0xff]
    %v770 = vld [vmem:[#allocation2 + $0x14c0] sm:$0xff]
    %v771 = vld [vmem:[#allocation2 + $0x14c8] sm:$0xff]
    %v772 = vld [vmem:[#allocation2 + $0x14d0] sm:$0xff]
    %v773 = vld [vmem:[#allocation2 + $0x14d8] sm:$0xff]
    %v774 = vld [vmem:[#allocation2 + $0x14e0] sm:$0xff]
    %v775 = vld [vmem:[#allocation2 + $0x14e8] sm:$0xff]
    %v776 = vld [vmem:[#allocation2 + $0x14f0] sm:$0xff]
    %v777 = vld [vmem:[#allocation2 + $0x14f8] sm:$0xff]
    %v778 = vld [vmem:[#allocation2 + $0x1500] sm:$0xff]
    %v779 = vld [vmem:[#allocation2 + $0x1508] sm:$0xff]
    %v780 = vld [vmem:[#allocation2 + $0x1510] sm:$0xff]
    %v781 = vld [vmem:[#allocation2 + $0x1518] sm:$0xff]
    %v782 = vld [vmem:[#allocation2 + $0x1520] sm:$0xff]
    %v783 = vld [vmem:[#allocation2 + $0x1528] sm:$0xff]
    %v784 = vld [vmem:[#allocation2 + $0x1530] sm:$0xff]
    %v785 = vld [vmem:[#allocation2 + $0x1538] sm:$0xff]
    %v786 = vld [vmem:[#allocation2 + $0x1540] sm:$0xff]
    %v787 = vld [vmem:[#allocation2 + $0x1548] sm:$0xff]
    %v788 = vld [vmem:[#allocation2 + $0x1550] sm:$0xff]
    %v789 = vld [vmem:[#allocation2 + $0x1558] sm:$0xff]
    %v790 = vld [vmem:[#allocation2 + $0x1560] sm:$0xff]
    %v791 = vld [vmem:[#allocation2 + $0x1568] sm:$0xff]
    %v792 = vld [vmem:[#allocation2 + $0x1570] sm:$0xff]
    %v793 = vld [vmem:[#allocation2 + $0x1578] sm:$0xff]
    %v794 = vld [vmem:[#allocation2 + $0x1580] sm:$0xff]
    %v795 = vld [vmem:[#allocation2 + $0x1588] sm:$0xff]
    %v796 = vld [vmem:[#allocation2 + $0x1590] sm:$0xff]
    %v797 = vld [vmem:[#allocation2 + $0x1598] sm:$0xff]
    %v798 = vld [vmem:[#allocation2 + $0x15a0] sm:$0xff]
    %v799 = vld [vmem:[#allocation2 + $0x15a8] sm:$0xff]
    %v800 = vld [vmem:[#allocation2 + $0x15b0] sm:$0xff]
    %v801 = vld [vmem:[#allocation2 + $0x15b8] sm:$0xff]
    %v802 = vld [vmem:[#allocation2 + $0x15c0] sm:$0xff]
    %v803 = vld [vmem:[#allocation2 + $0x15c8] sm:$0xff]
    %v804 = vld [vmem:[#allocation2 + $0x15d0] sm:$0xff]
    %v805 = vld [vmem:[#allocation2 + $0x15d8] sm:$0xff]
    %v806 = vld [vmem:[#allocation2 + $0x15e0] sm:$0xff]
    %v807 = vld [vmem:[#allocation2 + $0x15e8] sm:$0xff]
    %v808 = vld [vmem:[#allocation2 + $0x15f0] sm:$0xff]
    %v809 = vld [vmem:[#allocation2 + $0x15f8] sm:$0xff]
    %v810 = vld [vmem:[#allocation2 + $0x1600] sm:$0xff]
    %v811 = vld [vmem:[#allocation2 + $0x1608] sm:$0xff]
    %v812 = vld [vmem:[#allocation2 + $0x1610] sm:$0xff]
    %v813 = vld [vmem:[#allocation2 + $0x1618] sm:$0xff]
    %v814 = vld [vmem:[#allocation2 + $0x1620] sm:$0xff]
    %v815 = vld [vmem:[#allocation2 + $0x1628] sm:$0xff]
    %v816 = vld [vmem:[#allocation2 + $0x1630] sm:$0xff]
    %v817 = vld [vmem:[#allocation2 + $0x1638] sm:$0xff]
    %v818 = vld [vmem:[#allocation2 + $0x1640] sm:$0xff]
    %v819 = vld [vmem:[#allocation2 + $0x1648] sm:$0xff]
    %v820 = vld [vmem:[#allocation2 + $0x1650] sm:$0xff]
    %v821 = vld [vmem:[#allocation2 + $0x1658] sm:$0xff]
    %v822 = vld [vmem:[#allocation2 + $0x1660] sm:$0xff]
    %v823 = vld [vmem:[#allocation2 + $0x1668] sm:$0xff]
    %v824 = vld [vmem:[#allocation2 + $0x1670] sm:$0xff]
    %v825 = vld [vmem:[#allocation2 + $0x1678] sm:$0xff]
    %v826 = vld [vmem:[#allocation2 + $0x1680] sm:$0xff]
    %v827 = vld [vmem:[#allocation2 + $0x1688] sm:$0xff]
    %v828 = vld [vmem:[#allocation2 + $0x1690] sm:$0xff]
    %v829 = vld [vmem:[#allocation2 + $0x1698] sm:$0xff]
    %v830 = vld [vmem:[#allocation2 + $0x16a0] sm:$0xff]
    %v831 = vld [vmem:[#allocation2 + $0x16a8] sm:$0xff]
    %v832 = vld [vmem:[#allocation2 + $0x16b0] sm:$0xff]
    %v833 = vld [vmem:[#allocation2 + $0x16b8] sm:$0xff]
    %v834 = vld [vmem:[#allocation2 + $0x16c0] sm:$0xff]
    %v835 = vld [vmem:[#allocation2 + $0x16c8] sm:$0xff]
    %v836 = vld [vmem:[#allocation2 + $0x16d0] sm:$0xff]
    %v837 = vld [vmem:[#allocation2 + $0x16d8] sm:$0xff]
    %v838 = vld [vmem:[#allocation2 + $0x16e0] sm:$0xff]
    %v839 = vld [vmem:[#allocation2 + $0x16e8] sm:$0xff]
    %v840 = vld [vmem:[#allocation2 + $0x16f0] sm:$0xff]
    %v841 = vld [vmem:[#allocation2 + $0x16f8] sm:$0xff]
    %v842 = vld [vmem:[#allocation2 + $0x1700] sm:$0xff]
    %v843 = vld [vmem:[#allocation2 + $0x1708] sm:$0xff]
    %v844 = vld [vmem:[#allocation2 + $0x1710] sm:$0xff]
    %v845 = vld [vmem:[#allocation2 + $0x1718] sm:$0xff]
    %v846 = vld [vmem:[#allocation2 + $0x1720] sm:$0xff]
    %v847 = vld [vmem:[#allocation2 + $0x1728] sm:$0xff]
    %v848 = vld [vmem:[#allocation2 + $0x1730] sm:$0xff]
    %v849 = vld [vmem:[#allocation2 + $0x1738] sm:$0xff]
    %v850 = vld [vmem:[#allocation2 + $0x1740] sm:$0xff]
    %v851 = vld [vmem:[#allocation2 + $0x1748] sm:$0xff]
    %v852 = vld [vmem:[#allocation2 + $0x1750] sm:$0xff]
    %v853 = vld [vmem:[#allocation2 + $0x1758] sm:$0xff]
    %v854 = vld [vmem:[#allocation2 + $0x1760] sm:$0xff]
    %v855 = vld [vmem:[#allocation2 + $0x1768] sm:$0xff]
    %v856 = vld [vmem:[#allocation2 + $0x1770] sm:$0xff]
    %v857 = vld [vmem:[#allocation2 + $0x1778] sm:$0xff]
    %v858 = vld [vmem:[#allocation2 + $0x1780] sm:$0xff]
    %v859 = vld [vmem:[#allocation2 + $0x1788] sm:$0xff]
    %v860 = vld [vmem:[#allocation2 + $0x1790] sm:$0xff]
    %v861 = vld [vmem:[#allocation2 + $0x1798] sm:$0xff]
    %v862 = vld [vmem:[#allocation2 + $0x17a0] sm:$0xff]
    %v863 = vld [vmem:[#allocation2 + $0x17a8] sm:$0xff]
    %v864 = vld [vmem:[#allocation2 + $0x17b0] sm:$0xff]
    %v865 = vld [vmem:[#allocation2 + $0x17b8] sm:$0xff]
    %v866 = vld [vmem:[#allocation2 + $0x17c0] sm:$0xff]
    %v867 = vld [vmem:[#allocation2 + $0x17c8] sm:$0xff]
    %v868 = vld [vmem:[#allocation2 + $0x17d0] sm:$0xff]
    %v869 = vld [vmem:[#allocation2 + $0x17d8] sm:$0xff]
    %v870 = vld [vmem:[#allocation2 + $0x17e0] sm:$0xff]
    %v871 = vld [vmem:[#allocation2 + $0x17e8] sm:$0xff]
    %v872 = vld [vmem:[#allocation2 + $0x17f0] sm:$0xff]
    %v873 = vld [vmem:[#allocation2 + $0x17f8] sm:$0xff]
    %v874 = vld [vmem:[#allocation2 + $0x1800] sm:$0xff]
    %v875 = vld [vmem:[#allocation2 + $0x1808] sm:$0xff]
    %v876 = vld [vmem:[#allocation2 + $0x1810] sm:$0xff]
    %v877 = vld [vmem:[#allocation2 + $0x1818] sm:$0xff]
    %v878 = vld [vmem:[#allocation2 + $0x1820] sm:$0xff]
    %v879 = vld [vmem:[#allocation2 + $0x1828] sm:$0xff]
    %v880 = vld [vmem:[#allocation2 + $0x1830] sm:$0xff]
    %v881 = vld [vmem:[#allocation2 + $0x1838] sm:$0xff]
    %v882 = vld [vmem:[#allocation2 + $0x1840] sm:$0xff]
    %v883 = vld [vmem:[#allocation2 + $0x1848] sm:$0xff]
    %v884 = vld [vmem:[#allocation2 + $0x1850] sm:$0xff]
    %v885 = vld [vmem:[#allocation2 + $0x1858] sm:$0xff]
    %v886 = vld [vmem:[#allocation2 + $0x1860] sm:$0xff]
    %v887 = vld [vmem:[#allocation2 + $0x1868] sm:$0xff]
    %v888 = vld [vmem:[#allocation2 + $0x1870] sm:$0xff]
    %v889 = vld [vmem:[#allocation2 + $0x1878] sm:$0xff]
    %v890 = vld [vmem:[#allocation2 + $0x1880] sm:$0xff]
    %v891 = vld [vmem:[#allocation2 + $0x1888] sm:$0xff]
    %v892 = vld [vmem:[#allocation2 + $0x1890] sm:$0xff]
    %v893 = vld [vmem:[#allocation2 + $0x1898] sm:$0xff]
    %v894 = vld [vmem:[#allocation2 + $0x18a0] sm:$0xff]
    %v895 = vld [vmem:[#allocation2 + $0x18a8] sm:$0xff]
    %v896 = vld [vmem:[#allocation2 + $0x18b0] sm:$0xff]
    %v897 = vld [vmem:[#allocation2 + $0x18b8] sm:$0xff]
    %v898 = vld [vmem:[#allocation2 + $0x18c0] sm:$0xff]
    %v899 = vld [vmem:[#allocation2 + $0x18c8] sm:$0xff]
    %v900 = vld [vmem:[#allocation2 + $0x18d0] sm:$0xff]
    %v901 = vld [vmem:[#allocation2 + $0x18d8] sm:$0xff]
    %v902 = vld [vmem:[#allocation2 + $0x18e0] sm:$0xff]
    %v903 = vld [vmem:[#allocation2 + $0x18e8] sm:$0xff]
    %v904 = vld [vmem:[#allocation2 + $0x18f0] sm:$0xff]
    %v905 = vld [vmem:[#allocation2 + $0x18f8] sm:$0xff]
    %v906 = vld [vmem:[#allocation2 + $0x1900] sm:$0xff]
    %v907 = vld [vmem:[#allocation2 + $0x1908] sm:$0xff]
    %v908 = vld [vmem:[#allocation2 + $0x1910] sm:$0xff]
    %v909 = vld [vmem:[#allocation2 + $0x1918] sm:$0xff]
    %v910 = vld [vmem:[#allocation2 + $0x1920] sm:$0xff]
    %v911 = vld [vmem:[#allocation2 + $0x1928] sm:$0xff]
    %v912 = vld [vmem:[#allocation2 + $0x1930] sm:$0xff]
    %v913 = vld [vmem:[#allocation2 + $0x1938] sm:$0xff]
    %v914 = vld [vmem:[#allocation2 + $0x1940] sm:$0xff]
    %v915 = vld [vmem:[#allocation2 + $0x1948] sm:$0xff]
    %v916 = vld [vmem:[#allocation2 + $0x1950] sm:$0xff]
    %v917 = vld [vmem:[#allocation2 + $0x1958] sm:$0xff]
    %v918 = vld [vmem:[#allocation2 + $0x1960] sm:$0xff]
    %v919 = vld [vmem:[#allocation2 + $0x1968] sm:$0xff]
    %v920 = vld [vmem:[#allocation2 + $0x1970] sm:$0xff]
    %v921 = vld [vmem:[#allocation2 + $0x1978] sm:$0xff]
    %v922 = vld [vmem:[#allocation2 + $0x1980] sm:$0xff]
    %v923 = vld [vmem:[#allocation2 + $0x1988] sm:$0xff]
    %v924 = vld [vmem:[#allocation2 + $0x1990] sm:$0xff]
    %v925 = vld [vmem:[#allocation2 + $0x1998] sm:$0xff]
    %v926 = vld [vmem:[#allocation2 + $0x19a0] sm:$0xff]
    %v927 = vld [vmem:[#allocation2 + $0x19a8] sm:$0xff]
    %v928 = vld [vmem:[#allocation2 + $0x19b0] sm:$0xff]
    %v929 = vld [vmem:[#allocation2 + $0x19b8] sm:$0xff]
    %v930 = vld [vmem:[#allocation2 + $0x19c0] sm:$0xff]
    %v931 = vld [vmem:[#allocation2 + $0x19c8] sm:$0xff]
    %v932 = vld [vmem:[#allocation2 + $0x19d0] sm:$0xff]
    %v933 = vld [vmem:[#allocation2 + $0x19d8] sm:$0xff]
    %v934 = vld [vmem:[#allocation2 + $0x19e0] sm:$0xff]
    %v935 = vld [vmem:[#allocation2 + $0x19e8] sm:$0xff]
    %v936 = vld [vmem:[#allocation2 + $0x19f0] sm:$0xff]
    %v937 = vld [vmem:[#allocation2 + $0x19f8] sm:$0xff]
    %v938 = vld [vmem:[#allocation2 + $0x1a00] sm:$0xff]
    %v939 = vld [vmem:[#allocation2 + $0x1a08] sm:$0xff]
    %v940 = vld [vmem:[#allocation2 + $0x1a10] sm:$0xff]
    %v941 = vld [vmem:[#allocation2 + $0x1a18] sm:$0xff]
    %v942 = vld [vmem:[#allocation2 + $0x1a20] sm:$0xff]
    %v943 = vld [vmem:[#allocation2 + $0x1a28] sm:$0xff]
    %v944 = vld [vmem:[#allocation2 + $0x1a30] sm:$0xff]
    %v945 = vld [vmem:[#allocation2 + $0x1a38] sm:$0xff]
    %v946 = vld [vmem:[#allocation2 + $0x1a40] sm:$0xff]
    %v947 = vld [vmem:[#allocation2 + $0x1a48] sm:$0xff]
    %v948 = vld [vmem:[#allocation2 + $0x1a50] sm:$0xff]
    %v949 = vld [vmem:[#allocation2 + $0x1a58] sm:$0xff]
    %v950 = vld [vmem:[#allocation2 + $0x1a60] sm:$0xff]
    %v951 = vld [vmem:[#allocation2 + $0x1a68] sm:$0xff]
    %v952 = vld [vmem:[#allocation2 + $0x1a70] sm:$0xff]
    %v953 = vld [vmem:[#allocation2 + $0x1a78] sm:$0xff]
    %v954 = vld [vmem:[#allocation2 + $0x1a80] sm:$0xff]
    %v955 = vld [vmem:[#allocation2 + $0x1a88] sm:$0xff]
    %v956 = vld [vmem:[#allocation2 + $0x1a90] sm:$0xff]
    %v957 = vld [vmem:[#allocation2 + $0x1a98] sm:$0xff]
    %v958 = vld [vmem:[#allocation2 + $0x1aa0] sm:$0xff]
    %v959 = vld [vmem:[#allocation2 + $0x1aa8] sm:$0xff]
    %v960 = vld [vmem:[#allocation2 + $0x1ab0] sm:$0xff]
    %v961 = vld [vmem:[#allocation2 + $0x1ab8] sm:$0xff]
    %v962 = vld [vmem:[#allocation2 + $0x1ac0] sm:$0xff]
    %v963 = vld [vmem:[#allocation2 + $0x1ac8] sm:$0xff]
    %v964 = vld [vmem:[#allocation2 + $0x1ad0] sm:$0xff]
    %v965 = vld [vmem:[#allocation2 + $0x1ad8] sm:$0xff]
    %v966 = vld [vmem:[#allocation2 + $0x1ae0] sm:$0xff]
    %v967 = vld [vmem:[#allocation2 + $0x1ae8] sm:$0xff]
    %v968 = vld [vmem:[#allocation2 + $0x1af0] sm:$0xff]
    %v969 = vld [vmem:[#allocation2 + $0x1af8] sm:$0xff]
    %v970 = vld [vmem:[#allocation2 + $0x1b00] sm:$0xff]
    %v971 = vld [vmem:[#allocation2 + $0x1b08] sm:$0xff]
    %v972 = vld [vmem:[#allocation2 + $0x1b10] sm:$0xff]
    %v973 = vld [vmem:[#allocation2 + $0x1b18] sm:$0xff]
    %v974 = vld [vmem:[#allocation2 + $0x1b20] sm:$0xff]
    %v975 = vld [vmem:[#allocation2 + $0x1b28] sm:$0xff]
    %v976 = vld [vmem:[#allocation2 + $0x1b30] sm:$0xff]
    %v977 = vld [vmem:[#allocation2 + $0x1b38] sm:$0xff]
    %v978 = vld [vmem:[#allocation2 + $0x1b40] sm:$0xff]
    %v979 = vld [vmem:[#allocation2 + $0x1b48] sm:$0xff]
    %v980 = vld [vmem:[#allocation2 + $0x1b50] sm:$0xff]
    %v981 = vld [vmem:[#allocation2 + $0x1b58] sm:$0xff]
    %v982 = vld [vmem:[#allocation2 + $0x1b60] sm:$0xff]
    %v983 = vld [vmem:[#allocation2 + $0x1b68] sm:$0xff]
    %v984 = vld [vmem:[#allocation2 + $0x1b70] sm:$0xff]
    %v985 = vld [vmem:[#allocation2 + $0x1b78] sm:$0xff]
    %v986 = vld [vmem:[#allocation2 + $0x1b80] sm:$0xff]
    %v987 = vld [vmem:[#allocation2 + $0x1b88] sm:$0xff]
    %v988 = vld [vmem:[#allocation2 + $0x1b90] sm:$0xff]
    %v989 = vld [vmem:[#allocation2 + $0x1b98] sm:$0xff]
    %v990 = vld [vmem:[#allocation2 + $0x1ba0] sm:$0xff]
    %v991 = vld [vmem:[#allocation2 + $0x1ba8] sm:$0xff]
    %v992 = vld [vmem:[#allocation2 + $0x1bb0] sm:$0xff]
    %v993 = vld [vmem:[#allocation2 + $0x1bb8] sm:$0xff]
    %v994 = vld [vmem:[#allocation2 + $0x1bc0] sm:$0xff]
    %v995 = vld [vmem:[#allocation2 + $0x1bc8] sm:$0xff]
    %v996 = vld [vmem:[#allocation2 + $0x1bd0] sm:$0xff]
    %v997 = vld [vmem:[#allocation2 + $0x1bd8] sm:$0xff]
    %v998 = vld [vmem:[#allocation2 + $0x1be0] sm:$0xff]
    %v999 = vld [vmem:[#allocation2 + $0x1be8] sm:$0xff]
    %v1000 = vld [vmem:[#allocation2 + $0x1bf0] sm:$0xff]
    %v1001 = vld [vmem:[#allocation2 + $0x1bf8] sm:$0xff]
    %v1002 = vld [vmem:[#allocation2 + $0x1c00] sm:$0xff]
    %v1003 = vld [vmem:[#allocation2 + $0x1c08] sm:$0xff]
    %v1004 = vld [vmem:[#allocation2 + $0x1c10] sm:$0xff]
    %v1005 = vld [vmem:[#allocation2 + $0x1c18] sm:$0xff]
    %v1006 = vld [vmem:[#allocation2 + $0x1c20] sm:$0xff]
    %v1007 = vld [vmem:[#allocation2 + $0x1c28] sm:$0xff]
    %v1008 = vld [vmem:[#allocation2 + $0x1c30] sm:$0xff]
    %v1009 = vld [vmem:[#allocation2 + $0x1c38] sm:$0xff]
    %v1010 = vld [vmem:[#allocation2 + $0x1c40] sm:$0xff]
    %v1011 = vld [vmem:[#allocation2 + $0x1c48] sm:$0xff]
    %v1012 = vld [vmem:[#allocation2 + $0x1c50] sm:$0xff]
    %v1013 = vld [vmem:[#allocation2 + $0x1c58] sm:$0xff]
    %v1014 = vld [vmem:[#allocation2 + $0x1c60] sm:$0xff]
    %v1015 = vld [vmem:[#allocation2 + $0x1c68] sm:$0xff]
    %v1016 = vld [vmem:[#allocation2 + $0x1c70] sm:$0xff]
    %v1017 = vld [vmem:[#allocation2 + $0x1c78] sm:$0xff]
    %v1018 = vld [vmem:[#allocation2 + $0x1c80] sm:$0xff]
    %v1019 = vld [vmem:[#allocation2 + $0x1c88] sm:$0xff]
    %v1020 = vld [vmem:[#allocation2 + $0x1c90] sm:$0xff]
    %v1021 = vld [vmem:[#allocation2 + $0x1c98] sm:$0xff]
    %v1022 = vld [vmem:[#allocation2 + $0x1ca0] sm:$0xff]
    %v1023 = vld [vmem:[#allocation2 + $0x1ca8] sm:$0xff]
    %v1024 = vld [vmem:[#allocation2 + $0x1cb0] sm:$0xff]
    %v1025 = vld [vmem:[#allocation2 + $0x1cb8] sm:$0xff]
    %v1026 = vld [vmem:[#allocation2 + $0x1cc0] sm:$0xff]
    %v1027 = vld [vmem:[#allocation2 + $0x1cc8] sm:$0xff]
    %v1028 = vld [vmem:[#allocation2 + $0x1cd0] sm:$0xff]
    %v1029 = vld [vmem:[#allocation2 + $0x1cd8] sm:$0xff]
    %v1030 = vld [vmem:[#allocation2 + $0x1ce0] sm:$0xff]
    %v1031 = vld [vmem:[#allocation2 + $0x1ce8] sm:$0xff]
    %v1032 = vld [vmem:[#allocation2 + $0x1cf0] sm:$0xff]
    %v1033 = vld [vmem:[#allocation2 + $0x1cf8] sm:$0xff]
    %v1034 = vld [vmem:[#allocation2 + $0x1d00] sm:$0xff]
    %v1035 = vld [vmem:[#allocation2 + $0x1d08] sm:$0xff]
    %v1036 = vld [vmem:[#allocation2 + $0x1d10] sm:$0xff]
    %v1037 = vld [vmem:[#allocation2 + $0x1d18] sm:$0xff]
    %v1038 = vld [vmem:[#allocation2 + $0x1d20] sm:$0xff]
    %v1039 = vld [vmem:[#allocation2 + $0x1d28] sm:$0xff]
    %v1040 = vld [vmem:[#allocation2 + $0x1d30] sm:$0xff]
    %v1041 = vld [vmem:[#allocation2 + $0x1d38] sm:$0xff]
    %v1042 = vld [vmem:[#allocation2 + $0x1d40] sm:$0xff]
    %v1043 = vld [vmem:[#allocation2 + $0x1d48] sm:$0xff]
    %v1044 = vld [vmem:[#allocation2 + $0x1d50] sm:$0xff]
    %v1045 = vld [vmem:[#allocation2 + $0x1d58] sm:$0xff]
    %v1046 = vld [vmem:[#allocation2 + $0x1d60] sm:$0xff]
    %v1047 = vld [vmem:[#allocation2 + $0x1d68] sm:$0xff]
    %v1048 = vld [vmem:[#allocation2 + $0x1d70] sm:$0xff]
    %v1049 = vld [vmem:[#allocation2 + $0x1d78] sm:$0xff]
    %v1050 = vld [vmem:[#allocation2 + $0x1d80] sm:$0xff]
    %v1051 = vld [vmem:[#allocation2 + $0x1d88] sm:$0xff]
    %v1052 = vld [vmem:[#allocation2 + $0x1d90] sm:$0xff]
    %v1053 = vld [vmem:[#allocation2 + $0x1d98] sm:$0xff]
    %v1054 = vld [vmem:[#allocation2 + $0x1da0] sm:$0xff]
    %v1055 = vld [vmem:[#allocation2 + $0x1da8] sm:$0xff]
    %v1056 = vld [vmem:[#allocation2 + $0x1db0] sm:$0xff]
    %v1057 = vld [vmem:[#allocation2 + $0x1db8] sm:$0xff]
    %v1058 = vld [vmem:[#allocation2 + $0x1dc0] sm:$0xff]
    %v1059 = vld [vmem:[#allocation2 + $0x1dc8] sm:$0xff]
    %v1060 = vld [vmem:[#allocation2 + $0x1dd0] sm:$0xff]
    %v1061 = vld [vmem:[#allocation2 + $0x1dd8] sm:$0xff]
    %v1062 = vld [vmem:[#allocation2 + $0x1de0] sm:$0xff]
    %v1063 = vld [vmem:[#allocation2 + $0x1de8] sm:$0xff]
    %v1064 = vld [vmem:[#allocation2 + $0x1df0] sm:$0xff]
    %v1065 = vld [vmem:[#allocation2 + $0x1df8] sm:$0xff]
    %v1066 = vld [vmem:[#allocation2 + $0x1e00] sm:$0xff]
    %v1067 = vld [vmem:[#allocation2 + $0x1e08] sm:$0xff]
    %v1068 = vld [vmem:[#allocation2 + $0x1e10] sm:$0xff]
    %v1069 = vld [vmem:[#allocation2 + $0x1e18] sm:$0xff]
    %v1070 = vld [vmem:[#allocation2 + $0x1e20] sm:$0xff]
    %v1071 = vld [vmem:[#allocation2 + $0x1e28] sm:$0xff]
    %v1072 = vld [vmem:[#allocation2 + $0x1e30] sm:$0xff]
    %v1073 = vld [vmem:[#allocation2 + $0x1e38] sm:$0xff]
    %v1074 = vld [vmem:[#allocation2 + $0x1e40] sm:$0xff]
    %v1075 = vld [vmem:[#allocation2 + $0x1e48] sm:$0xff]
    %v1076 = vld [vmem:[#allocation2 + $0x1e50] sm:$0xff]
    %v1077 = vld [vmem:[#allocation2 + $0x1e58] sm:$0xff]
    %v1078 = vld [vmem:[#allocation2 + $0x1e60] sm:$0xff]
    %v1079 = vld [vmem:[#allocation2 + $0x1e68] sm:$0xff]
    %v1080 = vld [vmem:[#allocation2 + $0x1e70] sm:$0xff]
    %v1081 = vld [vmem:[#allocation2 + $0x1e78] sm:$0xff]
    %v1082 = vld [vmem:[#allocation2 + $0x1e80] sm:$0xff]
    %v1083 = vld [vmem:[#allocation2 + $0x1e88] sm:$0xff]
    %v1084 = vld [vmem:[#allocation2 + $0x1e90] sm:$0xff]
    %v1085 = vld [vmem:[#allocation2 + $0x1e98] sm:$0xff]
    %v1086 = vld [vmem:[#allocation2 + $0x1ea0] sm:$0xff]
    %v1087 = vld [vmem:[#allocation2 + $0x1ea8] sm:$0xff]
    %v1088 = vld [vmem:[#allocation2 + $0x1eb0] sm:$0xff]
    %v1089 = vld [vmem:[#allocation2 + $0x1eb8] sm:$0xff]
    %v1090 = vld [vmem:[#allocation2 + $0x1ec0] sm:$0xff]
    %v1091 = vld [vmem:[#allocation2 + $0x1ec8] sm:$0xff]
    %v1092 = vld [vmem:[#allocation2 + $0x1ed0] sm:$0xff]
    %v1093 = vld [vmem:[#allocation2 + $0x1ed8] sm:$0xff]
    %v1094 = vld [vmem:[#allocation2 + $0x1ee0] sm:$0xff]
    %v1095 = vld [vmem:[#allocation2 + $0x1ee8] sm:$0xff]
    %v1096 = vld [vmem:[#allocation2 + $0x1ef0] sm:$0xff]
    %v1097 = vld [vmem:[#allocation2 + $0x1ef8] sm:$0xff]
    %v1098 = vld [vmem:[#allocation2 + $0x1f00] sm:$0xff]
    %v1099 = vld [vmem:[#allocation2 + $0x1f08] sm:$0xff]
    %v1100 = vld [vmem:[#allocation2 + $0x1f10] sm:$0xff]
    %v1101 = vld [vmem:[#allocation2 + $0x1f18] sm:$0xff]
    %v1102 = vld [vmem:[#allocation2 + $0x1f20] sm:$0xff]
    %v1103 = vld [vmem:[#allocation2 + $0x1f28] sm:$0xff]
    %v1104 = vld [vmem:[#allocation2 + $0x1f30] sm:$0xff]
    %v1105 = vld [vmem:[#allocation2 + $0x1f38] sm:$0xff]
    %v1106 = vld [vmem:[#allocation2 + $0x1f40] sm:$0xff]
    %v1107 = vld [vmem:[#allocation2 + $0x1f48] sm:$0xff]
    %v1108 = vld [vmem:[#allocation2 + $0x1f50] sm:$0xff]
    %v1109 = vld [vmem:[#allocation2 + $0x1f58] sm:$0xff]
    %v1110 = vld [vmem:[#allocation2 + $0x1f60] sm:$0xff]
    %v1111 = vld [vmem:[#allocation2 + $0x1f68] sm:$0xff]
    %v1112 = vld [vmem:[#allocation2 + $0x1f70] sm:$0xff]
    %v1113 = vld [vmem:[#allocation2 + $0x1f78] sm:$0xff]
    %v1114 = vld [vmem:[#allocation2 + $0x1f80] sm:$0xff]
    %v1115 = vld [vmem:[#allocation2 + $0x1f88] sm:$0xff]
    %v1116 = vld [vmem:[#allocation2 + $0x1f90] sm:$0xff]
    %v1117 = vld [vmem:[#allocation2 + $0x1f98] sm:$0xff]
    %v1118 = vld [vmem:[#allocation2 + $0x1fa0] sm:$0xff]
    %v1119 = vld [vmem:[#allocation2 + $0x1fa8] sm:$0xff]
    %v1120 = vld [vmem:[#allocation2 + $0x1fb0] sm:$0xff]
    %v1121 = vld [vmem:[#allocation2 + $0x1fb8] sm:$0xff]
    %v1122 = vld [vmem:[#allocation2 + $0x1fc0] sm:$0xff]
    %v1123 = vld [vmem:[#allocation2 + $0x1fc8] sm:$0xff]
    %v1124 = vld [vmem:[#allocation2 + $0x1fd0] sm:$0xff]
    %v1125 = vld [vmem:[#allocation2 + $0x1fd8] sm:$0xff]
    %v1126 = vld [vmem:[#allocation2 + $0x1fe0] sm:$0xff]
    %v1127 = vld [vmem:[#allocation2 + $0x1fe8] sm:$0xff]
    %v1128 = vld [vmem:[#allocation2 + $0x1ff0] sm:$0xff]
    %v1129 = vld [vmem:[#allocation2 + $0x1ff8] sm:$0xff]
    %v1130 = vld [vmem:[#allocation2 + $0x2000] sm:$0xff]
    %v1131 = vld [vmem:[#allocation2 + $0x2008] sm:$0xff]
    %v1132 = vld [vmem:[#allocation2 + $0x2010] sm:$0xff]
    %v1133 = vld [vmem:[#allocation2 + $0x2018] sm:$0xff]
    %v1134 = vld [vmem:[#allocation2 + $0x2020] sm:$0xff]
    %v1135 = vld [vmem:[#allocation2 + $0x2028] sm:$0xff]
    %v1136 = vld [vmem:[#allocation2 + $0x2030] sm:$0xff]
    %v1137 = vld [vmem:[#allocation2 + $0x2038] sm:$0xff]
    %v1138 = vld [vmem:[#allocation2 + $0x2040] sm:$0xff]
    %v1139 = vld [vmem:[#allocation2 + $0x2048] sm:$0xff]
    %v1140 = vld [vmem:[#allocation2 + $0x2050] sm:$0xff]
    %v1141 = vld [vmem:[#allocation2 + $0x2058] sm:$0xff]
    %v1142 = vld [vmem:[#allocation2 + $0x2060] sm:$0xff]
    %v1143 = vld [vmem:[#allocation2 + $0x2068] sm:$0xff]
    %v1144 = vld [vmem:[#allocation2 + $0x2070] sm:$0xff]
    %v1145 = vld [vmem:[#allocation2 + $0x2078] sm:$0xff]
    %v1146 = vld [vmem:[#allocation2 + $0x2080] sm:$0xff]
    %v1147 = vld [vmem:[#allocation2 + $0x2088] sm:$0xff]
    %v1148 = vld [vmem:[#allocation2 + $0x2090] sm:$0xff]
    %v1149 = vld [vmem:[#allocation2 + $0x2098] sm:$0xff]
    %v1150 = vld [vmem:[#allocation2 + $0x20a0] sm:$0xff]
    %v1151 = vld [vmem:[#allocation2 + $0x20a8] sm:$0xff]
    %v1152 = vld [vmem:[#allocation2 + $0x20b0] sm:$0xff]
    %v1153 = vld [vmem:[#allocation2 + $0x20b8] sm:$0xff]
    %v1154 = vld [vmem:[#allocation2 + $0x20c0] sm:$0xff]
    %v1155 = vld [vmem:[#allocation2 + $0x20c8] sm:$0xff]
    %v1156 = vld [vmem:[#allocation2 + $0x20d0] sm:$0xff]
    %v1157 = vld [vmem:[#allocation2 + $0x20d8] sm:$0xff]
    %v1158 = vld [vmem:[#allocation2 + $0x20e0] sm:$0xff]
    %v1159 = vld [vmem:[#allocation2 + $0x20e8] sm:$0xff]
    %v1160 = vld [vmem:[#allocation2 + $0x20f0] sm:$0xff]
    %v1161 = vld [vmem:[#allocation2 + $0x20f8] sm:$0xff]
    %v1162 = vld [vmem:[#allocation2 + $0x2100] sm:$0xff]
    %v1163 = vld [vmem:[#allocation2 + $0x2108] sm:$0xff]
    %v1164 = vld [vmem:[#allocation2 + $0x2110] sm:$0xff]
    %v1165 = vld [vmem:[#allocation2 + $0x2118] sm:$0xff]
    %v1166 = vld [vmem:[#allocation2 + $0x2120] sm:$0xff]
    %v1167 = vld [vmem:[#allocation2 + $0x2128] sm:$0xff]
    %v1168 = vld [vmem:[#allocation2 + $0x2130] sm:$0xff]
    %v1169 = vld [vmem:[#allocation2 + $0x2138] sm:$0xff]
    %v1170 = vld [vmem:[#allocation2 + $0x2140] sm:$0xff]
    %v1171 = vld [vmem:[#allocation2 + $0x2148] sm:$0xff]
    %v1172 = vld [vmem:[#allocation2 + $0x2150] sm:$0xff]
    %v1173 = vld [vmem:[#allocation2 + $0x2158] sm:$0xff]
    %v1174 = vld [vmem:[#allocation2 + $0x2160] sm:$0xff]
    %v1175 = vld [vmem:[#allocation2 + $0x2168] sm:$0xff]
    %v1176 = vld [vmem:[#allocation2 + $0x2170] sm:$0xff]
    %v1177 = vld [vmem:[#allocation2 + $0x2178] sm:$0xff]
    %v1178 = vld [vmem:[#allocation2 + $0x2180] sm:$0xff]
    %v1179 = vld [vmem:[#allocation2 + $0x2188] sm:$0xff]
    %v1180 = vld [vmem:[#allocation2 + $0x2190] sm:$0xff]
    %v1181 = vld [vmem:[#allocation2 + $0x2198] sm:$0xff]
    %v1182 = vld [vmem:[#allocation2 + $0x21a0] sm:$0xff]
    %v1183 = vld [vmem:[#allocation2 + $0x21a8] sm:$0xff]
    %v1184 = vld [vmem:[#allocation2 + $0x21b0] sm:$0xff]
    %v1185 = vld [vmem:[#allocation2 + $0x21b8] sm:$0xff]
    %v1186 = vld [vmem:[#allocation2 + $0x21c0] sm:$0xff]
    %v1187 = vld [vmem:[#allocation2 + $0x21c8] sm:$0xff]
    %v1188 = vld [vmem:[#allocation2 + $0x21d0] sm:$0xff]
    %v1189 = vld [vmem:[#allocation2 + $0x21d8] sm:$0xff]
    %v1190 = vld [vmem:[#allocation2 + $0x21e0] sm:$0xff]
    %v1191 = vld [vmem:[#allocation2 + $0x21e8] sm:$0xff]
    %v1192 = vld [vmem:[#allocation2 + $0x21f0] sm:$0xff]
    %v1193 = vld [vmem:[#allocation2 + $0x21f8] sm:$0xff]
    %v1194 = vld [vmem:[#allocation2 + $0x2200] sm:$0xff]
    %v1195 = vld [vmem:[#allocation2 + $0x2208] sm:$0xff]
    %v1196 = vld [vmem:[#allocation2 + $0x2210] sm:$0xff]
    %v1197 = vld [vmem:[#allocation2 + $0x2218] sm:$0xff]
    %v1198 = vld [vmem:[#allocation2 + $0x2220] sm:$0xff]
    %v1199 = vld [vmem:[#allocation2 + $0x2228] sm:$0xff]
    %v1200 = vld [vmem:[#allocation2 + $0x2230] sm:$0xff]
    %v1201 = vld [vmem:[#allocation2 + $0x2238] sm:$0xff]
    %v1202 = vld [vmem:[#allocation2 + $0x2240] sm:$0xff]
    %v1203 = vld [vmem:[#allocation2 + $0x2248] sm:$0xff]
    %v1204 = vld [vmem:[#allocation2 + $0x2250] sm:$0xff]
    %v1205 = vld [vmem:[#allocation2 + $0x2258] sm:$0xff]
    %v1206 = vld [vmem:[#allocation2 + $0x2260] sm:$0xff]
    %v1207 = vld [vmem:[#allocation2 + $0x2268] sm:$0xff]
    %v1208 = vld [vmem:[#allocation2 + $0x2270] sm:$0xff]
    %v1209 = vld [vmem:[#allocation2 + $0x2278] sm:$0xff]
    %v1210 = vld [vmem:[#allocation2 + $0x2280] sm:$0xff]
    %v1211 = vld [vmem:[#allocation2 + $0x2288] sm:$0xff]
    %v1212 = vld [vmem:[#allocation2 + $0x2290] sm:$0xff]
    %v1213 = vld [vmem:[#allocation2 + $0x2298] sm:$0xff]
    %v1214 = vld [vmem:[#allocation2 + $0x22a0] sm:$0xff]
    %v1215 = vld [vmem:[#allocation2 + $0x22a8] sm:$0xff]
    %v1216 = vld [vmem:[#allocation2 + $0x22b0] sm:$0xff]
    %v1217 = vld [vmem:[#allocation2 + $0x22b8] sm:$0xff]
    %v1218 = vld [vmem:[#allocation2 + $0x22c0] sm:$0xff]
    %v1219 = vld [vmem:[#allocation2 + $0x22c8] sm:$0xff]
    %v1220 = vld [vmem:[#allocation2 + $0x22d0] sm:$0xff]
    %v1221 = vld [vmem:[#allocation2 + $0x22d8] sm:$0xff]
    %v1222 = vld [vmem:[#allocation2 + $0x22e0] sm:$0xff]
    %v1223 = vld [vmem:[#allocation2 + $0x22e8] sm:$0xff]
    %v1224 = vld [vmem:[#allocation2 + $0x22f0] sm:$0xff]
    %v1225 = vld [vmem:[#allocation2 + $0x22f8] sm:$0xff]
    %v1226 = vld [vmem:[#allocation2 + $0x2300] sm:$0xff]
    %v1227 = vld [vmem:[#allocation2 + $0x2308] sm:$0xff]
    %v1228 = vld [vmem:[#allocation2 + $0x2310] sm:$0xff]
    %v1229 = vld [vmem:[#allocation2 + $0x2318] sm:$0xff]
    %v1230 = vld [vmem:[#allocation2 + $0x2320] sm:$0xff]
    %v1231 = vld [vmem:[#allocation2 + $0x2328] sm:$0xff]
    %v1232 = vld [vmem:[#allocation2 + $0x2330] sm:$0xff]
    %v1233 = vld [vmem:[#allocation2 + $0x2338] sm:$0xff]
    %v1234 = vld [vmem:[#allocation2 + $0x2340] sm:$0xff]
    %v1235 = vld [vmem:[#allocation2 + $0x2348] sm:$0xff]
    %v1236 = vld [vmem:[#allocation2 + $0x2350] sm:$0xff]
    %v1237 = vld [vmem:[#allocation2 + $0x2358] sm:$0xff]
    %v1238 = vld [vmem:[#allocation2 + $0x2360] sm:$0xff]
    %v1239 = vld [vmem:[#allocation2 + $0x2368] sm:$0xff]
    %v1240 = vld [vmem:[#allocation2 + $0x2370] sm:$0xff]
    %v1241 = vld [vmem:[#allocation2 + $0x2378] sm:$0xff]
    %v1242 = vld [vmem:[#allocation2 + $0x2380] sm:$0xff]
    %v1243 = vld [vmem:[#allocation2 + $0x2388] sm:$0xff]
    %v1244 = vld [vmem:[#allocation2 + $0x2390] sm:$0xff]
    %v1245 = vld [vmem:[#allocation2 + $0x2398] sm:$0xff]
    %v1246 = vld [vmem:[#allocation2 + $0x23a0] sm:$0xff]
    %v1247 = vld [vmem:[#allocation2 + $0x23a8] sm:$0xff]
    %v1248 = vld [vmem:[#allocation2 + $0x23b0] sm:$0xff]
    %v1249 = vld [vmem:[#allocation2 + $0x23b8] sm:$0xff]
    %v1250 = vld [vmem:[#allocation2 + $0x23c0] sm:$0xff]
    %v1251 = vld [vmem:[#allocation2 + $0x23c8] sm:$0xff]
    %v1252 = vld [vmem:[#allocation2 + $0x23d0] sm:$0xff]
    %v1253 = vld [vmem:[#allocation2 + $0x23d8] sm:$0xff]
    %v1254 = vld [vmem:[#allocation2 + $0x23e0] sm:$0xff]
    %v1255 = vld [vmem:[#allocation2 + $0x23e8] sm:$0xff]
    %v1256 = vld [vmem:[#allocation2 + $0x23f0] sm:$0xff]
    %v1257 = vld [vmem:[#allocation2 + $0x23f8] sm:$0xff]
    %v1258 = vld [vmem:[#allocation2 + $0x2400] sm:$0xff]
    %v1259 = vld [vmem:[#allocation2 + $0x2408] sm:$0xff]
    %v1260 = vld [vmem:[#allocation2 + $0x2410] sm:$0xff]
    %v1261 = vld [vmem:[#allocation2 + $0x2418] sm:$0xff]
    %v1262 = vld [vmem:[#allocation2 + $0x2420] sm:$0xff]
    %v1263 = vld [vmem:[#allocation2 + $0x2428] sm:$0xff]
    %v1264 = vld [vmem:[#allocation2 + $0x2430] sm:$0xff]
    %v1265 = vld [vmem:[#allocation2 + $0x2438] sm:$0xff]
    %v1266 = vld [vmem:[#allocation2 + $0x2440] sm:$0xff]
    %v1267 = vld [vmem:[#allocation2 + $0x2448] sm:$0xff]
    %v1268 = vld [vmem:[#allocation2 + $0x2450] sm:$0xff]
    %v1269 = vld [vmem:[#allocation2 + $0x2458] sm:$0xff]
    %v1270 = vld [vmem:[#allocation2 + $0x2460] sm:$0xff]
    %v1271 = vld [vmem:[#allocation2 + $0x2468] sm:$0xff]
    %v1272 = vld [vmem:[#allocation2 + $0x2470] sm:$0xff]
    %v1273 = vld [vmem:[#allocation2 + $0x2478] sm:$0xff]
    %v1274 = vld [vmem:[#allocation2 + $0x2480] sm:$0xff]
    %v1275 = vld [vmem:[#allocation2 + $0x2488] sm:$0xff]
    %v1276 = vld [vmem:[#allocation2 + $0x2490] sm:$0xff]
    %v1277 = vld [vmem:[#allocation2 + $0x2498] sm:$0xff]
    %v1278 = vld [vmem:[#allocation2 + $0x24a0] sm:$0xff]
    %v1279 = vld [vmem:[#allocation2 + $0x24a8] sm:$0xff]
    %v1280 = vld [vmem:[#allocation2 + $0x24b0] sm:$0xff]
    %v1281 = vld [vmem:[#allocation2 + $0x24b8] sm:$0xff]
    %v1282 = vld [vmem:[#allocation2 + $0x24c0] sm:$0xff]
    %v1283 = vld [vmem:[#allocation2 + $0x24c8] sm:$0xff]
    %v1284 = vld [vmem:[#allocation2 + $0x24d0] sm:$0xff]
    %v1285 = vld [vmem:[#allocation2 + $0x24d8] sm:$0xff]
    %v1286 = vld [vmem:[#allocation2 + $0x24e0] sm:$0xff]
    %v1287 = vld [vmem:[#allocation2 + $0x24e8] sm:$0xff]
    %v1288 = vld [vmem:[#allocation2 + $0x24f0] sm:$0xff]
    %v1289 = vld [vmem:[#allocation2 + $0x24f8] sm:$0xff]
    %v1290 = vld [vmem:[#allocation2 + $0x2500] sm:$0xff]
    %v1291 = vld [vmem:[#allocation2 + $0x2508] sm:$0xff]
    %v1292 = vld [vmem:[#allocation2 + $0x2510] sm:$0xff]
    %v1293 = vld [vmem:[#allocation2 + $0x2518] sm:$0xff]
    %v1294 = vld [vmem:[#allocation2 + $0x2520] sm:$0xff]
    %v1295 = vld [vmem:[#allocation2 + $0x2528] sm:$0xff]
    %v1296 = vld [vmem:[#allocation2 + $0x2530] sm:$0xff]
    %v1297 = vld [vmem:[#allocation2 + $0x2538] sm:$0xff]
    %v1298 = vld [vmem:[#allocation2 + $0x2540] sm:$0xff]
    %v1299 = vld [vmem:[#allocation2 + $0x2548] sm:$0xff]
    %v1300 = vld [vmem:[#allocation2 + $0x2550] sm:$0xff]
    %v1301 = vld [vmem:[#allocation2 + $0x2558] sm:$0xff]
    %v1302 = vld [vmem:[#allocation2 + $0x2560] sm:$0xff]
    %v1303 = vld [vmem:[#allocation2 + $0x2568] sm:$0xff]
    %v1304 = vld [vmem:[#allocation2 + $0x2570] sm:$0xff]
    %v1305 = vld [vmem:[#allocation2 + $0x2578] sm:$0xff]
    %v1306 = vld [vmem:[#allocation2 + $0x2580] sm:$0xff]
    %v1307 = vld [vmem:[#allocation2 + $0x2588] sm:$0xff]
    %v1308 = vld [vmem:[#allocation2 + $0x2590] sm:$0xff]
    %v1309 = vld [vmem:[#allocation2 + $0x2598] sm:$0xff]
    %v1310 = vld [vmem:[#allocation2 + $0x25a0] sm:$0xff]
    %v1311 = vld [vmem:[#allocation2 + $0x25a8] sm:$0xff]
    %v1312 = vld [vmem:[#allocation2 + $0x25b0] sm:$0xff]
    %v1313 = vld [vmem:[#allocation2 + $0x25b8] sm:$0xff]
    %v1314 = vld [vmem:[#allocation2 + $0x25c0] sm:$0xff]
    %v1315 = vld [vmem:[#allocation2 + $0x25c8] sm:$0xff]
    %v1316 = vld [vmem:[#allocation2 + $0x25d0] sm:$0xff]
    %v1317 = vld [vmem:[#allocation2 + $0x25d8] sm:$0xff]
    %v1318 = vld [vmem:[#allocation2 + $0x25e0] sm:$0xff]
    %v1319 = vld [vmem:[#allocation2 + $0x25e8] sm:$0xff]
    %v1320 = vld [vmem:[#allocation2 + $0x25f0] sm:$0xff]
    %v1321 = vld [vmem:[#allocation2 + $0x25f8] sm:$0xff]
    %v1322 = vld [vmem:[#allocation2 + $0x2600] sm:$0xff]
    %v1323 = vld [vmem:[#allocation2 + $0x2608] sm:$0xff]
    %v1324 = vld [vmem:[#allocation2 + $0x2610] sm:$0xff]
    %v1325 = vld [vmem:[#allocation2 + $0x2618] sm:$0xff]
    %v1326 = vld [vmem:[#allocation2 + $0x2620] sm:$0xff]
    %v1327 = vld [vmem:[#allocation2 + $0x2628] sm:$0xff]
    %v1328 = vld [vmem:[#allocation2 + $0x2630] sm:$0xff]
    %v1329 = vld [vmem:[#allocation2 + $0x2638] sm:$0xff]
    %v1330 = vld [vmem:[#allocation2 + $0x2640] sm:$0xff]
    %v1331 = vld [vmem:[#allocation2 + $0x2648] sm:$0xff]
    %v1332 = vld [vmem:[#allocation2 + $0x2650] sm:$0xff]
    %v1333 = vld [vmem:[#allocation2 + $0x2658] sm:$0xff]
    %v1334 = vld [vmem:[#allocation2 + $0x2660] sm:$0xff]
    %v1335 = vld [vmem:[#allocation2 + $0x2668] sm:$0xff]
    %v1336 = vld [vmem:[#allocation2 + $0x2670] sm:$0xff]
    %v1337 = vld [vmem:[#allocation2 + $0x2678] sm:$0xff]
    %v1338 = vld [vmem:[#allocation2 + $0x2680] sm:$0xff]
    %v1339 = vld [vmem:[#allocation2 + $0x2688] sm:$0xff]
    %v1340 = vld [vmem:[#allocation2 + $0x2690] sm:$0xff]
    %v1341 = vld [vmem:[#allocation2 + $0x2698] sm:$0xff]
    %v1342 = vld [vmem:[#allocation2 + $0x26a0] sm:$0xff]
    %v1343 = vld [vmem:[#allocation2 + $0x26a8] sm:$0xff]
    %v1344 = vld [vmem:[#allocation2 + $0x26b0] sm:$0xff]
    %v1345 = vld [vmem:[#allocation2 + $0x26b8] sm:$0xff]
    %v1346 = vld [vmem:[#allocation2 + $0x26c0] sm:$0xff]
    %v1347 = vld [vmem:[#allocation2 + $0x26c8] sm:$0xff]
    %v1348 = vld [vmem:[#allocation2 + $0x26d0] sm:$0xff]
    %v1349 = vld [vmem:[#allocation2 + $0x26d8] sm:$0xff]
    %v1350 = vld [vmem:[#allocation2 + $0x26e0] sm:$0xff]
    %v1351 = vld [vmem:[#allocation2 + $0x26e8] sm:$0xff]
    %v1352 = vld [vmem:[#allocation2 + $0x26f0] sm:$0xff]
    %v1353 = vld [vmem:[#allocation2 + $0x26f8] sm:$0xff]
    %v1354 = vld [vmem:[#allocation2 + $0x2700] sm:$0xff]
    %v1355 = vld [vmem:[#allocation2 + $0x2708] sm:$0xff]
    %v1356 = vld [vmem:[#allocation2 + $0x2710] sm:$0xff]
    %v1357 = vld [vmem:[#allocation2 + $0x2718] sm:$0xff]
    %v1358 = vld [vmem:[#allocation2 + $0x2720] sm:$0xff]
    %v1359 = vld [vmem:[#allocation2 + $0x2728] sm:$0xff]
    %v1360 = vld [vmem:[#allocation2 + $0x2730] sm:$0xff]
    %v1361 = vld [vmem:[#allocation2 + $0x2738] sm:$0xff]
    %v1362 = vld [vmem:[#allocation2 + $0x2740] sm:$0xff]
    %v1363 = vld [vmem:[#allocation2 + $0x2748] sm:$0xff]
    %v1364 = vld [vmem:[#allocation2 + $0x2750] sm:$0xff]
    %v1365 = vld [vmem:[#allocation2 + $0x2758] sm:$0xff]
    %v1366 = vld [vmem:[#allocation2 + $0x2760] sm:$0xff]
    %v1367 = vld [vmem:[#allocation2 + $0x2768] sm:$0xff]
    %v1368 = vld [vmem:[#allocation2 + $0x2770] sm:$0xff]
    %v1369 = vld [vmem:[#allocation2 + $0x2778] sm:$0xff]
    %v1370 = vld [vmem:[#allocation2 + $0x2780] sm:$0xff]
    %v1371 = vld [vmem:[#allocation2 + $0x2788] sm:$0xff]
    %v1372 = vld [vmem:[#allocation2 + $0x2790] sm:$0xff]
    %v1373 = vld [vmem:[#allocation2 + $0x2798] sm:$0xff]
    %v1374 = vld [vmem:[#allocation2 + $0x27a0] sm:$0xff]
    %v1375 = vld [vmem:[#allocation2 + $0x27a8] sm:$0xff]
    %v1376 = vld [vmem:[#allocation2 + $0x27b0] sm:$0xff]
    %v1377 = vld [vmem:[#allocation2 + $0x27b8] sm:$0xff]
    %v1378 = vld [vmem:[#allocation2 + $0x27c0] sm:$0xff]
    %v1379 = vld [vmem:[#allocation2 + $0x27c8] sm:$0xff]
    %v1380 = vld [vmem:[#allocation2 + $0x27d0] sm:$0xff]
    %v1381 = vld [vmem:[#allocation2 + $0x27d8] sm:$0xff]
    %v1382 = vld [vmem:[#allocation2 + $0x27e0] sm:$0xff]
    %v1383 = vld [vmem:[#allocation2 + $0x27e8] sm:$0xff]
    %v1384 = vld [vmem:[#allocation2 + $0x27f0] sm:$0xff]
    %v1385 = vld [vmem:[#allocation2 + $0x27f8] sm:$0xff]
    %v1386 = vld [vmem:[#allocation2 + $0x2800] sm:$0xff]
    %v1387 = vld [vmem:[#allocation2 + $0x2808] sm:$0xff]
    %v1388 = vld [vmem:[#allocation2 + $0x2810] sm:$0xff]
    %v1389 = vld [vmem:[#allocation2 + $0x2818] sm:$0xff]
    %v1390 = vld [vmem:[#allocation2 + $0x2820] sm:$0xff]
    %v1391 = vld [vmem:[#allocation2 + $0x2828] sm:$0xff]
    %v1392 = vld [vmem:[#allocation2 + $0x2830] sm:$0xff]
    %v1393 = vld [vmem:[#allocation2 + $0x2838] sm:$0xff]
    %v1394 = vld [vmem:[#allocation2 + $0x2840] sm:$0xff]
    %v1395 = vld [vmem:[#allocation2 + $0x2848] sm:$0xff]
    %v1396 = vld [vmem:[#allocation2 + $0x2850] sm:$0xff]
    %v1397 = vld [vmem:[#allocation2 + $0x2858] sm:$0xff]
    %v1398 = vld [vmem:[#allocation2 + $0x2860] sm:$0xff]
    %v1399 = vld [vmem:[#allocation2 + $0x2868] sm:$0xff]
    %v1400 = vld [vmem:[#allocation2 + $0x2870] sm:$0xff]
    %v1401 = vld [vmem:[#allocation2 + $0x2878] sm:$0xff]
    %v1402 = vld [vmem:[#allocation2 + $0x2880] sm:$0xff]
    %v1403 = vld [vmem:[#allocation2 + $0x2888] sm:$0xff]
    %v1404 = vld [vmem:[#allocation2 + $0x2890] sm:$0xff]
    %v1405 = vld [vmem:[#allocation2 + $0x2898] sm:$0xff]
    %v1406 = vld [vmem:[#allocation2 + $0x28a0] sm:$0xff]
    %v1407 = vld [vmem:[#allocation2 + $0x28a8] sm:$0xff]
    %v1408 = vld [vmem:[#allocation2 + $0x28b0] sm:$0xff]
    %v1409 = vld [vmem:[#allocation2 + $0x28b8] sm:$0xff]
    %v1410 = vld [vmem:[#allocation2 + $0x28c0] sm:$0xff]
    %v1411 = vld [vmem:[#allocation2 + $0x28c8] sm:$0xff]
    %v1412 = vld [vmem:[#allocation2 + $0x28d0] sm:$0xff]
    %v1413 = vld [vmem:[#allocation2 + $0x28d8] sm:$0xff]
    %v1414 = vld [vmem:[#allocation2 + $0x28e0] sm:$0xff]
    %v1415 = vld [vmem:[#allocation2 + $0x28e8] sm:$0xff]
    %v1416 = vld [vmem:[#allocation2 + $0x28f0] sm:$0xff]
    %v1417 = vld [vmem:[#allocation2 + $0x28f8] sm:$0xff]
    %v1418 = vld [vmem:[#allocation2 + $0x2900] sm:$0xff]
    %v1419 = vld [vmem:[#allocation2 + $0x2908] sm:$0xff]
    %v1420 = vld [vmem:[#allocation2 + $0x2910] sm:$0xff]
    %v1421 = vld [vmem:[#allocation2 + $0x2918] sm:$0xff]
    %v1422 = vld [vmem:[#allocation2 + $0x2920] sm:$0xff]
    %v1423 = vld [vmem:[#allocation2 + $0x2928] sm:$0xff]
    %v1424 = vld [vmem:[#allocation2 + $0x2930] sm:$0xff]
    %v1425 = vld [vmem:[#allocation2 + $0x2938] sm:$0xff]
    %v1426 = vld [vmem:[#allocation2 + $0x2940] sm:$0xff]
    %v1427 = vld [vmem:[#allocation2 + $0x2948] sm:$0xff]
    %v1428 = vld [vmem:[#allocation2 + $0x2950] sm:$0xff]
    %v1429 = vld [vmem:[#allocation2 + $0x2958] sm:$0xff]
    %v1430 = vld [vmem:[#allocation2 + $0x2960] sm:$0xff]
    %v1431 = vld [vmem:[#allocation2 + $0x2968] sm:$0xff]
    %v1432 = vld [vmem:[#allocation2 + $0x2970] sm:$0xff]
    %v1433 = vld [vmem:[#allocation2 + $0x2978] sm:$0xff]
    %v1434 = vld [vmem:[#allocation2 + $0x2980] sm:$0xff]
    %v1435 = vld [vmem:[#allocation2 + $0x2988] sm:$0xff]
    %v1436 = vld [vmem:[#allocation2 + $0x2990] sm:$0xff]
    %v1437 = vld [vmem:[#allocation2 + $0x2998] sm:$0xff]
    %v1438 = vld [vmem:[#allocation2 + $0x29a0] sm:$0xff]
    %v1439 = vld [vmem:[#allocation2 + $0x29a8] sm:$0xff]
    %v1440 = vld [vmem:[#allocation2 + $0x29b0] sm:$0xff]
    %v1441 = vld [vmem:[#allocation2 + $0x29b8] sm:$0xff]
    %v1442 = vld [vmem:[#allocation2 + $0x29c0] sm:$0xff]
    %v1443 = vld [vmem:[#allocation2 + $0x29c8] sm:$0xff]
    %v1444 = vld [vmem:[#allocation2 + $0x29d0] sm:$0xff]
    %v1445 = vld [vmem:[#allocation2 + $0x29d8] sm:$0xff]
    %v1446 = vld [vmem:[#allocation2 + $0x29e0] sm:$0xff]
    %v1447 = vld [vmem:[#allocation2 + $0x29e8] sm:$0xff]
    %v1448 = vld [vmem:[#allocation2 + $0x29f0] sm:$0xff]
    %v1449 = vld [vmem:[#allocation2 + $0x29f8] sm:$0xff]
    %v1450 = vld [vmem:[#allocation2 + $0x2a00] sm:$0xff]
    %v1451 = vld [vmem:[#allocation2 + $0x2a08] sm:$0xff]
    %v1452 = vld [vmem:[#allocation2 + $0x2a10] sm:$0xff]
    %v1453 = vld [vmem:[#allocation2 + $0x2a18] sm:$0xff]
    %v1454 = vld [vmem:[#allocation2 + $0x2a20] sm:$0xff]
    %v1455 = vld [vmem:[#allocation2 + $0x2a28] sm:$0xff]
    %v1456 = vld [vmem:[#allocation2 + $0x2a30] sm:$0xff]
    %v1457 = vld [vmem:[#allocation2 + $0x2a38] sm:$0xff]
    %v1458 = vld [vmem:[#allocation2 + $0x2a40] sm:$0xff]
    %v1459 = vld [vmem:[#allocation2 + $0x2a48] sm:$0xff]
    %v1460 = vld [vmem:[#allocation2 + $0x2a50] sm:$0xff]
    %v1461 = vld [vmem:[#allocation2 + $0x2a58] sm:$0xff]
    %v1462 = vld [vmem:[#allocation2 + $0x2a60] sm:$0xff]
    %v1463 = vld [vmem:[#allocation2 + $0x2a68] sm:$0xff]
    %v1464 = vld [vmem:[#allocation2 + $0x2a70] sm:$0xff]
    %v1465 = vld [vmem:[#allocation2 + $0x2a78] sm:$0xff]
    %v1466 = vld [vmem:[#allocation2 + $0x2a80] sm:$0xff]
    %v1467 = vld [vmem:[#allocation2 + $0x2a88] sm:$0xff]
    %v1468 = vld [vmem:[#allocation2 + $0x2a90] sm:$0xff]
    %v1469 = vld [vmem:[#allocation2 + $0x2a98] sm:$0xff]
    %v1470 = vld [vmem:[#allocation2 + $0x2aa0] sm:$0xff]
    %v1471 = vld [vmem:[#allocation2 + $0x2aa8] sm:$0xff]
    %v1472 = vld [vmem:[#allocation2 + $0x2ab0] sm:$0xff]
    %v1473 = vld [vmem:[#allocation2 + $0x2ab8] sm:$0xff]
    %v1474 = vld [vmem:[#allocation2 + $0x2ac0] sm:$0xff]
    %v1475 = vld [vmem:[#allocation2 + $0x2ac8] sm:$0xff]
    %v1476 = vld [vmem:[#allocation2 + $0x2ad0] sm:$0xff]
    %v1477 = vld [vmem:[#allocation2 + $0x2ad8] sm:$0xff]
    %v1478 = vld [vmem:[#allocation2 + $0x2ae0] sm:$0xff]
    %v1479 = vld [vmem:[#allocation2 + $0x2ae8] sm:$0xff]
    %v1480 = vld [vmem:[#allocation2 + $0x2af0] sm:$0xff]
    %v1481 = vld [vmem:[#allocation2 + $0x2af8] sm:$0xff]
    %v1482 = vld [vmem:[#allocation2 + $0x2b00] sm:$0xff]
    %v1483 = vld [vmem:[#allocation2 + $0x2b08] sm:$0xff]
    %v1484 = vld [vmem:[#allocation2 + $0x2b10] sm:$0xff]
    %v1485 = vld [vmem:[#allocation2 + $0x2b18] sm:$0xff]
    %v1486 = vld [vmem:[#allocation2 + $0x2b20] sm:$0xff]
    %v1487 = vld [vmem:[#allocation2 + $0x2b28] sm:$0xff]
    %v1488 = vld [vmem:[#allocation2 + $0x2b30] sm:$0xff]
    %v1489 = vld [vmem:[#allocation2 + $0x2b38] sm:$0xff]
    %v1490 = vld [vmem:[#allocation2 + $0x2b40] sm:$0xff]
    %v1491 = vld [vmem:[#allocation2 + $0x2b48] sm:$0xff]
    %v1492 = vld [vmem:[#allocation2 + $0x2b50] sm:$0xff]
    %v1493 = vld [vmem:[#allocation2 + $0x2b58] sm:$0xff]
    %v1494 = vld [vmem:[#allocation2 + $0x2b60] sm:$0xff]
    %v1495 = vld [vmem:[#allocation2 + $0x2b68] sm:$0xff]
    %v1496 = vld [vmem:[#allocation2 + $0x2b70] sm:$0xff]
    %v1497 = vld [vmem:[#allocation2 + $0x2b78] sm:$0xff]
    %v1498 = vld [vmem:[#allocation2 + $0x2b80] sm:$0xff]
    %v1499 = vld [vmem:[#allocation2 + $0x2b88] sm:$0xff]
    %v1500 = vld [vmem:[#allocation2 + $0x2b90] sm:$0xff]
    %v1501 = vld [vmem:[#allocation2 + $0x2b98] sm:$0xff]
    %v1502 = vld [vmem:[#allocation2 + $0x2ba0] sm:$0xff]
    %v1503 = vld [vmem:[#allocation2 + $0x2ba8] sm:$0xff]
    %v1504 = vld [vmem:[#allocation2 + $0x2bb0] sm:$0xff]
    %v1505 = vld [vmem:[#allocation2 + $0x2bb8] sm:$0xff]
    %v1506 = vld [vmem:[#allocation2 + $0x2bc0] sm:$0xff]
    %v1507 = vld [vmem:[#allocation2 + $0x2bc8] sm:$0xff]
    %v1508 = vld [vmem:[#allocation2 + $0x2bd0] sm:$0xff]
    %v1509 = vld [vmem:[#allocation2 + $0x2bd8] sm:$0xff]
    %v1510 = vld [vmem:[#allocation2 + $0x2be0] sm:$0xff]
    %v1511 = vld [vmem:[#allocation2 + $0x2be8] sm:$0xff]
    %v1512 = vld [vmem:[#allocation2 + $0x2bf0] sm:$0xff]
    %v1513 = vld [vmem:[#allocation2 + $0x2bf8] sm:$0xff]
    %v1514 = vld [vmem:[#allocation2 + $0x2c00] sm:$0xff]
    %v1515 = vld [vmem:[#allocation2 + $0x2c08] sm:$0xff]
    %v1516 = vld [vmem:[#allocation2 + $0x2c10] sm:$0xff]
    %v1517 = vld [vmem:[#allocation2 + $0x2c18] sm:$0xff]
    %v1518 = vld [vmem:[#allocation2 + $0x2c20] sm:$0xff]
    %v1519 = vld [vmem:[#allocation2 + $0x2c28] sm:$0xff]
    %v1520 = vld [vmem:[#allocation2 + $0x2c30] sm:$0xff]
    %v1521 = vld [vmem:[#allocation2 + $0x2c38] sm:$0xff]
    %v1522 = vld [vmem:[#allocation2 + $0x2c40] sm:$0xff]
    %v1523 = vld [vmem:[#allocation2 + $0x2c48] sm:$0xff]
    %v1524 = vld [vmem:[#allocation2 + $0x2c50] sm:$0xff]
    %v1525 = vld [vmem:[#allocation2 + $0x2c58] sm:$0xff]
    %v1526 = vld [vmem:[#allocation2 + $0x2c60] sm:$0xff]
    %v1527 = vld [vmem:[#allocation2 + $0x2c68] sm:$0xff]
    %v1528 = vld [vmem:[#allocation2 + $0x2c70] sm:$0xff]
    %v1529 = vld [vmem:[#allocation2 + $0x2c78] sm:$0xff]
    %v1530 = vld [vmem:[#allocation2 + $0x2c80] sm:$0xff]
    %v1531 = vld [vmem:[#allocation2 + $0x2c88] sm:$0xff]
    %v1532 = vld [vmem:[#allocation2 + $0x2c90] sm:$0xff]
    %v1533 = vld [vmem:[#allocation2 + $0x2c98] sm:$0xff]
    %v1534 = vld [vmem:[#allocation2 + $0x2ca0] sm:$0xff]
    %v1535 = vld [vmem:[#allocation2 + $0x2ca8] sm:$0xff]
    %v1536 = vld [vmem:[#allocation2 + $0x2cb0] sm:$0xff]
    %v1537 = vld [vmem:[#allocation2 + $0x2cb8] sm:$0xff]
    %v1538 = vld [vmem:[#allocation2 + $0x2cc0] sm:$0xff]
    %v1539 = vld [vmem:[#allocation2 + $0x2cc8] sm:$0xff]
    %v1540 = vld [vmem:[#allocation2 + $0x2cd0] sm:$0xff]
    %v1541 = vld [vmem:[#allocation2 + $0x2cd8] sm:$0xff]
    %v1542 = vld [vmem:[#allocation2 + $0x2ce0] sm:$0xff]
    %v1543 = vld [vmem:[#allocation2 + $0x2ce8] sm:$0xff]
    %v1544 = vld [vmem:[#allocation2 + $0x2cf0] sm:$0xff]
    %v1545 = vld [vmem:[#allocation2 + $0x2cf8] sm:$0xff]
    %v1546 = vld [vmem:[#allocation2 + $0x2d00] sm:$0xff]
    %v1547 = vld [vmem:[#allocation2 + $0x2d08] sm:$0xff]
    %v1548 = vld [vmem:[#allocation2 + $0x2d10] sm:$0xff]
    %v1549 = vld [vmem:[#allocation2 + $0x2d18] sm:$0xff]
    %v1550 = vld [vmem:[#allocation2 + $0x2d20] sm:$0xff]
    %v1551 = vld [vmem:[#allocation2 + $0x2d28] sm:$0xff]
    %v1552 = vld [vmem:[#allocation2 + $0x2d30] sm:$0xff]
    %v1553 = vld [vmem:[#allocation2 + $0x2d38] sm:$0xff]
    %v1554 = vld [vmem:[#allocation2 + $0x2d40] sm:$0xff]
    %v1555 = vld [vmem:[#allocation2 + $0x2d48] sm:$0xff]
    %v1556 = vld [vmem:[#allocation2 + $0x2d50] sm:$0xff]
    %v1557 = vld [vmem:[#allocation2 + $0x2d58] sm:$0xff]
    %v1558 = vld [vmem:[#allocation2 + $0x2d60] sm:$0xff]
    %v1559 = vld [vmem:[#allocation2 + $0x2d68] sm:$0xff]
    %v1560 = vld [vmem:[#allocation2 + $0x2d70] sm:$0xff]
    %v1561 = vld [vmem:[#allocation2 + $0x2d78] sm:$0xff]
    %v1562 = vld [vmem:[#allocation2 + $0x2d80] sm:$0xff]
    %v1563 = vld [vmem:[#allocation2 + $0x2d88] sm:$0xff]
    %v1564 = vld [vmem:[#allocation2 + $0x2d90] sm:$0xff]
    %v1565 = vld [vmem:[#allocation2 + $0x2d98] sm:$0xff]
    %v1566 = vld [vmem:[#allocation2 + $0x2da0] sm:$0xff]
    %v1567 = vld [vmem:[#allocation2 + $0x2da8] sm:$0xff]
    %v1568 = vld [vmem:[#allocation2 + $0x2db0] sm:$0xff]
    %v1569 = vld [vmem:[#allocation2 + $0x2db8] sm:$0xff]
    %v1570 = vld [vmem:[#allocation2 + $0x2dc0] sm:$0xff]
    %v1571 = vld [vmem:[#allocation2 + $0x2dc8] sm:$0xff]
    %v1572 = vld [vmem:[#allocation2 + $0x2dd0] sm:$0xff]
    %v1573 = vld [vmem:[#allocation2 + $0x2dd8] sm:$0xff]
    %v1574 = vld [vmem:[#allocation2 + $0x2de0] sm:$0xff]
    %v1575 = vld [vmem:[#allocation2 + $0x2de8] sm:$0xff]
    %v1576 = vld [vmem:[#allocation2 + $0x2df0] sm:$0xff]
    %v1577 = vld [vmem:[#allocation2 + $0x2df8] sm:$0xff]
    %v1578 = vld [vmem:[#allocation2 + $0x2e00] sm:$0xff]
    %v1579 = vld [vmem:[#allocation2 + $0x2e08] sm:$0xff]
    %v1580 = vld [vmem:[#allocation2 + $0x2e10] sm:$0xff]
    %v1581 = vld [vmem:[#allocation2 + $0x2e18] sm:$0xff]
    %v1582 = vld [vmem:[#allocation2 + $0x2e20] sm:$0xff]
    %v1583 = vld [vmem:[#allocation2 + $0x2e28] sm:$0xff]
    %v1584 = vld [vmem:[#allocation2 + $0x2e30] sm:$0xff]
    %v1585 = vld [vmem:[#allocation2 + $0x2e38] sm:$0xff]
    %v1586 = vld [vmem:[#allocation2 + $0x2e40] sm:$0xff]
    %v1587 = vld [vmem:[#allocation2 + $0x2e48] sm:$0xff]
    %v1588 = vld [vmem:[#allocation2 + $0x2e50] sm:$0xff]
    %v1589 = vld [vmem:[#allocation2 + $0x2e58] sm:$0xff]
    %v1590 = vld [vmem:[#allocation2 + $0x2e60] sm:$0xff]
    %v1591 = vld [vmem:[#allocation2 + $0x2e68] sm:$0xff]
    %v1592 = vld [vmem:[#allocation2 + $0x2e70] sm:$0xff]
    %v1593 = vld [vmem:[#allocation2 + $0x2e78] sm:$0xff]
    %v1594 = vld [vmem:[#allocation2 + $0x2e80] sm:$0xff]
    %v1595 = vld [vmem:[#allocation2 + $0x2e88] sm:$0xff]
    %v1596 = vld [vmem:[#allocation2 + $0x2e90] sm:$0xff]
    %v1597 = vld [vmem:[#allocation2 + $0x2e98] sm:$0xff]
    %v1598 = vld [vmem:[#allocation2 + $0x2ea0] sm:$0xff]
    %v1599 = vld [vmem:[#allocation2 + $0x2ea8] sm:$0xff]
    %v1600 = vld [vmem:[#allocation2 + $0x2eb0] sm:$0xff]
    %v1601 = vld [vmem:[#allocation2 + $0x2eb8] sm:$0xff]
    %v1602 = vld [vmem:[#allocation2 + $0x2ec0] sm:$0xff]
    %v1603 = vld [vmem:[#allocation2 + $0x2ec8] sm:$0xff]
    %v1604 = vld [vmem:[#allocation2 + $0x2ed0] sm:$0xff]
    %v1605 = vld [vmem:[#allocation2 + $0x2ed8] sm:$0xff]
    %v1606 = vld [vmem:[#allocation2 + $0x2ee0] sm:$0xff]
    %v1607 = vld [vmem:[#allocation2 + $0x2ee8] sm:$0xff]
    %v1608 = vld [vmem:[#allocation2 + $0x2ef0] sm:$0xff]
    %v1609 = vld [vmem:[#allocation2 + $0x2ef8] sm:$0xff]
    %v1610 = vld [vmem:[#allocation2 + $0x2f00] sm:$0xff]
    %v1611 = vld [vmem:[#allocation2 + $0x2f08] sm:$0xff]
    %v1612 = vld [vmem:[#allocation2 + $0x2f10] sm:$0xff]
    %v1613 = vld [vmem:[#allocation2 + $0x2f18] sm:$0xff]
    %v1614 = vld [vmem:[#allocation2 + $0x2f20] sm:$0xff]
    %v1615 = vld [vmem:[#allocation2 + $0x2f28] sm:$0xff]
    %v1616 = vld [vmem:[#allocation2 + $0x2f30] sm:$0xff]
    %v1617 = vld [vmem:[#allocation2 + $0x2f38] sm:$0xff]
    %v1618 = vld [vmem:[#allocation2 + $0x2f40] sm:$0xff]
    %v1619 = vld [vmem:[#allocation2 + $0x2f48] sm:$0xff]
    %v1620 = vld [vmem:[#allocation2 + $0x2f50] sm:$0xff]
    %v1621 = vld [vmem:[#allocation2 + $0x2f58] sm:$0xff]
    %v1622 = vld [vmem:[#allocation2 + $0x2f60] sm:$0xff]
    %v1623 = vld [vmem:[#allocation2 + $0x2f68] sm:$0xff]
    %v1624 = vld [vmem:[#allocation2 + $0x2f70] sm:$0xff]
    %v1625 = vld [vmem:[#allocation2 + $0x2f78] sm:$0xff]
    %v1626 = vld [vmem:[#allocation2 + $0x2f80] sm:$0xff]
    %v1627 = vld [vmem:[#allocation2 + $0x2f88] sm:$0xff]
    %v1628 = vld [vmem:[#allocation2 + $0x2f90] sm:$0xff]
    %v1629 = vld [vmem:[#allocation2 + $0x2f98] sm:$0xff]
    %v1630 = vld [vmem:[#allocation2 + $0x2fa0] sm:$0xff]
    %v1631 = vld [vmem:[#allocation2 + $0x2fa8] sm:$0xff]
    %v1632 = vld [vmem:[#allocation2 + $0x2fb0] sm:$0xff]
    %v1633 = vld [vmem:[#allocation2 + $0x2fb8] sm:$0xff]
    %v1634 = vld [vmem:[#allocation2 + $0x2fc0] sm:$0xff]
    %v1635 = vld [vmem:[#allocation2 + $0x2fc8] sm:$0xff]
    %v1636 = vld [vmem:[#allocation2 + $0x2fd0] sm:$0xff]
    %v1637 = vld [vmem:[#allocation2 + $0x2fd8] sm:$0xff]
    %v1638 = vld [vmem:[#allocation2 + $0x2fe0] sm:$0xff]
    %v1639 = vld [vmem:[#allocation2 + $0x2fe8] sm:$0xff]
    %v1640 = vld [vmem:[#allocation2 + $0x2ff0] sm:$0xff]
    %v1641 = vld [vmem:[#allocation2 + $0x2ff8] sm:$0xff]
    %v1642 = vld [vmem:[#allocation2 + $0x3000] sm:$0xff]
    %v1643 = vld [vmem:[#allocation2 + $0x3008] sm:$0xff]
    %v1644 = vld [vmem:[#allocation2 + $0x3010] sm:$0xff]
    %v1645 = vld [vmem:[#allocation2 + $0x3018] sm:$0xff]
    %v1646 = vld [vmem:[#allocation2 + $0x3020] sm:$0xff]
    %v1647 = vld [vmem:[#allocation2 + $0x3028] sm:$0xff]
    %v1648 = vld [vmem:[#allocation2 + $0x3030] sm:$0xff]
    %v1649 = vld [vmem:[#allocation2 + $0x3038] sm:$0xff]
    %v1650 = vld [vmem:[#allocation2 + $0x3040] sm:$0xff]
    %v1651 = vld [vmem:[#allocation2 + $0x3048] sm:$0xff]
    %v1652 = vld [vmem:[#allocation2 + $0x3050] sm:$0xff]
    %v1653 = vld [vmem:[#allocation2 + $0x3058] sm:$0xff]
    %v1654 = vld [vmem:[#allocation2 + $0x3060] sm:$0xff]
    %v1655 = vld [vmem:[#allocation2 + $0x3068] sm:$0xff]
    %v1656 = vld [vmem:[#allocation2 + $0x3070] sm:$0xff]
    %v1657 = vld [vmem:[#allocation2 + $0x3078] sm:$0xff]
    %v1658 = vld [vmem:[#allocation2 + $0x3080] sm:$0xff]
    %v1659 = vld [vmem:[#allocation2 + $0x3088] sm:$0xff]
    %v1660 = vld [vmem:[#allocation2 + $0x3090] sm:$0xff]
    %v1661 = vld [vmem:[#allocation2 + $0x3098] sm:$0xff]
    %v1662 = vld [vmem:[#allocation2 + $0x30a0] sm:$0xff]
    %v1663 = vld [vmem:[#allocation2 + $0x30a8] sm:$0xff]
    %v1664 = vld [vmem:[#allocation2 + $0x30b0] sm:$0xff]
    %v1665 = vld [vmem:[#allocation2 + $0x30b8] sm:$0xff]
    %v1666 = vld [vmem:[#allocation2 + $0x30c0] sm:$0xff]
    %v1667 = vld [vmem:[#allocation2 + $0x30c8] sm:$0xff]
    %v1668 = vld [vmem:[#allocation2 + $0x30d0] sm:$0xff]
    %v1669 = vld [vmem:[#allocation2 + $0x30d8] sm:$0xff]
    %v1670 = vld [vmem:[#allocation2 + $0x30e0] sm:$0xff]
    %v1671 = vld [vmem:[#allocation2 + $0x30e8] sm:$0xff]
    %v1672 = vld [vmem:[#allocation2 + $0x30f0] sm:$0xff]
    %v1673 = vld [vmem:[#allocation2 + $0x30f8] sm:$0xff]
    %v1674 = vld [vmem:[#allocation2 + $0x3100] sm:$0xff]
    %v1675 = vld [vmem:[#allocation2 + $0x3108] sm:$0xff]
    %v1676 = vld [vmem:[#allocation2 + $0x3110] sm:$0xff]
    %v1677 = vld [vmem:[#allocation2 + $0x3118] sm:$0xff]
    %v1678 = vld [vmem:[#allocation2 + $0x3120] sm:$0xff]
    %v1679 = vld [vmem:[#allocation2 + $0x3128] sm:$0xff]
    %v1680 = vld [vmem:[#allocation2 + $0x3130] sm:$0xff]
    %v1681 = vld [vmem:[#allocation2 + $0x3138] sm:$0xff]
    %v1682 = vld [vmem:[#allocation2 + $0x3140] sm:$0xff]
    %v1683 = vld [vmem:[#allocation2 + $0x3148] sm:$0xff]
    %v1684 = vld [vmem:[#allocation2 + $0x3150] sm:$0xff]
    %v1685 = vld [vmem:[#allocation2 + $0x3158] sm:$0xff]
    %v1686 = vld [vmem:[#allocation2 + $0x3160] sm:$0xff]
    %v1687 = vld [vmem:[#allocation2 + $0x3168] sm:$0xff]
    %v1688 = vld [vmem:[#allocation2 + $0x3170] sm:$0xff]
    %v1689 = vld [vmem:[#allocation2 + $0x3178] sm:$0xff]
    %v1690 = vld [vmem:[#allocation2 + $0x3180] sm:$0xff]
    %v1691 = vld [vmem:[#allocation2 + $0x3188] sm:$0xff]
    %v1692 = vld [vmem:[#allocation2 + $0x3190] sm:$0xff]
    %v1693 = vld [vmem:[#allocation2 + $0x3198] sm:$0xff]
    %v1694 = vld [vmem:[#allocation2 + $0x31a0] sm:$0xff]
    %v1695 = vld [vmem:[#allocation2 + $0x31a8] sm:$0xff]
    %v1696 = vld [vmem:[#allocation2 + $0x31b0] sm:$0xff]
    %v1697 = vld [vmem:[#allocation2 + $0x31b8] sm:$0xff]
    %v1698 = vld [vmem:[#allocation2 + $0x31c0] sm:$0xff]
    %v1699 = vld [vmem:[#allocation2 + $0x31c8] sm:$0xff]
    %v1700 = vld [vmem:[#allocation2 + $0x31d0] sm:$0xff]
    %v1701 = vld [vmem:[#allocation2 + $0x31d8] sm:$0xff]
    %v1702 = vld [vmem:[#allocation2 + $0x31e0] sm:$0xff]
    %v1703 = vld [vmem:[#allocation2 + $0x31e8] sm:$0xff]
    %v1704 = vld [vmem:[#allocation2 + $0x31f0] sm:$0xff]
    %v1705 = vld [vmem:[#allocation2 + $0x31f8] sm:$0xff]
    %v1706 = vld [vmem:[#allocation4] sm:$0xff]
    %v1707 = vld [vmem:[#allocation4 + $0x8] sm:$0xff]
    %v1708 = vlaneseq
    %v1709 = vshrl.u32 %v1708, 7
    %v1710 = vsub.s32 0, %v1709
    %v1711 = vrot.slane %v1706, %v1710
    %v1712 = vlaneseq
    %v1713 = vshrl.u32 %v1712, 7
    %v1714 = vsub.s32 0, %v1713
    %v1715 = vrot.slane %v1707, %v1714
    %1716 = vmatprep.subr.mxu0 %v107
    %1717 = vmatpush1.msra.mxu0 %v106
    %1718 = vmatprep.subr.mxu0 %v109
    %1719 = vmatpush1.msra.mxu0 %v108
    %1720 = vmatprep.subr.mxu0 %v111
    %1721 = vmatpush1.msra.mxu0 %v110
    %1722 = vmatprep.subr.mxu0 %v113
    %1723 = vmatpush1.msra.mxu0 %v112
    %1724 = vmatprep.subr.mxu0 %v115
    %1725 = vmatpush1.msra.mxu0 %v114
    %1726 = vmatprep.subr.mxu0 %v117
    %1727 = vmatpush1.msra.mxu0 %v116
    %1728 = vmatprep.subr.mxu0 %v119
    %1729 = vmatpush1.msra.mxu0 %v118
    %1730 = vmatprep.subr.mxu0 %v121
    %1731 = vmatpush1.msra.mxu0 %v120
    %1732 = vmatprep.subr.mxu0 %v123
    %1733 = vmatpush1.msra.mxu0 %v122
    %1734 = vmatprep.subr.mxu0 %v125
    %1735 = vmatpush1.msra.mxu0 %v124
    %1736 = vmatprep.subr.mxu0 %v127
    %1737 = vmatpush1.msra.mxu0 %v126
    %1738 = vmatprep.subr.mxu0 %v129
    %1739 = vmatpush1.msra.mxu0 %v128
    %1740 = vmatprep.subr.mxu0 %v131
    %1741 = vmatpush1.msra.mxu0 %v130
    %1742 = vmatprep.subr.mxu0 %v133
    %1743 = vmatpush1.msra.mxu0 %v132
    %1744 = vmatprep.subr.mxu0 %v135
    %1745 = vmatpush1.msra.mxu0 %v134
    %1746 = vmatprep.subr.mxu0 %v137
    %1747 = vmatpush1.msra.mxu0 %v136
    %1748 = vmatprep.subr.mxu0 %v139
    %1749 = vmatpush1.msra.mxu0 %v138
    %1750 = vmatprep.subr.mxu0 %v141
    %1751 = vmatpush1.msra.mxu0 %v140
    %1752 = vmatprep.subr.mxu0 %v143
    %1753 = vmatpush1.msra.mxu0 %v142
    %1754 = vmatprep.subr.mxu0 %v145
    %1755 = vmatpush1.msra.mxu0 %v144
    %1756 = vmatprep.subr.mxu0 %v147
    %1757 = vmatpush1.msra.mxu0 %v146
    %1758 = vmatprep.subr.mxu0 %v149
    %1759 = vmatpush1.msra.mxu0 %v148
    %1760 = vmatprep.subr.mxu0 %v151
    %1761 = vmatpush1.msra.mxu0 %v150
    %1762 = vmatprep.subr.mxu0 %v153
    %1763 = vmatpush1.msra.mxu0 %v152
    %1764 = vmatprep.subr.mxu0 %v155
    %1765 = vmatpush1.msra.mxu0 %v154
    %1766 = vmatprep.subr.mxu0 %v157
    %1767 = vmatpush1.msra.mxu0 %v156
    %1768 = vmatprep.subr.mxu0 %v159
    %1769 = vmatpush1.msra.mxu0 %v158
    %1770 = vmatprep.subr.mxu0 %v161
    %1771 = vmatpush1.msra.mxu0 %v160
    %1772 = vmatprep.subr.mxu0 %v163
    %1773 = vmatpush1.msra.mxu0 %v162
    %1774 = vmatprep.subr.mxu0 %v165
    %1775 = vmatpush1.msra.mxu0 %v164
    %1776 = vmatprep.subr.mxu0 %v167
    %1777 = vmatpush1.msra.mxu0 %v166
    %1778 = vmatprep.subr.mxu0 %v169
    %1779 = vmatpush1.msra.mxu0 %v168
    %1780 = vmatprep.mubr.f32.mxu0 %v57
    %1781 = vmatmul.mubr.f32.gmra.mrb[0].mxu0 %v56
    %v1782 = vpop.f32.mrb[0].mxu0
    %v1783 = vadd.f32 %v1711, %v1782
    %v1784 = vpop.f32.mrb[0].mxu0
    %v1785 = vadd.f32 %v1715, %v1784
    %1786 = vdwg.mxu0
    %1787 = vmatprep.subr.mxu0 %v171
    %1788 = vmatpush1.msra.mxu0 %v170
    %1789 = vmatprep.subr.mxu0 %v173
    %1790 = vmatpush1.msra.mxu0 %v172
    %1791 = vmatprep.subr.mxu0 %v175
    %1792 = vmatpush1.msra.mxu0 %v174
    %1793 = vmatprep.subr.mxu0 %v177
    %1794 = vmatpush1.msra.mxu0 %v176
    %1795 = vmatprep.subr.mxu0 %v179
    %1796 = vmatpush1.msra.mxu0 %v178
    %1797 = vmatprep.subr.mxu0 %v181
    %1798 = vmatpush1.msra.mxu0 %v180
    %1799 = vmatprep.subr.mxu0 %v183
    %1800 = vmatpush1.msra.mxu0 %v182
    %1801 = vmatprep.subr.mxu0 %v185
    %1802 = vmatpush1.msra.mxu0 %v184
    %1803 = vmatprep.subr.mxu0 %v187
    %1804 = vmatpush1.msra.mxu0 %v186
    %1805 = vmatprep.subr.mxu0 %v189
    %1806 = vmatpush1.msra.mxu0 %v188
    %1807 = vmatprep.subr.mxu0 %v191
    %1808 = vmatpush1.msra.mxu0 %v190
    %1809 = vmatprep.subr.mxu0 %v193
    %1810 = vmatpush1.msra.mxu0 %v192
    %1811 = vmatprep.subr.mxu0 %v195
    %1812 = vmatpush1.msra.mxu0 %v194
    %1813 = vmatprep.subr.mxu0 %v197
    %1814 = vmatpush1.msra.mxu0 %v196
    %1815 = vmatprep.subr.mxu0 %v199
    %1816 = vmatpush1.msra.mxu0 %v198
    %1817 = vmatprep.subr.mxu0 %v201
    %1818 = vmatpush1.msra.mxu0 %v200
    %1819 = vmatprep.subr.mxu0 %v203
    %1820 = vmatpush1.msra.mxu0 %v202
    %1821 = vmatprep.subr.mxu0 %v205
    %1822 = vmatpush1.msra.mxu0 %v204
    %1823 = vmatprep.subr.mxu0 %v207
    %1824 = vmatpush1.msra.mxu0 %v206
    %1825 = vmatprep.subr.mxu0 %v209
    %1826 = vmatpush1.msra.mxu0 %v208
    %1827 = vmatprep.subr.mxu0 %v211
    %1828 = vmatpush1.msra.mxu0 %v210
    %1829 = vmatprep.subr.mxu0 %v213
    %1830 = vmatpush1.msra.mxu0 %v212
    %1831 = vmatprep.subr.mxu0 %v215
    %1832 = vmatpush1.msra.mxu0 %v214
    %1833 = vmatprep.subr.mxu0 %v217
    %1834 = vmatpush1.msra.mxu0 %v216
    %1835 = vmatprep.subr.mxu0 %v219
    %1836 = vmatpush1.msra.mxu0 %v218
    %1837 = vmatprep.subr.mxu0 %v221
    %1838 = vmatpush1.msra.mxu0 %v220
    %1839 = vmatprep.subr.mxu0 %v223
    %1840 = vmatpush1.msra.mxu0 %v222
    %1841 = vmatprep.subr.mxu0 %v225
    %1842 = vmatpush1.msra.mxu0 %v224
    %1843 = vmatprep.subr.mxu0 %v227
    %1844 = vmatpush1.msra.mxu0 %v226
    %1845 = vmatprep.subr.mxu0 %v229
    %1846 = vmatpush1.msra.mxu0 %v228
    %1847 = vmatprep.subr.mxu0 %v231
    %1848 = vmatpush1.msra.mxu0 %v230
    %1849 = vmatprep.subr.mxu0 %v233
    %1850 = vmatpush1.msra.mxu0 %v232
    %1851 = vmatprep.mubr.f32.mxu0 %v59
    %1852 = vmatmul.mubr.f32.gmra.mrb[0].mxu0 %v58
    %v1853 = vpop.f32.mrb[0].mxu0
    %v1854 = vadd.f32 %v1783, %v1853
    %v1855 = vpop.f32.mrb[0].mxu0
    %v1856 = vadd.f32 %v1785, %v1855
    %1857 = vdwg.mxu0
    %1858 = vmatprep.subr.mxu0 %v235
    %1859 = vmatpush1.msra.mxu0 %v234
    %1860 = vmatprep.subr.mxu0 %v237
    %1861 = vmatpush1.msra.mxu0 %v236
    %1862 = vmatprep.subr.mxu0 %v239
    %1863 = vmatpush1.msra.mxu0 %v238
    %1864 = vmatprep.subr.mxu0 %v241
    %1865 = vmatpush1.msra.mxu0 %v240
    %1866 = vmatprep.subr.mxu0 %v243
    %1867 = vmatpush1.msra.mxu0 %v242
    %1868 = vmatprep.subr.mxu0 %v245
    %1869 = vmatpush1.msra.mxu0 %v244
    %1870 = vmatprep.subr.mxu0 %v247
    %1871 = vmatpush1.msra.mxu0 %v246
    %1872 = vmatprep.subr.mxu0 %v249
    %1873 = vmatpush1.msra.mxu0 %v248
    %1874 = vmatprep.subr.mxu0 %v251
    %1875 = vmatpush1.msra.mxu0 %v250
    %1876 = vmatprep.subr.mxu0 %v253
    %1877 = vmatpush1.msra.mxu0 %v252
    %1878 = vmatprep.subr.mxu0 %v255
    %1879 = vmatpush1.msra.mxu0 %v254
    %1880 = vmatprep.subr.mxu0 %v257
    %1881 = vmatpush1.msra.mxu0 %v256
    %1882 = vmatprep.subr.mxu0 %v259
    %1883 = vmatpush1.msra.mxu0 %v258
    %1884 = vmatprep.subr.mxu0 %v261
    %1885 = vmatpush1.msra.mxu0 %v260
    %1886 = vmatprep.subr.mxu0 %v263
    %1887 = vmatpush1.msra.mxu0 %v262
    %1888 = vmatprep.subr.mxu0 %v265
    %1889 = vmatpush1.msra.mxu0 %v264
    %1890 = vmatprep.subr.mxu0 %v267
    %1891 = vmatpush1.msra.mxu0 %v266
    %1892 = vmatprep.subr.mxu0 %v269
    %1893 = vmatpush1.msra.mxu0 %v268
    %1894 = vmatprep.subr.mxu0 %v271
    %1895 = vmatpush1.msra.mxu0 %v270
    %1896 = vmatprep.subr.mxu0 %v273
    %1897 = vmatpush1.msra.mxu0 %v272
    %1898 = vmatprep.subr.mxu0 %v275
    %1899 = vmatpush1.msra.mxu0 %v274
    %1900 = vmatprep.subr.mxu0 %v277
    %1901 = vmatpush1.msra.mxu0 %v276
    %1902 = vmatprep.subr.mxu0 %v279
    %1903 = vmatpush1.msra.mxu0 %v278
    %1904 = vmatprep.subr.mxu0 %v281
    %1905 = vmatpush1.msra.mxu0 %v280
    %1906 = vmatprep.subr.mxu0 %v283
    %1907 = vmatpush1.msra.mxu0 %v282
    %1908 = vmatprep.subr.mxu0 %v285
    %1909 = vmatpush1.msra.mxu0 %v284
    %1910 = vmatprep.subr.mxu0 %v287
    %1911 = vmatpush1.msra.mxu0 %v286
    %1912 = vmatprep.subr.mxu0 %v289
    %1913 = vmatpush1.msra.mxu0 %v288
    %1914 = vmatprep.subr.mxu0 %v291
    %1915 = vmatpush1.msra.mxu0 %v290
    %1916 = vmatprep.subr.mxu0 %v293
    %1917 = vmatpush1.msra.mxu0 %v292
    %1918 = vmatprep.subr.mxu0 %v295
    %1919 = vmatpush1.msra.mxu0 %v294
    %1920 = vmatprep.subr.mxu0 %v297
    %1921 = vmatpush1.msra.mxu0 %v296
    %1922 = vmatprep.mubr.f32.mxu0 %v61
    %1923 = vmatmul.mubr.f32.gmra.mrb[0].mxu0 %v60
    %v1924 = vpop.f32.mrb[0].mxu0
    %v1925 = vadd.f32 %v1854, %v1924
    %v1926 = vpop.f32.mrb[0].mxu0
    %v1927 = vadd.f32 %v1856, %v1926
    %1928 = vdwg.mxu0
    %1929 = vmatprep.subr.mxu0 %v299
    %1930 = vmatpush1.msra.mxu0 %v298
    %1931 = vmatprep.subr.mxu0 %v301
    %1932 = vmatpush1.msra.mxu0 %v300
    %1933 = vmatprep.subr.mxu0 %v303
    %1934 = vmatpush1.msra.mxu0 %v302
    %1935 = vmatprep.subr.mxu0 %v305
    %1936 = vmatpush1.msra.mxu0 %v304
    %1937 = vmatprep.subr.mxu0 %v307
    %1938 = vmatpush1.msra.mxu0 %v306
    %1939 = vmatprep.subr.mxu0 %v309
    %1940 = vmatpush1.msra.mxu0 %v308
    %1941 = vmatprep.subr.mxu0 %v311
    %1942 = vmatpush1.msra.mxu0 %v310
    %1943 = vmatprep.subr.mxu0 %v313
    %1944 = vmatpush1.msra.mxu0 %v312
    %1945 = vmatprep.subr.mxu0 %v315
    %1946 = vmatpush1.msra.mxu0 %v314
    %1947 = vmatprep.subr.mxu0 %v317
    %1948 = vmatpush1.msra.mxu0 %v316
    %1949 = vmatprep.subr.mxu0 %v319
    %1950 = vmatpush1.msra.mxu0 %v318
    %1951 = vmatprep.subr.mxu0 %v321
    %1952 = vmatpush1.msra.mxu0 %v320
    %1953 = vmatprep.subr.mxu0 %v323
    %1954 = vmatpush1.msra.mxu0 %v322
    %1955 = vmatprep.subr.mxu0 %v325
    %1956 = vmatpush1.msra.mxu0 %v324
    %1957 = vmatprep.subr.mxu0 %v327
    %1958 = vmatpush1.msra.mxu0 %v326
    %1959 = vmatprep.subr.mxu0 %v329
    %1960 = vmatpush1.msra.mxu0 %v328
    %1961 = vmatprep.subr.mxu0 %v331
    %1962 = vmatpush1.msra.mxu0 %v330
    %1963 = vmatprep.subr.mxu0 %v333
    %1964 = vmatpush1.msra.mxu0 %v332
    %1965 = vmatprep.subr.mxu0 %v335
    %1966 = vmatpush1.msra.mxu0 %v334
    %1967 = vmatprep.subr.mxu0 %v337
    %1968 = vmatpush1.msra.mxu0 %v336
    %1969 = vmatprep.subr.mxu0 %v339
    %1970 = vmatpush1.msra.mxu0 %v338
    %1971 = vmatprep.subr.mxu0 %v341
    %1972 = vmatpush1.msra.mxu0 %v340
    %1973 = vmatprep.subr.mxu0 %v343
    %1974 = vmatpush1.msra.mxu0 %v342
    %1975 = vmatprep.subr.mxu0 %v345
    %1976 = vmatpush1.msra.mxu0 %v344
    %1977 = vmatprep.subr.mxu0 %v347
    %1978 = vmatpush1.msra.mxu0 %v346
    %1979 = vmatprep.subr.mxu0 %v349
    %1980 = vmatpush1.msra.mxu0 %v348
    %1981 = vmatprep.subr.mxu0 %v351
    %1982 = vmatpush1.msra.mxu0 %v350
    %1983 = vmatprep.subr.mxu0 %v353
    %1984 = vmatpush1.msra.mxu0 %v352
    %1985 = vmatprep.subr.mxu0 %v355
    %1986 = vmatpush1.msra.mxu0 %v354
    %1987 = vmatprep.subr.mxu0 %v357
    %1988 = vmatpush1.msra.mxu0 %v356
    %1989 = vmatprep.subr.mxu0 %v359
    %1990 = vmatpush1.msra.mxu0 %v358
    %1991 = vmatprep.subr.mxu0 %v361
    %1992 = vmatpush1.msra.mxu0 %v360
    %1993 = vmatprep.mubr.f32.mxu0 %v63
    %1994 = vmatmul.mubr.f32.gmra.mrb[0].mxu0 %v62
    %v1995 = vpop.f32.mrb[0].mxu0
    %v1996 = vadd.f32 %v1925, %v1995
    %v1997 = vpop.f32.mrb[0].mxu0
    %v1998 = vadd.f32 %v1927, %v1997
    %1999 = vdwg.mxu0
    %2000 = vmatprep.subr.mxu0 %v363
    %2001 = vmatpush1.msra.mxu0 %v362
    %2002 = vmatprep.subr.mxu0 %v365
    %2003 = vmatpush1.msra.mxu0 %v364
    %2004 = vmatprep.subr.mxu0 %v367
    %2005 = vmatpush1.msra.mxu0 %v366
    %2006 = vmatprep.subr.mxu0 %v369
    %2007 = vmatpush1.msra.mxu0 %v368
    %2008 = vmatprep.subr.mxu0 %v371
    %2009 = vmatpush1.msra.mxu0 %v370
    %2010 = vmatprep.subr.mxu0 %v373
    %2011 = vmatpush1.msra.mxu0 %v372
    %2012 = vmatprep.subr.mxu0 %v375
    %2013 = vmatpush1.msra.mxu0 %v374
    %2014 = vmatprep.subr.mxu0 %v377
    %2015 = vmatpush1.msra.mxu0 %v376
    %2016 = vmatprep.subr.mxu0 %v379
    %2017 = vmatpush1.msra.mxu0 %v378
    %2018 = vmatprep.subr.mxu0 %v381
    %2019 = vmatpush1.msra.mxu0 %v380
    %2020 = vmatprep.subr.mxu0 %v383
    %2021 = vmatpush1.msra.mxu0 %v382
    %2022 = vmatprep.subr.mxu0 %v385
    %2023 = vmatpush1.msra.mxu0 %v384
    %2024 = vmatprep.subr.mxu0 %v387
    %2025 = vmatpush1.msra.mxu0 %v386
    %2026 = vmatprep.subr.mxu0 %v389
    %2027 = vmatpush1.msra.mxu0 %v388
    %2028 = vmatprep.subr.mxu0 %v391
    %2029 = vmatpush1.msra.mxu0 %v390
    %2030 = vmatprep.subr.mxu0 %v393
    %2031 = vmatpush1.msra.mxu0 %v392
    %2032 = vmatprep.subr.mxu0 %v395
    %2033 = vmatpush1.msra.mxu0 %v394
    %2034 = vmatprep.subr.mxu0 %v397
    %2035 = vmatpush1.msra.mxu0 %v396
    %2036 = vmatprep.subr.mxu0 %v399
    %2037 = vmatpush1.msra.mxu0 %v398
    %2038 = vmatprep.subr.mxu0 %v401
    %2039 = vmatpush1.msra.mxu0 %v400
    %2040 = vmatprep.subr.mxu0 %v403
    %2041 = vmatpush1.msra.mxu0 %v402
    %2042 = vmatprep.subr.mxu0 %v405
    %2043 = vmatpush1.msra.mxu0 %v404
    %2044 = vmatprep.subr.mxu0 %v407
    %2045 = vmatpush1.msra.mxu0 %v406
    %2046 = vmatprep.subr.mxu0 %v409
    %2047 = vmatpush1.msra.mxu0 %v408
    %2048 = vmatprep.subr.mxu0 %v411
    %2049 = vmatpush1.msra.mxu0 %v410
    %2050 = vmatprep.subr.mxu0 %v413
    %2051 = vmatpush1.msra.mxu0 %v412
    %2052 = vmatprep.subr.mxu0 %v415
    %2053 = vmatpush1.msra.mxu0 %v414
    %2054 = vmatprep.subr.mxu0 %v417
    %2055 = vmatpush1.msra.mxu0 %v416
    %2056 = vmatprep.subr.mxu0 %v419
    %2057 = vmatpush1.msra.mxu0 %v418
    %2058 = vmatprep.subr.mxu0 %v421
    %2059 = vmatpush1.msra.mxu0 %v420
    %2060 = vmatprep.subr.mxu0 %v423
    %2061 = vmatpush1.msra.mxu0 %v422
    %2062 = vmatprep.subr.mxu0 %v425
    %2063 = vmatpush1.msra.mxu0 %v424
    %2064 = vmatprep.mubr.f32.mxu0 %v65
    %2065 = vmatmul.mubr.f32.gmra.mrb[0].mxu0 %v64
    %v2066 = vpop.f32.mrb[0].mxu0
    %v2067 = vadd.f32 %v1996, %v2066
    %v2068 = vpop.f32.mrb[0].mxu0
    %v2069 = vadd.f32 %v1998, %v2068
    %2070 = vdwg.mxu0
    %2071 = vmatprep.subr.mxu0 %v427
    %2072 = vmatpush1.msra.mxu0 %v426
    %2073 = vmatprep.subr.mxu0 %v429
    %2074 = vmatpush1.msra.mxu0 %v428
    %2075 = vmatprep.subr.mxu0 %v431
    %2076 = vmatpush1.msra.mxu0 %v430
    %2077 = vmatprep.subr.mxu0 %v433
    %2078 = vmatpush1.msra.mxu0 %v432
    %2079 = vmatprep.subr.mxu0 %v435
    %2080 = vmatpush1.msra.mxu0 %v434
    %2081 = vmatprep.subr.mxu0 %v437
    %2082 = vmatpush1.msra.mxu0 %v436
    %2083 = vmatprep.subr.mxu0 %v439
    %2084 = vmatpush1.msra.mxu0 %v438
    %2085 = vmatprep.subr.mxu0 %v441
    %2086 = vmatpush1.msra.mxu0 %v440
    %2087 = vmatprep.subr.mxu0 %v443
    %2088 = vmatpush1.msra.mxu0 %v442
    %2089 = vmatprep.subr.mxu0 %v445
    %2090 = vmatpush1.msra.mxu0 %v444
    %2091 = vmatprep.subr.mxu0 %v447
    %2092 = vmatpush1.msra.mxu0 %v446
    %2093 = vmatprep.subr.mxu0 %v449
    %2094 = vmatpush1.msra.mxu0 %v448
    %2095 = vmatprep.subr.mxu0 %v451
    %2096 = vmatpush1.msra.mxu0 %v450
    %2097 = vmatprep.subr.mxu0 %v453
    %2098 = vmatpush1.msra.mxu0 %v452
    %2099 = vmatprep.subr.mxu0 %v455
    %2100 = vmatpush1.msra.mxu0 %v454
    %2101 = vmatprep.subr.mxu0 %v457
    %2102 = vmatpush1.msra.mxu0 %v456
    %2103 = vmatprep.subr.mxu0 %v459
    %2104 = vmatpush1.msra.mxu0 %v458
    %2105 = vmatprep.subr.mxu0 %v461
    %2106 = vmatpush1.msra.mxu0 %v460
    %2107 = vmatprep.subr.mxu0 %v463
    %2108 = vmatpush1.msra.mxu0 %v462
    %2109 = vmatprep.subr.mxu0 %v465
    %2110 = vmatpush1.msra.mxu0 %v464
    %2111 = vmatprep.subr.mxu0 %v467
    %2112 = vmatpush1.msra.mxu0 %v466
    %2113 = vmatprep.subr.mxu0 %v469
    %2114 = vmatpush1.msra.mxu0 %v468
    %2115 = vmatprep.subr.mxu0 %v471
    %2116 = vmatpush1.msra.mxu0 %v470
    %2117 = vmatprep.subr.mxu0 %v473
    %2118 = vmatpush1.msra.mxu0 %v472
    %2119 = vmatprep.subr.mxu0 %v475
    %2120 = vmatpush1.msra.mxu0 %v474
    %2121 = vmatprep.subr.mxu0 %v477
    %2122 = vmatpush1.msra.mxu0 %v476
    %2123 = vmatprep.subr.mxu0 %v479
    %2124 = vmatpush1.msra.mxu0 %v478
    %2125 = vmatprep.subr.mxu0 %v481
    %2126 = vmatpush1.msra.mxu0 %v480
    %2127 = vmatprep.subr.mxu0 %v483
    %2128 = vmatpush1.msra.mxu0 %v482
    %2129 = vmatprep.subr.mxu0 %v485
    %2130 = vmatpush1.msra.mxu0 %v484
    %2131 = vmatprep.subr.mxu0 %v487
    %2132 = vmatpush1.msra.mxu0 %v486
    %2133 = vmatprep.subr.mxu0 %v489
    %2134 = vmatpush1.msra.mxu0 %v488
    %2135 = vmatprep.mubr.f32.mxu0 %v67
    %2136 = vmatmul.mubr.f32.gmra.mrb[0].mxu0 %v66
    %v2137 = vpop.f32.mrb[0].mxu0
    %v2138 = vadd.f32 %v2067, %v2137
    %v2139 = vpop.f32.mrb[0].mxu0
    %v2140 = vadd.f32 %v2069, %v2139
    %2141 = vdwg.mxu0
    %2142 = vmatprep.subr.mxu0 %v491
    %2143 = vmatpush1.msra.mxu0 %v490
    %2144 = vmatprep.subr.mxu0 %v493
    %2145 = vmatpush1.msra.mxu0 %v492
    %2146 = vmatprep.subr.mxu0 %v495
    %2147 = vmatpush1.msra.mxu0 %v494
    %2148 = vmatprep.subr.mxu0 %v497
    %2149 = vmatpush1.msra.mxu0 %v496
    %2150 = vmatprep.subr.mxu0 %v499
    %2151 = vmatpush1.msra.mxu0 %v498
    %2152 = vmatprep.subr.mxu0 %v501
    %2153 = vmatpush1.msra.mxu0 %v500
    %2154 = vmatprep.subr.mxu0 %v503
    %2155 = vmatpush1.msra.mxu0 %v502
    %2156 = vmatprep.subr.mxu0 %v505
    %2157 = vmatpush1.msra.mxu0 %v504
    %2158 = vmatprep.subr.mxu0 %v507
    %2159 = vmatpush1.msra.mxu0 %v506
    %2160 = vmatprep.subr.mxu0 %v509
    %2161 = vmatpush1.msra.mxu0 %v508
    %2162 = vmatprep.subr.mxu0 %v511
    %2163 = vmatpush1.msra.mxu0 %v510
    %2164 = vmatprep.subr.mxu0 %v513
    %2165 = vmatpush1.msra.mxu0 %v512
    %2166 = vmatprep.subr.mxu0 %v515
    %2167 = vmatpush1.msra.mxu0 %v514
    %2168 = vmatprep.subr.mxu0 %v517
    %2169 = vmatpush1.msra.mxu0 %v516
    %2170 = vmatprep.subr.mxu0 %v519
    %2171 = vmatpush1.msra.mxu0 %v518
    %2172 = vmatprep.subr.mxu0 %v521
    %2173 = vmatpush1.msra.mxu0 %v520
    %2174 = vmatprep.subr.mxu0 %v523
    %2175 = vmatpush1.msra.mxu0 %v522
    %2176 = vmatprep.subr.mxu0 %v525
    %2177 = vmatpush1.msra.mxu0 %v524
    %2178 = vmatprep.subr.mxu0 %v527
    %2179 = vmatpush1.msra.mxu0 %v526
    %2180 = vmatprep.subr.mxu0 %v529
    %2181 = vmatpush1.msra.mxu0 %v528
    %2182 = vmatprep.subr.mxu0 %v531
    %2183 = vmatpush1.msra.mxu0 %v530
    %2184 = vmatprep.subr.mxu0 %v533
    %2185 = vmatpush1.msra.mxu0 %v532
    %2186 = vmatprep.subr.mxu0 %v535
    %2187 = vmatpush1.msra.mxu0 %v534
    %2188 = vmatprep.subr.mxu0 %v537
    %2189 = vmatpush1.msra.mxu0 %v536
    %2190 = vmatprep.subr.mxu0 %v539
    %2191 = vmatpush1.msra.mxu0 %v538
    %2192 = vmatprep.subr.mxu0 %v541
    %2193 = vmatpush1.msra.mxu0 %v540
    %2194 = vmatprep.subr.mxu0 %v543
    %2195 = vmatpush1.msra.mxu0 %v542
    %2196 = vmatprep.subr.mxu0 %v545
    %2197 = vmatpush1.msra.mxu0 %v544
    %2198 = vmatprep.subr.mxu0 %v547
    %2199 = vmatpush1.msra.mxu0 %v546
    %2200 = vmatprep.subr.mxu0 %v549
    %2201 = vmatpush1.msra.mxu0 %v548
    %2202 = vmatprep.subr.mxu0 %v551
    %2203 = vmatpush1.msra.mxu0 %v550
    %2204 = vmatprep.subr.mxu0 %v553
    %2205 = vmatpush1.msra.mxu0 %v552
    %2206 = vmatprep.mubr.f32.mxu0 %v69
    %2207 = vmatmul.mubr.f32.gmra.mrb[0].mxu0 %v68
    %v2208 = vpop.f32.mrb[0].mxu0
    %v2209 = vadd.f32 %v2138, %v2208
    %v2210 = vpop.f32.mrb[0].mxu0
    %v2211 = vadd.f32 %v2140, %v2210
    %2212 = vdwg.mxu0
    %2213 = vmatprep.subr.mxu0 %v555
    %2214 = vmatpush1.msra.mxu0 %v554
    %2215 = vmatprep.subr.mxu0 %v557
    %2216 = vmatpush1.msra.mxu0 %v556
    %2217 = vmatprep.subr.mxu0 %v559
    %2218 = vmatpush1.msra.mxu0 %v558
    %2219 = vmatprep.subr.mxu0 %v561
    %2220 = vmatpush1.msra.mxu0 %v560
    %2221 = vmatprep.subr.mxu0 %v563
    %2222 = vmatpush1.msra.mxu0 %v562
    %2223 = vmatprep.subr.mxu0 %v565
    %2224 = vmatpush1.msra.mxu0 %v564
    %2225 = vmatprep.subr.mxu0 %v567
    %2226 = vmatpush1.msra.mxu0 %v566
    %2227 = vmatprep.subr.mxu0 %v569
    %2228 = vmatpush1.msra.mxu0 %v568
    %2229 = vmatprep.subr.mxu0 %v571
    %2230 = vmatpush1.msra.mxu0 %v570
    %2231 = vmatprep.subr.mxu0 %v573
    %2232 = vmatpush1.msra.mxu0 %v572
    %2233 = vmatprep.subr.mxu0 %v575
    %2234 = vmatpush1.msra.mxu0 %v574
    %2235 = vmatprep.subr.mxu0 %v577
    %2236 = vmatpush1.msra.mxu0 %v576
    %2237 = vmatprep.subr.mxu0 %v579
    %2238 = vmatpush1.msra.mxu0 %v578
    %2239 = vmatprep.subr.mxu0 %v581
    %2240 = vmatpush1.msra.mxu0 %v580
    %2241 = vmatprep.subr.mxu0 %v583
    %2242 = vmatpush1.msra.mxu0 %v582
    %2243 = vmatprep.subr.mxu0 %v585
    %2244 = vmatpush1.msra.mxu0 %v584
    %2245 = vmatprep.subr.mxu0 %v587
    %2246 = vmatpush1.msra.mxu0 %v586
    %2247 = vmatprep.subr.mxu0 %v589
    %2248 = vmatpush1.msra.mxu0 %v588
    %2249 = vmatprep.subr.mxu0 %v591
    %2250 = vmatpush1.msra.mxu0 %v590
    %2251 = vmatprep.subr.mxu0 %v593
    %2252 = vmatpush1.msra.mxu0 %v592
    %2253 = vmatprep.subr.mxu0 %v595
    %2254 = vmatpush1.msra.mxu0 %v594
    %2255 = vmatprep.subr.mxu0 %v597
    %2256 = vmatpush1.msra.mxu0 %v596
    %2257 = vmatprep.subr.mxu0 %v599
    %2258 = vmatpush1.msra.mxu0 %v598
    %2259 = vmatprep.subr.mxu0 %v601
    %2260 = vmatpush1.msra.mxu0 %v600
    %2261 = vmatprep.subr.mxu0 %v603
    %2262 = vmatpush1.msra.mxu0 %v602
    %2263 = vmatprep.subr.mxu0 %v605
    %2264 = vmatpush1.msra.mxu0 %v604
    %2265 = vmatprep.subr.mxu0 %v607
    %2266 = vmatpush1.msra.mxu0 %v606
    %2267 = vmatprep.subr.mxu0 %v609
    %2268 = vmatpush1.msra.mxu0 %v608
    %2269 = vmatprep.subr.mxu0 %v611
    %2270 = vmatpush1.msra.mxu0 %v610
    %2271 = vmatprep.subr.mxu0 %v613
    %2272 = vmatpush1.msra.mxu0 %v612
    %2273 = vmatprep.subr.mxu0 %v615
    %2274 = vmatpush1.msra.mxu0 %v614
    %2275 = vmatprep.subr.mxu0 %v617
    %2276 = vmatpush1.msra.mxu0 %v616
    %2277 = vmatprep.mubr.f32.mxu0 %v71
    %2278 = vmatmul.mubr.f32.gmra.mrb[0].mxu0 %v70
    %v2279 = vpop.f32.mrb[0].mxu0
    %v2280 = vadd.f32 %v2209, %v2279
    %v2281 = vpop.f32.mrb[0].mxu0
    %v2282 = vadd.f32 %v2211, %v2281
    %2283 = vdwg.mxu0
    %2284 = vmatprep.subr.mxu0 %v619
    %2285 = vmatpush1.msra.mxu0 %v618
    %2286 = vmatprep.subr.mxu0 %v621
    %2287 = vmatpush1.msra.mxu0 %v620
    %2288 = vmatprep.subr.mxu0 %v623
    %2289 = vmatpush1.msra.mxu0 %v622
    %2290 = vmatprep.subr.mxu0 %v625
    %2291 = vmatpush1.msra.mxu0 %v624
    %2292 = vmatprep.subr.mxu0 %v627
    %2293 = vmatpush1.msra.mxu0 %v626
    %2294 = vmatprep.subr.mxu0 %v629
    %2295 = vmatpush1.msra.mxu0 %v628
    %2296 = vmatprep.subr.mxu0 %v631
    %2297 = vmatpush1.msra.mxu0 %v630
    %2298 = vmatprep.subr.mxu0 %v633
    %2299 = vmatpush1.msra.mxu0 %v632
    %2300 = vmatprep.subr.mxu0 %v635
    %2301 = vmatpush1.msra.mxu0 %v634
    %2302 = vmatprep.subr.mxu0 %v637
    %2303 = vmatpush1.msra.mxu0 %v636
    %2304 = vmatprep.subr.mxu0 %v639
    %2305 = vmatpush1.msra.mxu0 %v638
    %2306 = vmatprep.subr.mxu0 %v641
    %2307 = vmatpush1.msra.mxu0 %v640
    %2308 = vmatprep.subr.mxu0 %v643
    %2309 = vmatpush1.msra.mxu0 %v642
    %2310 = vmatprep.subr.mxu0 %v645
    %2311 = vmatpush1.msra.mxu0 %v644
    %2312 = vmatprep.subr.mxu0 %v647
    %2313 = vmatpush1.msra.mxu0 %v646
    %2314 = vmatprep.subr.mxu0 %v649
    %2315 = vmatpush1.msra.mxu0 %v648
    %2316 = vmatprep.subr.mxu0 %v651
    %2317 = vmatpush1.msra.mxu0 %v650
    %2318 = vmatprep.subr.mxu0 %v653
    %2319 = vmatpush1.msra.mxu0 %v652
    %2320 = vmatprep.subr.mxu0 %v655
    %2321 = vmatpush1.msra.mxu0 %v654
    %2322 = vmatprep.subr.mxu0 %v657
    %2323 = vmatpush1.msra.mxu0 %v656
    %2324 = vmatprep.subr.mxu0 %v659
    %2325 = vmatpush1.msra.mxu0 %v658
    %2326 = vmatprep.subr.mxu0 %v661
    %2327 = vmatpush1.msra.mxu0 %v660
    %2328 = vmatprep.subr.mxu0 %v663
    %2329 = vmatpush1.msra.mxu0 %v662
    %2330 = vmatprep.subr.mxu0 %v665
    %2331 = vmatpush1.msra.mxu0 %v664
    %2332 = vmatprep.subr.mxu0 %v667
    %2333 = vmatpush1.msra.mxu0 %v666
    %2334 = vmatprep.subr.mxu0 %v669
    %2335 = vmatpush1.msra.mxu0 %v668
    %2336 = vmatprep.subr.mxu0 %v671
    %2337 = vmatpush1.msra.mxu0 %v670
    %2338 = vmatprep.subr.mxu0 %v673
    %2339 = vmatpush1.msra.mxu0 %v672
    %2340 = vmatprep.subr.mxu0 %v675
    %2341 = vmatpush1.msra.mxu0 %v674
    %2342 = vmatprep.subr.mxu0 %v677
    %2343 = vmatpush1.msra.mxu0 %v676
    %2344 = vmatprep.subr.mxu0 %v679
    %2345 = vmatpush1.msra.mxu0 %v678
    %2346 = vmatprep.subr.mxu0 %v681
    %2347 = vmatpush1.msra.mxu0 %v680
    %2348 = vmatprep.mubr.f32.mxu0 %v73
    %2349 = vmatmul.mubr.f32.gmra.mrb[0].mxu0 %v72
    %v2350 = vpop.f32.mrb[0].mxu0
    %v2351 = vadd.f32 %v2280, %v2350
    %v2352 = vpop.f32.mrb[0].mxu0
    %v2353 = vadd.f32 %v2282, %v2352
    %2354 = vdwg.mxu0
    %2355 = vmatprep.subr.mxu0 %v683
    %2356 = vmatpush1.msra.mxu0 %v682
    %2357 = vmatprep.subr.mxu0 %v685
    %2358 = vmatpush1.msra.mxu0 %v684
    %2359 = vmatprep.subr.mxu0 %v687
    %2360 = vmatpush1.msra.mxu0 %v686
    %2361 = vmatprep.subr.mxu0 %v689
    %2362 = vmatpush1.msra.mxu0 %v688
    %2363 = vmatprep.subr.mxu0 %v691
    %2364 = vmatpush1.msra.mxu0 %v690
    %2365 = vmatprep.subr.mxu0 %v693
    %2366 = vmatpush1.msra.mxu0 %v692
    %2367 = vmatprep.subr.mxu0 %v695
    %2368 = vmatpush1.msra.mxu0 %v694
    %2369 = vmatprep.subr.mxu0 %v697
    %2370 = vmatpush1.msra.mxu0 %v696
    %2371 = vmatprep.subr.mxu0 %v699
    %2372 = vmatpush1.msra.mxu0 %v698
    %2373 = vmatprep.subr.mxu0 %v701
    %2374 = vmatpush1.msra.mxu0 %v700
    %2375 = vmatprep.subr.mxu0 %v703
    %2376 = vmatpush1.msra.mxu0 %v702
    %2377 = vmatprep.subr.mxu0 %v705
    %2378 = vmatpush1.msra.mxu0 %v704
    %2379 = vmatprep.subr.mxu0 %v707
    %2380 = vmatpush1.msra.mxu0 %v706
    %2381 = vmatprep.subr.mxu0 %v709
    %2382 = vmatpush1.msra.mxu0 %v708
    %2383 = vmatprep.subr.mxu0 %v711
    %2384 = vmatpush1.msra.mxu0 %v710
    %2385 = vmatprep.subr.mxu0 %v713
    %2386 = vmatpush1.msra.mxu0 %v712
    %2387 = vmatprep.subr.mxu0 %v715
    %2388 = vmatpush1.msra.mxu0 %v714
    %2389 = vmatprep.subr.mxu0 %v717
    %2390 = vmatpush1.msra.mxu0 %v716
    %2391 = vmatprep.subr.mxu0 %v719
    %2392 = vmatpush1.msra.mxu0 %v718
    %2393 = vmatprep.subr.mxu0 %v721
    %2394 = vmatpush1.msra.mxu0 %v720
    %2395 = vmatprep.subr.mxu0 %v723
    %2396 = vmatpush1.msra.mxu0 %v722
    %2397 = vmatprep.subr.mxu0 %v725
    %2398 = vmatpush1.msra.mxu0 %v724
    %2399 = vmatprep.subr.mxu0 %v727
    %2400 = vmatpush1.msra.mxu0 %v726
    %2401 = vmatprep.subr.mxu0 %v729
    %2402 = vmatpush1.msra.mxu0 %v728
    %2403 = vmatprep.subr.mxu0 %v731
    %2404 = vmatpush1.msra.mxu0 %v730
    %2405 = vmatprep.subr.mxu0 %v733
    %2406 = vmatpush1.msra.mxu0 %v732
    %2407 = vmatprep.subr.mxu0 %v735
    %2408 = vmatpush1.msra.mxu0 %v734
    %2409 = vmatprep.subr.mxu0 %v737
    %2410 = vmatpush1.msra.mxu0 %v736
    %2411 = vmatprep.subr.mxu0 %v739
    %2412 = vmatpush1.msra.mxu0 %v738
    %2413 = vmatprep.subr.mxu0 %v741
    %2414 = vmatpush1.msra.mxu0 %v740
    %2415 = vmatprep.subr.mxu0 %v743
    %2416 = vmatpush1.msra.mxu0 %v742
    %2417 = vmatprep.subr.mxu0 %v745
    %2418 = vmatpush1.msra.mxu0 %v744
    %2419 = vmatprep.mubr.f32.mxu0 %v75
    %2420 = vmatmul.mubr.f32.gmra.mrb[0].mxu0 %v74
    %v2421 = vpop.f32.mrb[0].mxu0
    %v2422 = vadd.f32 %v2351, %v2421
    %v2423 = vpop.f32.mrb[0].mxu0
    %v2424 = vadd.f32 %v2353, %v2423
    %2425 = vdwg.mxu0
    %2426 = vmatprep.subr.mxu0 %v747
    %2427 = vmatpush1.msra.mxu0 %v746
    %2428 = vmatprep.subr.mxu0 %v749
    %2429 = vmatpush1.msra.mxu0 %v748
    %2430 = vmatprep.subr.mxu0 %v751
    %2431 = vmatpush1.msra.mxu0 %v750
    %2432 = vmatprep.subr.mxu0 %v753
    %2433 = vmatpush1.msra.mxu0 %v752
    %2434 = vmatprep.subr.mxu0 %v755
    %2435 = vmatpush1.msra.mxu0 %v754
    %2436 = vmatprep.subr.mxu0 %v757
    %2437 = vmatpush1.msra.mxu0 %v756
    %2438 = vmatprep.subr.mxu0 %v759
    %2439 = vmatpush1.msra.mxu0 %v758
    %2440 = vmatprep.subr.mxu0 %v761
    %2441 = vmatpush1.msra.mxu0 %v760
    %2442 = vmatprep.subr.mxu0 %v763
    %2443 = vmatpush1.msra.mxu0 %v762
    %2444 = vmatprep.subr.mxu0 %v765
    %2445 = vmatpush1.msra.mxu0 %v764
    %2446 = vmatprep.subr.mxu0 %v767
    %2447 = vmatpush1.msra.mxu0 %v766
    %2448 = vmatprep.subr.mxu0 %v769
    %2449 = vmatpush1.msra.mxu0 %v768
    %2450 = vmatprep.subr.mxu0 %v771
    %2451 = vmatpush1.msra.mxu0 %v770
    %2452 = vmatprep.subr.mxu0 %v773
    %2453 = vmatpush1.msra.mxu0 %v772
    %2454 = vmatprep.subr.mxu0 %v775
    %2455 = vmatpush1.msra.mxu0 %v774
    %2456 = vmatprep.subr.mxu0 %v777
    %2457 = vmatpush1.msra.mxu0 %v776
    %2458 = vmatprep.subr.mxu0 %v779
    %2459 = vmatpush1.msra.mxu0 %v778
    %2460 = vmatprep.subr.mxu0 %v781
    %2461 = vmatpush1.msra.mxu0 %v780
    %2462 = vmatprep.subr.mxu0 %v783
    %2463 = vmatpush1.msra.mxu0 %v782
    %2464 = vmatprep.subr.mxu0 %v785
    %2465 = vmatpush1.msra.mxu0 %v784
    %2466 = vmatprep.subr.mxu0 %v787
    %2467 = vmatpush1.msra.mxu0 %v786
    %2468 = vmatprep.subr.mxu0 %v789
    %2469 = vmatpush1.msra.mxu0 %v788
    %2470 = vmatprep.subr.mxu0 %v791
    %2471 = vmatpush1.msra.mxu0 %v790
    %2472 = vmatprep.subr.mxu0 %v793
    %2473 = vmatpush1.msra.mxu0 %v792
    %2474 = vmatprep.subr.mxu0 %v795
    %2475 = vmatpush1.msra.mxu0 %v794
    %2476 = vmatprep.subr.mxu0 %v797
    %2477 = vmatpush1.msra.mxu0 %v796
    %2478 = vmatprep.subr.mxu0 %v799
    %2479 = vmatpush1.msra.mxu0 %v798
    %2480 = vmatprep.subr.mxu0 %v801
    %2481 = vmatpush1.msra.mxu0 %v800
    %2482 = vmatprep.subr.mxu0 %v803
    %2483 = vmatpush1.msra.mxu0 %v802
    %2484 = vmatprep.subr.mxu0 %v805
    %2485 = vmatpush1.msra.mxu0 %v804
    %2486 = vmatprep.subr.mxu0 %v807
    %2487 = vmatpush1.msra.mxu0 %v806
    %2488 = vmatprep.subr.mxu0 %v809
    %2489 = vmatpush1.msra.mxu0 %v808
    %2490 = vmatprep.mubr.f32.mxu0 %v77
    %2491 = vmatmul.mubr.f32.gmra.mrb[0].mxu0 %v76
    %v2492 = vpop.f32.mrb[0].mxu0
    %v2493 = vadd.f32 %v2422, %v2492
    %v2494 = vpop.f32.mrb[0].mxu0
    %v2495 = vadd.f32 %v2424, %v2494
    %2496 = vdwg.mxu0
    %2497 = vmatprep.subr.mxu0 %v811
    %2498 = vmatpush1.msra.mxu0 %v810
    %2499 = vmatprep.subr.mxu0 %v813
    %2500 = vmatpush1.msra.mxu0 %v812
    %2501 = vmatprep.subr.mxu0 %v815
    %2502 = vmatpush1.msra.mxu0 %v814
    %2503 = vmatprep.subr.mxu0 %v817
    %2504 = vmatpush1.msra.mxu0 %v816
    %2505 = vmatprep.subr.mxu0 %v819
    %2506 = vmatpush1.msra.mxu0 %v818
    %2507 = vmatprep.subr.mxu0 %v821
    %2508 = vmatpush1.msra.mxu0 %v820
    %2509 = vmatprep.subr.mxu0 %v823
    %2510 = vmatpush1.msra.mxu0 %v822
    %2511 = vmatprep.subr.mxu0 %v825
    %2512 = vmatpush1.msra.mxu0 %v824
    %2513 = vmatprep.subr.mxu0 %v827
    %2514 = vmatpush1.msra.mxu0 %v826
    %2515 = vmatprep.subr.mxu0 %v829
    %2516 = vmatpush1.msra.mxu0 %v828
    %2517 = vmatprep.subr.mxu0 %v831
    %2518 = vmatpush1.msra.mxu0 %v830
    %2519 = vmatprep.subr.mxu0 %v833
    %2520 = vmatpush1.msra.mxu0 %v832
    %2521 = vmatprep.subr.mxu0 %v835
    %2522 = vmatpush1.msra.mxu0 %v834
    %2523 = vmatprep.subr.mxu0 %v837
    %2524 = vmatpush1.msra.mxu0 %v836
    %2525 = vmatprep.subr.mxu0 %v839
    %2526 = vmatpush1.msra.mxu0 %v838
    %2527 = vmatprep.subr.mxu0 %v841
    %2528 = vmatpush1.msra.mxu0 %v840
    %2529 = vmatprep.subr.mxu0 %v843
    %2530 = vmatpush1.msra.mxu0 %v842
    %2531 = vmatprep.subr.mxu0 %v845
    %2532 = vmatpush1.msra.mxu0 %v844
    %2533 = vmatprep.subr.mxu0 %v847
    %2534 = vmatpush1.msra.mxu0 %v846
    %2535 = vmatprep.subr.mxu0 %v849
    %2536 = vmatpush1.msra.mxu0 %v848
    %2537 = vmatprep.subr.mxu0 %v851
    %2538 = vmatpush1.msra.mxu0 %v850
    %2539 = vmatprep.subr.mxu0 %v853
    %2540 = vmatpush1.msra.mxu0 %v852
    %2541 = vmatprep.subr.mxu0 %v855
    %2542 = vmatpush1.msra.mxu0 %v854
    %2543 = vmatprep.subr.mxu0 %v857
    %2544 = vmatpush1.msra.mxu0 %v856
    %2545 = vmatprep.subr.mxu0 %v859
    %2546 = vmatpush1.msra.mxu0 %v858
    %2547 = vmatprep.subr.mxu0 %v861
    %2548 = vmatpush1.msra.mxu0 %v860
    %2549 = vmatprep.subr.mxu0 %v863
    %2550 = vmatpush1.msra.mxu0 %v862
    %2551 = vmatprep.subr.mxu0 %v865
    %2552 = vmatpush1.msra.mxu0 %v864
    %2553 = vmatprep.subr.mxu0 %v867
    %2554 = vmatpush1.msra.mxu0 %v866
    %2555 = vmatprep.subr.mxu0 %v869
    %2556 = vmatpush1.msra.mxu0 %v868
    %2557 = vmatprep.subr.mxu0 %v871
    %2558 = vmatpush1.msra.mxu0 %v870
    %2559 = vmatprep.subr.mxu0 %v873
    %2560 = vmatpush1.msra.mxu0 %v872
    %2561 = vmatprep.mubr.f32.mxu0 %v79
    %2562 = vmatmul.mubr.f32.gmra.mrb[0].mxu0 %v78
    %v2563 = vpop.f32.mrb[0].mxu0
    %v2564 = vadd.f32 %v2493, %v2563
    %v2565 = vpop.f32.mrb[0].mxu0
    %v2566 = vadd.f32 %v2495, %v2565
    %2567 = vdwg.mxu0
    %2568 = vmatprep.subr.mxu0 %v875
    %2569 = vmatpush1.msra.mxu0 %v874
    %2570 = vmatprep.subr.mxu0 %v877
    %2571 = vmatpush1.msra.mxu0 %v876
    %2572 = vmatprep.subr.mxu0 %v879
    %2573 = vmatpush1.msra.mxu0 %v878
    %2574 = vmatprep.subr.mxu0 %v881
    %2575 = vmatpush1.msra.mxu0 %v880
    %2576 = vmatprep.subr.mxu0 %v883
    %2577 = vmatpush1.msra.mxu0 %v882
    %2578 = vmatprep.subr.mxu0 %v885
    %2579 = vmatpush1.msra.mxu0 %v884
    %2580 = vmatprep.subr.mxu0 %v887
    %2581 = vmatpush1.msra.mxu0 %v886
    %2582 = vmatprep.subr.mxu0 %v889
    %2583 = vmatpush1.msra.mxu0 %v888
    %2584 = vmatprep.subr.mxu0 %v891
    %2585 = vmatpush1.msra.mxu0 %v890
    %2586 = vmatprep.subr.mxu0 %v893
    %2587 = vmatpush1.msra.mxu0 %v892
    %2588 = vmatprep.subr.mxu0 %v895
    %2589 = vmatpush1.msra.mxu0 %v894
    %2590 = vmatprep.subr.mxu0 %v897
    %2591 = vmatpush1.msra.mxu0 %v896
    %2592 = vmatprep.subr.mxu0 %v899
    %2593 = vmatpush1.msra.mxu0 %v898
    %2594 = vmatprep.subr.mxu0 %v901
    %2595 = vmatpush1.msra.mxu0 %v900
    %2596 = vmatprep.subr.mxu0 %v903
    %2597 = vmatpush1.msra.mxu0 %v902
    %2598 = vmatprep.subr.mxu0 %v905
    %2599 = vmatpush1.msra.mxu0 %v904
    %2600 = vmatprep.subr.mxu0 %v907
    %2601 = vmatpush1.msra.mxu0 %v906
    %2602 = vmatprep.subr.mxu0 %v909
    %2603 = vmatpush1.msra.mxu0 %v908
    %2604 = vmatprep.subr.mxu0 %v911
    %2605 = vmatpush1.msra.mxu0 %v910
    %2606 = vmatprep.subr.mxu0 %v913
    %2607 = vmatpush1.msra.mxu0 %v912
    %2608 = vmatprep.subr.mxu0 %v915
    %2609 = vmatpush1.msra.mxu0 %v914
    %2610 = vmatprep.subr.mxu0 %v917
    %2611 = vmatpush1.msra.mxu0 %v916
    %2612 = vmatprep.subr.mxu0 %v919
    %2613 = vmatpush1.msra.mxu0 %v918
    %2614 = vmatprep.subr.mxu0 %v921
    %2615 = vmatpush1.msra.mxu0 %v920
    %2616 = vmatprep.subr.mxu0 %v923
    %2617 = vmatpush1.msra.mxu0 %v922
    %2618 = vmatprep.subr.mxu0 %v925
    %2619 = vmatpush1.msra.mxu0 %v924
    %2620 = vmatprep.subr.mxu0 %v927
    %2621 = vmatpush1.msra.mxu0 %v926
    %2622 = vmatprep.subr.mxu0 %v929
    %2623 = vmatpush1.msra.mxu0 %v928
    %2624 = vmatprep.subr.mxu0 %v931
    %2625 = vmatpush1.msra.mxu0 %v930
    %2626 = vmatprep.subr.mxu0 %v933
    %2627 = vmatpush1.msra.mxu0 %v932
    %2628 = vmatprep.subr.mxu0 %v935
    %2629 = vmatpush1.msra.mxu0 %v934
    %2630 = vmatprep.subr.mxu0 %v937
    %2631 = vmatpush1.msra.mxu0 %v936
    %2632 = vmatprep.mubr.f32.mxu0 %v81
    %2633 = vmatmul.mubr.f32.gmra.mrb[0].mxu0 %v80
    %v2634 = vpop.f32.mrb[0].mxu0
    %v2635 = vadd.f32 %v2564, %v2634
    %v2636 = vpop.f32.mrb[0].mxu0
    %v2637 = vadd.f32 %v2566, %v2636
    %2638 = vdwg.mxu0
    %2639 = vmatprep.subr.mxu0 %v939
    %2640 = vmatpush1.msra.mxu0 %v938
    %2641 = vmatprep.subr.mxu0 %v941
    %2642 = vmatpush1.msra.mxu0 %v940
    %2643 = vmatprep.subr.mxu0 %v943
    %2644 = vmatpush1.msra.mxu0 %v942
    %2645 = vmatprep.subr.mxu0 %v945
    %2646 = vmatpush1.msra.mxu0 %v944
    %2647 = vmatprep.subr.mxu0 %v947
    %2648 = vmatpush1.msra.mxu0 %v946
    %2649 = vmatprep.subr.mxu0 %v949
    %2650 = vmatpush1.msra.mxu0 %v948
    %2651 = vmatprep.subr.mxu0 %v951
    %2652 = vmatpush1.msra.mxu0 %v950
    %2653 = vmatprep.subr.mxu0 %v953
    %2654 = vmatpush1.msra.mxu0 %v952
    %2655 = vmatprep.subr.mxu0 %v955
    %2656 = vmatpush1.msra.mxu0 %v954
    %2657 = vmatprep.subr.mxu0 %v957
    %2658 = vmatpush1.msra.mxu0 %v956
    %2659 = vmatprep.subr.mxu0 %v959
    %2660 = vmatpush1.msra.mxu0 %v958
    %2661 = vmatprep.subr.mxu0 %v961
    %2662 = vmatpush1.msra.mxu0 %v960
    %2663 = vmatprep.subr.mxu0 %v963
    %2664 = vmatpush1.msra.mxu0 %v962
    %2665 = vmatprep.subr.mxu0 %v965
    %2666 = vmatpush1.msra.mxu0 %v964
    %2667 = vmatprep.subr.mxu0 %v967
    %2668 = vmatpush1.msra.mxu0 %v966
    %2669 = vmatprep.subr.mxu0 %v969
    %2670 = vmatpush1.msra.mxu0 %v968
    %2671 = vmatprep.subr.mxu0 %v971
    %2672 = vmatpush1.msra.mxu0 %v970
    %2673 = vmatprep.subr.mxu0 %v973
    %2674 = vmatpush1.msra.mxu0 %v972
    %2675 = vmatprep.subr.mxu0 %v975
    %2676 = vmatpush1.msra.mxu0 %v974
    %2677 = vmatprep.subr.mxu0 %v977
    %2678 = vmatpush1.msra.mxu0 %v976
    %2679 = vmatprep.subr.mxu0 %v979
    %2680 = vmatpush1.msra.mxu0 %v978
    %2681 = vmatprep.subr.mxu0 %v981
    %2682 = vmatpush1.msra.mxu0 %v980
    %2683 = vmatprep.subr.mxu0 %v983
    %2684 = vmatpush1.msra.mxu0 %v982
    %2685 = vmatprep.subr.mxu0 %v985
    %2686 = vmatpush1.msra.mxu0 %v984
    %2687 = vmatprep.subr.mxu0 %v987
    %2688 = vmatpush1.msra.mxu0 %v986
    %2689 = vmatprep.subr.mxu0 %v989
    %2690 = vmatpush1.msra.mxu0 %v988
    %2691 = vmatprep.subr.mxu0 %v991
    %2692 = vmatpush1.msra.mxu0 %v990
    %2693 = vmatprep.subr.mxu0 %v993
    %2694 = vmatpush1.msra.mxu0 %v992
    %2695 = vmatprep.subr.mxu0 %v995
    %2696 = vmatpush1.msra.mxu0 %v994
    %2697 = vmatprep.subr.mxu0 %v997
    %2698 = vmatpush1.msra.mxu0 %v996
    %2699 = vmatprep.subr.mxu0 %v999
    %2700 = vmatpush1.msra.mxu0 %v998
    %2701 = vmatprep.subr.mxu0 %v1001
    %2702 = vmatpush1.msra.mxu0 %v1000
    %2703 = vmatprep.mubr.f32.mxu0 %v83
    %2704 = vmatmul.mubr.f32.gmra.mrb[0].mxu0 %v82
    %v2705 = vpop.f32.mrb[0].mxu0
    %v2706 = vadd.f32 %v2635, %v2705
    %v2707 = vpop.f32.mrb[0].mxu0
    %v2708 = vadd.f32 %v2637, %v2707
    %2709 = vdwg.mxu0
    %2710 = vmatprep.subr.mxu0 %v1003
    %2711 = vmatpush1.msra.mxu0 %v1002
    %2712 = vmatprep.subr.mxu0 %v1005
    %2713 = vmatpush1.msra.mxu0 %v1004
    %2714 = vmatprep.subr.mxu0 %v1007
    %2715 = vmatpush1.msra.mxu0 %v1006
    %2716 = vmatprep.subr.mxu0 %v1009
    %2717 = vmatpush1.msra.mxu0 %v1008
    %2718 = vmatprep.subr.mxu0 %v1011
    %2719 = vmatpush1.msra.mxu0 %v1010
    %2720 = vmatprep.subr.mxu0 %v1013
    %2721 = vmatpush1.msra.mxu0 %v1012
    %2722 = vmatprep.subr.mxu0 %v1015
    %2723 = vmatpush1.msra.mxu0 %v1014
    %2724 = vmatprep.subr.mxu0 %v1017
    %2725 = vmatpush1.msra.mxu0 %v1016
    %2726 = vmatprep.subr.mxu0 %v1019
    %2727 = vmatpush1.msra.mxu0 %v1018
    %2728 = vmatprep.subr.mxu0 %v1021
    %2729 = vmatpush1.msra.mxu0 %v1020
    %2730 = vmatprep.subr.mxu0 %v1023
    %2731 = vmatpush1.msra.mxu0 %v1022
    %2732 = vmatprep.subr.mxu0 %v1025
    %2733 = vmatpush1.msra.mxu0 %v1024
    %2734 = vmatprep.subr.mxu0 %v1027
    %2735 = vmatpush1.msra.mxu0 %v1026
    %2736 = vmatprep.subr.mxu0 %v1029
    %2737 = vmatpush1.msra.mxu0 %v1028
    %2738 = vmatprep.subr.mxu0 %v1031
    %2739 = vmatpush1.msra.mxu0 %v1030
    %2740 = vmatprep.subr.mxu0 %v1033
    %2741 = vmatpush1.msra.mxu0 %v1032
    %2742 = vmatprep.subr.mxu0 %v1035
    %2743 = vmatpush1.msra.mxu0 %v1034
    %2744 = vmatprep.subr.mxu0 %v1037
    %2745 = vmatpush1.msra.mxu0 %v1036
    %2746 = vmatprep.subr.mxu0 %v1039
    %2747 = vmatpush1.msra.mxu0 %v1038
    %2748 = vmatprep.subr.mxu0 %v1041
    %2749 = vmatpush1.msra.mxu0 %v1040
    %2750 = vmatprep.subr.mxu0 %v1043
    %2751 = vmatpush1.msra.mxu0 %v1042
    %2752 = vmatprep.subr.mxu0 %v1045
    %2753 = vmatpush1.msra.mxu0 %v1044
    %2754 = vmatprep.subr.mxu0 %v1047
    %2755 = vmatpush1.msra.mxu0 %v1046
    %2756 = vmatprep.subr.mxu0 %v1049
    %2757 = vmatpush1.msra.mxu0 %v1048
    %2758 = vmatprep.subr.mxu0 %v1051
    %2759 = vmatpush1.msra.mxu0 %v1050
    %2760 = vmatprep.subr.mxu0 %v1053
    %2761 = vmatpush1.msra.mxu0 %v1052
    %2762 = vmatprep.subr.mxu0 %v1055
    %2763 = vmatpush1.msra.mxu0 %v1054
    %2764 = vmatprep.subr.mxu0 %v1057
    %2765 = vmatpush1.msra.mxu0 %v1056
    %2766 = vmatprep.subr.mxu0 %v1059
    %2767 = vmatpush1.msra.mxu0 %v1058
    %2768 = vmatprep.subr.mxu0 %v1061
    %2769 = vmatpush1.msra.mxu0 %v1060
    %2770 = vmatprep.subr.mxu0 %v1063
    %2771 = vmatpush1.msra.mxu0 %v1062
    %2772 = vmatprep.subr.mxu0 %v1065
    %2773 = vmatpush1.msra.mxu0 %v1064
    %2774 = vmatprep.mubr.f32.mxu0 %v85
    %2775 = vmatmul.mubr.f32.gmra.mrb[0].mxu0 %v84
    %v2776 = vpop.f32.mrb[0].mxu0
    %v2777 = vadd.f32 %v2706, %v2776
    %v2778 = vpop.f32.mrb[0].mxu0
    %v2779 = vadd.f32 %v2708, %v2778
    %2780 = vdwg.mxu0
    %2781 = vmatprep.subr.mxu0 %v1067
    %2782 = vmatpush1.msra.mxu0 %v1066
    %2783 = vmatprep.subr.mxu0 %v1069
    %2784 = vmatpush1.msra.mxu0 %v1068
    %2785 = vmatprep.subr.mxu0 %v1071
    %2786 = vmatpush1.msra.mxu0 %v1070
    %2787 = vmatprep.subr.mxu0 %v1073
    %2788 = vmatpush1.msra.mxu0 %v1072
    %2789 = vmatprep.subr.mxu0 %v1075
    %2790 = vmatpush1.msra.mxu0 %v1074
    %2791 = vmatprep.subr.mxu0 %v1077
    %2792 = vmatpush1.msra.mxu0 %v1076
    %2793 = vmatprep.subr.mxu0 %v1079
    %2794 = vmatpush1.msra.mxu0 %v1078
    %2795 = vmatprep.subr.mxu0 %v1081
    %2796 = vmatpush1.msra.mxu0 %v1080
    %2797 = vmatprep.subr.mxu0 %v1083
    %2798 = vmatpush1.msra.mxu0 %v1082
    %2799 = vmatprep.subr.mxu0 %v1085
    %2800 = vmatpush1.msra.mxu0 %v1084
    %2801 = vmatprep.subr.mxu0 %v1087
    %2802 = vmatpush1.msra.mxu0 %v1086
    %2803 = vmatprep.subr.mxu0 %v1089
    %2804 = vmatpush1.msra.mxu0 %v1088
    %2805 = vmatprep.subr.mxu0 %v1091
    %2806 = vmatpush1.msra.mxu0 %v1090
    %2807 = vmatprep.subr.mxu0 %v1093
    %2808 = vmatpush1.msra.mxu0 %v1092
    %2809 = vmatprep.subr.mxu0 %v1095
    %2810 = vmatpush1.msra.mxu0 %v1094
    %2811 = vmatprep.subr.mxu0 %v1097
    %2812 = vmatpush1.msra.mxu0 %v1096
    %2813 = vmatprep.subr.mxu0 %v1099
    %2814 = vmatpush1.msra.mxu0 %v1098
    %2815 = vmatprep.subr.mxu0 %v1101
    %2816 = vmatpush1.msra.mxu0 %v1100
    %2817 = vmatprep.subr.mxu0 %v1103
    %2818 = vmatpush1.msra.mxu0 %v1102
    %2819 = vmatprep.subr.mxu0 %v1105
    %2820 = vmatpush1.msra.mxu0 %v1104
    %2821 = vmatprep.subr.mxu0 %v1107
    %2822 = vmatpush1.msra.mxu0 %v1106
    %2823 = vmatprep.subr.mxu0 %v1109
    %2824 = vmatpush1.msra.mxu0 %v1108
    %2825 = vmatprep.subr.mxu0 %v1111
    %2826 = vmatpush1.msra.mxu0 %v1110
    %2827 = vmatprep.subr.mxu0 %v1113
    %2828 = vmatpush1.msra.mxu0 %v1112
    %2829 = vmatprep.subr.mxu0 %v1115
    %2830 = vmatpush1.msra.mxu0 %v1114
    %2831 = vmatprep.subr.mxu0 %v1117
    %2832 = vmatpush1.msra.mxu0 %v1116
    %2833 = vmatprep.subr.mxu0 %v1119
    %2834 = vmatpush1.msra.mxu0 %v1118
    %2835 = vmatprep.subr.mxu0 %v1121
    %2836 = vmatpush1.msra.mxu0 %v1120
    %2837 = vmatprep.subr.mxu0 %v1123
    %2838 = vmatpush1.msra.mxu0 %v1122
    %2839 = vmatprep.subr.mxu0 %v1125
    %2840 = vmatpush1.msra.mxu0 %v1124
    %2841 = vmatprep.subr.mxu0 %v1127
    %2842 = vmatpush1.msra.mxu0 %v1126
    %2843 = vmatprep.subr.mxu0 %v1129
    %2844 = vmatpush1.msra.mxu0 %v1128
    %2845 = vmatprep.mubr.f32.mxu0 %v87
    %2846 = vmatmul.mubr.f32.gmra.mrb[0].mxu0 %v86
    %v2847 = vpop.f32.mrb[0].mxu0
    %v2848 = vadd.f32 %v2777, %v2847
    %v2849 = vpop.f32.mrb[0].mxu0
    %v2850 = vadd.f32 %v2779, %v2849
    %2851 = vdwg.mxu0
    %2852 = vmatprep.subr.mxu0 %v1131
    %2853 = vmatpush1.msra.mxu0 %v1130
    %2854 = vmatprep.subr.mxu0 %v1133
    %2855 = vmatpush1.msra.mxu0 %v1132
    %2856 = vmatprep.subr.mxu0 %v1135
    %2857 = vmatpush1.msra.mxu0 %v1134
    %2858 = vmatprep.subr.mxu0 %v1137
    %2859 = vmatpush1.msra.mxu0 %v1136
    %2860 = vmatprep.subr.mxu0 %v1139
    %2861 = vmatpush1.msra.mxu0 %v1138
    %2862 = vmatprep.subr.mxu0 %v1141
    %2863 = vmatpush1.msra.mxu0 %v1140
    %2864 = vmatprep.subr.mxu0 %v1143
    %2865 = vmatpush1.msra.mxu0 %v1142
    %2866 = vmatprep.subr.mxu0 %v1145
    %2867 = vmatpush1.msra.mxu0 %v1144
    %2868 = vmatprep.subr.mxu0 %v1147
    %2869 = vmatpush1.msra.mxu0 %v1146
    %2870 = vmatprep.subr.mxu0 %v1149
    %2871 = vmatpush1.msra.mxu0 %v1148
    %2872 = vmatprep.subr.mxu0 %v1151
    %2873 = vmatpush1.msra.mxu0 %v1150
    %2874 = vmatprep.subr.mxu0 %v1153
    %2875 = vmatpush1.msra.mxu0 %v1152
    %2876 = vmatprep.subr.mxu0 %v1155
    %2877 = vmatpush1.msra.mxu0 %v1154
    %2878 = vmatprep.subr.mxu0 %v1157
    %2879 = vmatpush1.msra.mxu0 %v1156
    %2880 = vmatprep.subr.mxu0 %v1159
    %2881 = vmatpush1.msra.mxu0 %v1158
    %2882 = vmatprep.subr.mxu0 %v1161
    %2883 = vmatpush1.msra.mxu0 %v1160
    %2884 = vmatprep.subr.mxu0 %v1163
    %2885 = vmatpush1.msra.mxu0 %v1162
    %2886 = vmatprep.subr.mxu0 %v1165
    %2887 = vmatpush1.msra.mxu0 %v1164
    %2888 = vmatprep.subr.mxu0 %v1167
    %2889 = vmatpush1.msra.mxu0 %v1166
    %2890 = vmatprep.subr.mxu0 %v1169
    %2891 = vmatpush1.msra.mxu0 %v1168
    %2892 = vmatprep.subr.mxu0 %v1171
    %2893 = vmatpush1.msra.mxu0 %v1170
    %2894 = vmatprep.subr.mxu0 %v1173
    %2895 = vmatpush1.msra.mxu0 %v1172
    %2896 = vmatprep.subr.mxu0 %v1175
    %2897 = vmatpush1.msra.mxu0 %v1174
    %2898 = vmatprep.subr.mxu0 %v1177
    %2899 = vmatpush1.msra.mxu0 %v1176
    %2900 = vmatprep.subr.mxu0 %v1179
    %2901 = vmatpush1.msra.mxu0 %v1178
    %2902 = vmatprep.subr.mxu0 %v1181
    %2903 = vmatpush1.msra.mxu0 %v1180
    %2904 = vmatprep.subr.mxu0 %v1183
    %2905 = vmatpush1.msra.mxu0 %v1182
    %2906 = vmatprep.subr.mxu0 %v1185
    %2907 = vmatpush1.msra.mxu0 %v1184
    %2908 = vmatprep.subr.mxu0 %v1187
    %2909 = vmatpush1.msra.mxu0 %v1186
    %2910 = vmatprep.subr.mxu0 %v1189
    %2911 = vmatpush1.msra.mxu0 %v1188
    %2912 = vmatprep.subr.mxu0 %v1191
    %2913 = vmatpush1.msra.mxu0 %v1190
    %2914 = vmatprep.subr.mxu0 %v1193
    %2915 = vmatpush1.msra.mxu0 %v1192
    %2916 = vmatprep.mubr.f32.mxu0 %v89
    %2917 = vmatmul.mubr.f32.gmra.mrb[0].mxu0 %v88
    %v2918 = vpop.f32.mrb[0].mxu0
    %v2919 = vadd.f32 %v2848, %v2918
    %v2920 = vpop.f32.mrb[0].mxu0
    %v2921 = vadd.f32 %v2850, %v2920
    %2922 = vdwg.mxu0
    %2923 = vmatprep.subr.mxu0 %v1195
    %2924 = vmatpush1.msra.mxu0 %v1194
    %2925 = vmatprep.subr.mxu0 %v1197
    %2926 = vmatpush1.msra.mxu0 %v1196
    %2927 = vmatprep.subr.mxu0 %v1199
    %2928 = vmatpush1.msra.mxu0 %v1198
    %2929 = vmatprep.subr.mxu0 %v1201
    %2930 = vmatpush1.msra.mxu0 %v1200
    %2931 = vmatprep.subr.mxu0 %v1203
    %2932 = vmatpush1.msra.mxu0 %v1202
    %2933 = vmatprep.subr.mxu0 %v1205
    %2934 = vmatpush1.msra.mxu0 %v1204
    %2935 = vmatprep.subr.mxu0 %v1207
    %2936 = vmatpush1.msra.mxu0 %v1206
    %2937 = vmatprep.subr.mxu0 %v1209
    %2938 = vmatpush1.msra.mxu0 %v1208
    %2939 = vmatprep.subr.mxu0 %v1211
    %2940 = vmatpush1.msra.mxu0 %v1210
    %2941 = vmatprep.subr.mxu0 %v1213
    %2942 = vmatpush1.msra.mxu0 %v1212
    %2943 = vmatprep.subr.mxu0 %v1215
    %2944 = vmatpush1.msra.mxu0 %v1214
    %2945 = vmatprep.subr.mxu0 %v1217
    %2946 = vmatpush1.msra.mxu0 %v1216
    %2947 = vmatprep.subr.mxu0 %v1219
    %2948 = vmatpush1.msra.mxu0 %v1218
    %2949 = vmatprep.subr.mxu0 %v1221
    %2950 = vmatpush1.msra.mxu0 %v1220
    %2951 = vmatprep.subr.mxu0 %v1223
    %2952 = vmatpush1.msra.mxu0 %v1222
    %2953 = vmatprep.subr.mxu0 %v1225
    %2954 = vmatpush1.msra.mxu0 %v1224
    %2955 = vmatprep.subr.mxu0 %v1227
    %2956 = vmatpush1.msra.mxu0 %v1226
    %2957 = vmatprep.subr.mxu0 %v1229
    %2958 = vmatpush1.msra.mxu0 %v1228
    %2959 = vmatprep.subr.mxu0 %v1231
    %2960 = vmatpush1.msra.mxu0 %v1230
    %2961 = vmatprep.subr.mxu0 %v1233
    %2962 = vmatpush1.msra.mxu0 %v1232
    %2963 = vmatprep.subr.mxu0 %v1235
    %2964 = vmatpush1.msra.mxu0 %v1234
    %2965 = vmatprep.subr.mxu0 %v1237
    %2966 = vmatpush1.msra.mxu0 %v1236
    %2967 = vmatprep.subr.mxu0 %v1239
    %2968 = vmatpush1.msra.mxu0 %v1238
    %2969 = vmatprep.subr.mxu0 %v1241
    %2970 = vmatpush1.msra.mxu0 %v1240
    %2971 = vmatprep.subr.mxu0 %v1243
    %2972 = vmatpush1.msra.mxu0 %v1242
    %2973 = vmatprep.subr.mxu0 %v1245
    %2974 = vmatpush1.msra.mxu0 %v1244
    %2975 = vmatprep.subr.mxu0 %v1247
    %2976 = vmatpush1.msra.mxu0 %v1246
    %2977 = vmatprep.subr.mxu0 %v1249
    %2978 = vmatpush1.msra.mxu0 %v1248
    %2979 = vmatprep.subr.mxu0 %v1251
    %2980 = vmatpush1.msra.mxu0 %v1250
    %2981 = vmatprep.subr.mxu0 %v1253
    %2982 = vmatpush1.msra.mxu0 %v1252
    %2983 = vmatprep.subr.mxu0 %v1255
    %2984 = vmatpush1.msra.mxu0 %v1254
    %2985 = vmatprep.subr.mxu0 %v1257
    %2986 = vmatpush1.msra.mxu0 %v1256
    %2987 = vmatprep.mubr.f32.mxu0 %v91
    %2988 = vmatmul.mubr.f32.gmra.mrb[0].mxu0 %v90
    %v2989 = vpop.f32.mrb[0].mxu0
    %v2990 = vadd.f32 %v2919, %v2989
    %v2991 = vpop.f32.mrb[0].mxu0
    %v2992 = vadd.f32 %v2921, %v2991
    %2993 = vdwg.mxu0
    %2994 = vmatprep.subr.mxu0 %v1259
    %2995 = vmatpush1.msra.mxu0 %v1258
    %2996 = vmatprep.subr.mxu0 %v1261
    %2997 = vmatpush1.msra.mxu0 %v1260
    %2998 = vmatprep.subr.mxu0 %v1263
    %2999 = vmatpush1.msra.mxu0 %v1262
    %3000 = vmatprep.subr.mxu0 %v1265
    %3001 = vmatpush1.msra.mxu0 %v1264
    %3002 = vmatprep.subr.mxu0 %v1267
    %3003 = vmatpush1.msra.mxu0 %v1266
    %3004 = vmatprep.subr.mxu0 %v1269
    %3005 = vmatpush1.msra.mxu0 %v1268
    %3006 = vmatprep.subr.mxu0 %v1271
    %3007 = vmatpush1.msra.mxu0 %v1270
    %3008 = vmatprep.subr.mxu0 %v1273
    %3009 = vmatpush1.msra.mxu0 %v1272
    %3010 = vmatprep.subr.mxu0 %v1275
    %3011 = vmatpush1.msra.mxu0 %v1274
    %3012 = vmatprep.subr.mxu0 %v1277
    %3013 = vmatpush1.msra.mxu0 %v1276
    %3014 = vmatprep.subr.mxu0 %v1279
    %3015 = vmatpush1.msra.mxu0 %v1278
    %3016 = vmatprep.subr.mxu0 %v1281
    %3017 = vmatpush1.msra.mxu0 %v1280
    %3018 = vmatprep.subr.mxu0 %v1283
    %3019 = vmatpush1.msra.mxu0 %v1282
    %3020 = vmatprep.subr.mxu0 %v1285
    %3021 = vmatpush1.msra.mxu0 %v1284
    %3022 = vmatprep.subr.mxu0 %v1287
    %3023 = vmatpush1.msra.mxu0 %v1286
    %3024 = vmatprep.subr.mxu0 %v1289
    %3025 = vmatpush1.msra.mxu0 %v1288
    %3026 = vmatprep.subr.mxu0 %v1291
    %3027 = vmatpush1.msra.mxu0 %v1290
    %3028 = vmatprep.subr.mxu0 %v1293
    %3029 = vmatpush1.msra.mxu0 %v1292
    %3030 = vmatprep.subr.mxu0 %v1295
    %3031 = vmatpush1.msra.mxu0 %v1294
    %3032 = vmatprep.subr.mxu0 %v1297
    %3033 = vmatpush1.msra.mxu0 %v1296
    %3034 = vmatprep.subr.mxu0 %v1299
    %3035 = vmatpush1.msra.mxu0 %v1298
    %3036 = vmatprep.subr.mxu0 %v1301
    %3037 = vmatpush1.msra.mxu0 %v1300
    %3038 = vmatprep.subr.mxu0 %v1303
    %3039 = vmatpush1.msra.mxu0 %v1302
    %3040 = vmatprep.subr.mxu0 %v1305
    %3041 = vmatpush1.msra.mxu0 %v1304
    %3042 = vmatprep.subr.mxu0 %v1307
    %3043 = vmatpush1.msra.mxu0 %v1306
    %3044 = vmatprep.subr.mxu0 %v1309
    %3045 = vmatpush1.msra.mxu0 %v1308
    %3046 = vmatprep.subr.mxu0 %v1311
    %3047 = vmatpush1.msra.mxu0 %v1310
    %3048 = vmatprep.subr.mxu0 %v1313
    %3049 = vmatpush1.msra.mxu0 %v1312
    %3050 = vmatprep.subr.mxu0 %v1315
    %3051 = vmatpush1.msra.mxu0 %v1314
    %3052 = vmatprep.subr.mxu0 %v1317
    %3053 = vmatpush1.msra.mxu0 %v1316
    %3054 = vmatprep.subr.mxu0 %v1319
    %3055 = vmatpush1.msra.mxu0 %v1318
    %3056 = vmatprep.subr.mxu0 %v1321
    %3057 = vmatpush1.msra.mxu0 %v1320
    %3058 = vmatprep.mubr.f32.mxu0 %v93
    %3059 = vmatmul.mubr.f32.gmra.mrb[0].mxu0 %v92
    %v3060 = vpop.f32.mrb[0].mxu0
    %v3061 = vadd.f32 %v2990, %v3060
    %v3062 = vpop.f32.mrb[0].mxu0
    %v3063 = vadd.f32 %v2992, %v3062
    %3064 = vdwg.mxu0
    %3065 = vmatprep.subr.mxu0 %v1323
    %3066 = vmatpush1.msra.mxu0 %v1322
    %3067 = vmatprep.subr.mxu0 %v1325
    %3068 = vmatpush1.msra.mxu0 %v1324
    %3069 = vmatprep.subr.mxu0 %v1327
    %3070 = vmatpush1.msra.mxu0 %v1326
    %3071 = vmatprep.subr.mxu0 %v1329
    %3072 = vmatpush1.msra.mxu0 %v1328
    %3073 = vmatprep.subr.mxu0 %v1331
    %3074 = vmatpush1.msra.mxu0 %v1330
    %3075 = vmatprep.subr.mxu0 %v1333
    %3076 = vmatpush1.msra.mxu0 %v1332
    %3077 = vmatprep.subr.mxu0 %v1335
    %3078 = vmatpush1.msra.mxu0 %v1334
    %3079 = vmatprep.subr.mxu0 %v1337
    %3080 = vmatpush1.msra.mxu0 %v1336
    %3081 = vmatprep.subr.mxu0 %v1339
    %3082 = vmatpush1.msra.mxu0 %v1338
    %3083 = vmatprep.subr.mxu0 %v1341
    %3084 = vmatpush1.msra.mxu0 %v1340
    %3085 = vmatprep.subr.mxu0 %v1343
    %3086 = vmatpush1.msra.mxu0 %v1342
    %3087 = vmatprep.subr.mxu0 %v1345
    %3088 = vmatpush1.msra.mxu0 %v1344
    %3089 = vmatprep.subr.mxu0 %v1347
    %3090 = vmatpush1.msra.mxu0 %v1346
    %3091 = vmatprep.subr.mxu0 %v1349
    %3092 = vmatpush1.msra.mxu0 %v1348
    %3093 = vmatprep.subr.mxu0 %v1351
    %3094 = vmatpush1.msra.mxu0 %v1350
    %3095 = vmatprep.subr.mxu0 %v1353
    %3096 = vmatpush1.msra.mxu0 %v1352
    %3097 = vmatprep.subr.mxu0 %v1355
    %3098 = vmatpush1.msra.mxu0 %v1354
    %3099 = vmatprep.subr.mxu0 %v1357
    %3100 = vmatpush1.msra.mxu0 %v1356
    %3101 = vmatprep.subr.mxu0 %v1359
    %3102 = vmatpush1.msra.mxu0 %v1358
    %3103 = vmatprep.subr.mxu0 %v1361
    %3104 = vmatpush1.msra.mxu0 %v1360
    %3105 = vmatprep.subr.mxu0 %v1363
    %3106 = vmatpush1.msra.mxu0 %v1362
    %3107 = vmatprep.subr.mxu0 %v1365
    %3108 = vmatpush1.msra.mxu0 %v1364
    %3109 = vmatprep.subr.mxu0 %v1367
    %3110 = vmatpush1.msra.mxu0 %v1366
    %3111 = vmatprep.subr.mxu0 %v1369
    %3112 = vmatpush1.msra.mxu0 %v1368
    %3113 = vmatprep.subr.mxu0 %v1371
    %3114 = vmatpush1.msra.mxu0 %v1370
    %3115 = vmatprep.subr.mxu0 %v1373
    %3116 = vmatpush1.msra.mxu0 %v1372
    %3117 = vmatprep.subr.mxu0 %v1375
    %3118 = vmatpush1.msra.mxu0 %v1374
    %3119 = vmatprep.subr.mxu0 %v1377
    %3120 = vmatpush1.msra.mxu0 %v1376
    %3121 = vmatprep.subr.mxu0 %v1379
    %3122 = vmatpush1.msra.mxu0 %v1378
    %3123 = vmatprep.subr.mxu0 %v1381
    %3124 = vmatpush1.msra.mxu0 %v1380
    %3125 = vmatprep.subr.mxu0 %v1383
    %3126 = vmatpush1.msra.mxu0 %v1382
    %3127 = vmatprep.subr.mxu0 %v1385
    %3128 = vmatpush1.msra.mxu0 %v1384
    %3129 = vmatprep.mubr.f32.mxu0 %v95
    %3130 = vmatmul.mubr.f32.gmra.mrb[0].mxu0 %v94
    %v3131 = vpop.f32.mrb[0].mxu0
    %v3132 = vadd.f32 %v3061, %v3131
    %v3133 = vpop.f32.mrb[0].mxu0
    %v3134 = vadd.f32 %v3063, %v3133
    %3135 = vdwg.mxu0
    %3136 = vmatprep.subr.mxu0 %v1387
    %3137 = vmatpush1.msra.mxu0 %v1386
    %3138 = vmatprep.subr.mxu0 %v1389
    %3139 = vmatpush1.msra.mxu0 %v1388
    %3140 = vmatprep.subr.mxu0 %v1391
    %3141 = vmatpush1.msra.mxu0 %v1390
    %3142 = vmatprep.subr.mxu0 %v1393
    %3143 = vmatpush1.msra.mxu0 %v1392
    %3144 = vmatprep.subr.mxu0 %v1395
    %3145 = vmatpush1.msra.mxu0 %v1394
    %3146 = vmatprep.subr.mxu0 %v1397
    %3147 = vmatpush1.msra.mxu0 %v1396
    %3148 = vmatprep.subr.mxu0 %v1399
    %3149 = vmatpush1.msra.mxu0 %v1398
    %3150 = vmatprep.subr.mxu0 %v1401
    %3151 = vmatpush1.msra.mxu0 %v1400
    %3152 = vmatprep.subr.mxu0 %v1403
    %3153 = vmatpush1.msra.mxu0 %v1402
    %3154 = vmatprep.subr.mxu0 %v1405
    %3155 = vmatpush1.msra.mxu0 %v1404
    %3156 = vmatprep.subr.mxu0 %v1407
    %3157 = vmatpush1.msra.mxu0 %v1406
    %3158 = vmatprep.subr.mxu0 %v1409
    %3159 = vmatpush1.msra.mxu0 %v1408
    %3160 = vmatprep.subr.mxu0 %v1411
    %3161 = vmatpush1.msra.mxu0 %v1410
    %3162 = vmatprep.subr.mxu0 %v1413
    %3163 = vmatpush1.msra.mxu0 %v1412
    %3164 = vmatprep.subr.mxu0 %v1415
    %3165 = vmatpush1.msra.mxu0 %v1414
    %3166 = vmatprep.subr.mxu0 %v1417
    %3167 = vmatpush1.msra.mxu0 %v1416
    %3168 = vmatprep.subr.mxu0 %v1419
    %3169 = vmatpush1.msra.mxu0 %v1418
    %3170 = vmatprep.subr.mxu0 %v1421
    %3171 = vmatpush1.msra.mxu0 %v1420
    %3172 = vmatprep.subr.mxu0 %v1423
    %3173 = vmatpush1.msra.mxu0 %v1422
    %3174 = vmatprep.subr.mxu0 %v1425
    %3175 = vmatpush1.msra.mxu0 %v1424
    %3176 = vmatprep.subr.mxu0 %v1427
    %3177 = vmatpush1.msra.mxu0 %v1426
    %3178 = vmatprep.subr.mxu0 %v1429
    %3179 = vmatpush1.msra.mxu0 %v1428
    %3180 = vmatprep.subr.mxu0 %v1431
    %3181 = vmatpush1.msra.mxu0 %v1430
    %3182 = vmatprep.subr.mxu0 %v1433
    %3183 = vmatpush1.msra.mxu0 %v1432
    %3184 = vmatprep.subr.mxu0 %v1435
    %3185 = vmatpush1.msra.mxu0 %v1434
    %3186 = vmatprep.subr.mxu0 %v1437
    %3187 = vmatpush1.msra.mxu0 %v1436
    %3188 = vmatprep.subr.mxu0 %v1439
    %3189 = vmatpush1.msra.mxu0 %v1438
    %3190 = vmatprep.subr.mxu0 %v1441
    %3191 = vmatpush1.msra.mxu0 %v1440
    %3192 = vmatprep.subr.mxu0 %v1443
    %3193 = vmatpush1.msra.mxu0 %v1442
    %3194 = vmatprep.subr.mxu0 %v1445
    %3195 = vmatpush1.msra.mxu0 %v1444
    %3196 = vmatprep.subr.mxu0 %v1447
    %3197 = vmatpush1.msra.mxu0 %v1446
    %3198 = vmatprep.subr.mxu0 %v1449
    %3199 = vmatpush1.msra.mxu0 %v1448
    %3200 = vmatprep.mubr.f32.mxu0 %v97
    %3201 = vmatmul.mubr.f32.gmra.mrb[0].mxu0 %v96
    %v3202 = vpop.f32.mrb[0].mxu0
    %v3203 = vadd.f32 %v3132, %v3202
    %v3204 = vpop.f32.mrb[0].mxu0
    %v3205 = vadd.f32 %v3134, %v3204
    %3206 = vdwg.mxu0
    %3207 = vmatprep.subr.mxu0 %v1451
    %3208 = vmatpush1.msra.mxu0 %v1450
    %3209 = vmatprep.subr.mxu0 %v1453
    %3210 = vmatpush1.msra.mxu0 %v1452
    %3211 = vmatprep.subr.mxu0 %v1455
    %3212 = vmatpush1.msra.mxu0 %v1454
    %3213 = vmatprep.subr.mxu0 %v1457
    %3214 = vmatpush1.msra.mxu0 %v1456
    %3215 = vmatprep.subr.mxu0 %v1459
    %3216 = vmatpush1.msra.mxu0 %v1458
    %3217 = vmatprep.subr.mxu0 %v1461
    %3218 = vmatpush1.msra.mxu0 %v1460
    %3219 = vmatprep.subr.mxu0 %v1463
    %3220 = vmatpush1.msra.mxu0 %v1462
    %3221 = vmatprep.subr.mxu0 %v1465
    %3222 = vmatpush1.msra.mxu0 %v1464
    %3223 = vmatprep.subr.mxu0 %v1467
    %3224 = vmatpush1.msra.mxu0 %v1466
    %3225 = vmatprep.subr.mxu0 %v1469
    %3226 = vmatpush1.msra.mxu0 %v1468
    %3227 = vmatprep.subr.mxu0 %v1471
    %3228 = vmatpush1.msra.mxu0 %v1470
    %3229 = vmatprep.subr.mxu0 %v1473
    %3230 = vmatpush1.msra.mxu0 %v1472
    %3231 = vmatprep.subr.mxu0 %v1475
    %3232 = vmatpush1.msra.mxu0 %v1474
    %3233 = vmatprep.subr.mxu0 %v1477
    %3234 = vmatpush1.msra.mxu0 %v1476
    %3235 = vmatprep.subr.mxu0 %v1479
    %3236 = vmatpush1.msra.mxu0 %v1478
    %3237 = vmatprep.subr.mxu0 %v1481
    %3238 = vmatpush1.msra.mxu0 %v1480
    %3239 = vmatprep.subr.mxu0 %v1483
    %3240 = vmatpush1.msra.mxu0 %v1482
    %3241 = vmatprep.subr.mxu0 %v1485
    %3242 = vmatpush1.msra.mxu0 %v1484
    %3243 = vmatprep.subr.mxu0 %v1487
    %3244 = vmatpush1.msra.mxu0 %v1486
    %3245 = vmatprep.subr.mxu0 %v1489
    %3246 = vmatpush1.msra.mxu0 %v1488
    %3247 = vmatprep.subr.mxu0 %v1491
    %3248 = vmatpush1.msra.mxu0 %v1490
    %3249 = vmatprep.subr.mxu0 %v1493
    %3250 = vmatpush1.msra.mxu0 %v1492
    %3251 = vmatprep.subr.mxu0 %v1495
    %3252 = vmatpush1.msra.mxu0 %v1494
    %3253 = vmatprep.subr.mxu0 %v1497
    %3254 = vmatpush1.msra.mxu0 %v1496
    %3255 = vmatprep.subr.mxu0 %v1499
    %3256 = vmatpush1.msra.mxu0 %v1498
    %3257 = vmatprep.subr.mxu0 %v1501
    %3258 = vmatpush1.msra.mxu0 %v1500
    %3259 = vmatprep.subr.mxu0 %v1503
    %3260 = vmatpush1.msra.mxu0 %v1502
    %3261 = vmatprep.subr.mxu0 %v1505
    %3262 = vmatpush1.msra.mxu0 %v1504
    %3263 = vmatprep.subr.mxu0 %v1507
    %3264 = vmatpush1.msra.mxu0 %v1506
    %3265 = vmatprep.subr.mxu0 %v1509
    %3266 = vmatpush1.msra.mxu0 %v1508
    %3267 = vmatprep.subr.mxu0 %v1511
    %3268 = vmatpush1.msra.mxu0 %v1510
    %3269 = vmatprep.subr.mxu0 %v1513
    %3270 = vmatpush1.msra.mxu0 %v1512
    %3271 = vmatprep.mubr.f32.mxu0 %v99
    %3272 = vmatmul.mubr.f32.gmra.mrb[0].mxu0 %v98
    %v3273 = vpop.f32.mrb[0].mxu0
    %v3274 = vadd.f32 %v3203, %v3273
    %v3275 = vpop.f32.mrb[0].mxu0
    %v3276 = vadd.f32 %v3205, %v3275
    %3277 = vdwg.mxu0
    %3278 = vmatprep.subr.mxu0 %v1515
    %3279 = vmatpush1.msra.mxu0 %v1514
    %3280 = vmatprep.subr.mxu0 %v1517
    %3281 = vmatpush1.msra.mxu0 %v1516
    %3282 = vmatprep.subr.mxu0 %v1519
    %3283 = vmatpush1.msra.mxu0 %v1518
    %3284 = vmatprep.subr.mxu0 %v1521
    %3285 = vmatpush1.msra.mxu0 %v1520
    %3286 = vmatprep.subr.mxu0 %v1523
    %3287 = vmatpush1.msra.mxu0 %v1522
    %3288 = vmatprep.subr.mxu0 %v1525
    %3289 = vmatpush1.msra.mxu0 %v1524
    %3290 = vmatprep.subr.mxu0 %v1527
    %3291 = vmatpush1.msra.mxu0 %v1526
    %3292 = vmatprep.subr.mxu0 %v1529
    %3293 = vmatpush1.msra.mxu0 %v1528
    %3294 = vmatprep.subr.mxu0 %v1531
    %3295 = vmatpush1.msra.mxu0 %v1530
    %3296 = vmatprep.subr.mxu0 %v1533
    %3297 = vmatpush1.msra.mxu0 %v1532
    %3298 = vmatprep.subr.mxu0 %v1535
    %3299 = vmatpush1.msra.mxu0 %v1534
    %3300 = vmatprep.subr.mxu0 %v1537
    %3301 = vmatpush1.msra.mxu0 %v1536
    %3302 = vmatprep.subr.mxu0 %v1539
    %3303 = vmatpush1.msra.mxu0 %v1538
    %3304 = vmatprep.subr.mxu0 %v1541
    %3305 = vmatpush1.msra.mxu0 %v1540
    %3306 = vmatprep.subr.mxu0 %v1543
    %3307 = vmatpush1.msra.mxu0 %v1542
    %3308 = vmatprep.subr.mxu0 %v1545
    %3309 = vmatpush1.msra.mxu0 %v1544
    %3310 = vmatprep.subr.mxu0 %v1547
    %3311 = vmatpush1.msra.mxu0 %v1546
    %3312 = vmatprep.subr.mxu0 %v1549
    %3313 = vmatpush1.msra.mxu0 %v1548
    %3314 = vmatprep.subr.mxu0 %v1551
    %3315 = vmatpush1.msra.mxu0 %v1550
    %3316 = vmatprep.subr.mxu0 %v1553
    %3317 = vmatpush1.msra.mxu0 %v1552
    %3318 = vmatprep.subr.mxu0 %v1555
    %3319 = vmatpush1.msra.mxu0 %v1554
    %3320 = vmatprep.subr.mxu0 %v1557
    %3321 = vmatpush1.msra.mxu0 %v1556
    %3322 = vmatprep.subr.mxu0 %v1559
    %3323 = vmatpush1.msra.mxu0 %v1558
    %3324 = vmatprep.subr.mxu0 %v1561
    %3325 = vmatpush1.msra.mxu0 %v1560
    %3326 = vmatprep.subr.mxu0 %v1563
    %3327 = vmatpush1.msra.mxu0 %v1562
    %3328 = vmatprep.subr.mxu0 %v1565
    %3329 = vmatpush1.msra.mxu0 %v1564
    %3330 = vmatprep.subr.mxu0 %v1567
    %3331 = vmatpush1.msra.mxu0 %v1566
    %3332 = vmatprep.subr.mxu0 %v1569
    %3333 = vmatpush1.msra.mxu0 %v1568
    %3334 = vmatprep.subr.mxu0 %v1571
    %3335 = vmatpush1.msra.mxu0 %v1570
    %3336 = vmatprep.subr.mxu0 %v1573
    %3337 = vmatpush1.msra.mxu0 %v1572
    %3338 = vmatprep.subr.mxu0 %v1575
    %3339 = vmatpush1.msra.mxu0 %v1574
    %3340 = vmatprep.subr.mxu0 %v1577
    %3341 = vmatpush1.msra.mxu0 %v1576
    %3342 = vmatprep.mubr.f32.mxu0 %v101
    %3343 = vmatmul.mubr.f32.gmra.mrb[0].mxu0 %v100
    %v3344 = vpop.f32.mrb[0].mxu0
    %v3345 = vadd.f32 %v3274, %v3344
    %v3346 = vpop.f32.mrb[0].mxu0
    %v3347 = vadd.f32 %v3276, %v3346
    %3348 = vdwg.mxu0
    %3349 = vmatprep.subr.mxu0 %v1579
    %3350 = vmatpush1.msra.mxu0 %v1578
    %3351 = vmatprep.subr.mxu0 %v1581
    %3352 = vmatpush1.msra.mxu0 %v1580
    %3353 = vmatprep.subr.mxu0 %v1583
    %3354 = vmatpush1.msra.mxu0 %v1582
    %3355 = vmatprep.subr.mxu0 %v1585
    %3356 = vmatpush1.msra.mxu0 %v1584
    %3357 = vmatprep.subr.mxu0 %v1587
    %3358 = vmatpush1.msra.mxu0 %v1586
    %3359 = vmatprep.subr.mxu0 %v1589
    %3360 = vmatpush1.msra.mxu0 %v1588
    %3361 = vmatprep.subr.mxu0 %v1591
    %3362 = vmatpush1.msra.mxu0 %v1590
    %3363 = vmatprep.subr.mxu0 %v1593
    %3364 = vmatpush1.msra.mxu0 %v1592
    %3365 = vmatprep.subr.mxu0 %v1595
    %3366 = vmatpush1.msra.mxu0 %v1594
    %3367 = vmatprep.subr.mxu0 %v1597
    %3368 = vmatpush1.msra.mxu0 %v1596
    %3369 = vmatprep.subr.mxu0 %v1599
    %3370 = vmatpush1.msra.mxu0 %v1598
    %3371 = vmatprep.subr.mxu0 %v1601
    %3372 = vmatpush1.msra.mxu0 %v1600
    %3373 = vmatprep.subr.mxu0 %v1603
    %3374 = vmatpush1.msra.mxu0 %v1602
    %3375 = vmatprep.subr.mxu0 %v1605
    %3376 = vmatpush1.msra.mxu0 %v1604
    %3377 = vmatprep.subr.mxu0 %v1607
    %3378 = vmatpush1.msra.mxu0 %v1606
    %3379 = vmatprep.subr.mxu0 %v1609
    %3380 = vmatpush1.msra.mxu0 %v1608
    %3381 = vmatprep.subr.mxu0 %v1611
    %3382 = vmatpush1.msra.mxu0 %v1610
    %3383 = vmatprep.subr.mxu0 %v1613
    %3384 = vmatpush1.msra.mxu0 %v1612
    %3385 = vmatprep.subr.mxu0 %v1615
    %3386 = vmatpush1.msra.mxu0 %v1614
    %3387 = vmatprep.subr.mxu0 %v1617
    %3388 = vmatpush1.msra.mxu0 %v1616
    %3389 = vmatprep.subr.mxu0 %v1619
    %3390 = vmatpush1.msra.mxu0 %v1618
    %3391 = vmatprep.subr.mxu0 %v1621
    %3392 = vmatpush1.msra.mxu0 %v1620
    %3393 = vmatprep.subr.mxu0 %v1623
    %3394 = vmatpush1.msra.mxu0 %v1622
    %3395 = vmatprep.subr.mxu0 %v1625
    %3396 = vmatpush1.msra.mxu0 %v1624
    %3397 = vmatprep.subr.mxu0 %v1627
    %3398 = vmatpush1.msra.mxu0 %v1626
    %3399 = vmatprep.subr.mxu0 %v1629
    %3400 = vmatpush1.msra.mxu0 %v1628
    %3401 = vmatprep.subr.mxu0 %v1631
    %3402 = vmatpush1.msra.mxu0 %v1630
    %3403 = vmatprep.subr.mxu0 %v1633
    %3404 = vmatpush1.msra.mxu0 %v1632
    %3405 = vmatprep.subr.mxu0 %v1635
    %3406 = vmatpush1.msra.mxu0 %v1634
    %3407 = vmatprep.subr.mxu0 %v1637
    %3408 = vmatpush1.msra.mxu0 %v1636
    %3409 = vmatprep.subr.mxu0 %v1639
    %3410 = vmatpush1.msra.mxu0 %v1638
    %3411 = vmatprep.subr.mxu0 %v1641
    %3412 = vmatpush1.msra.mxu0 %v1640
    %3413 = vmatprep.mubr.f32.mxu0 %v103
    %3414 = vmatmul.mubr.f32.gmra.mrb[0].mxu0 %v102
    %v3415 = vpop.f32.mrb[0].mxu0
    %v3416 = vadd.f32 %v3345, %v3415
    %v3417 = vpop.f32.mrb[0].mxu0
    %v3418 = vadd.f32 %v3347, %v3417
    %3419 = vdwg.mxu0
    %3420 = vmatprep.subr.mxu0 %v1643
    %3421 = vmatpush1.msra.mxu0 %v1642
    %3422 = vmatprep.subr.mxu0 %v1645
    %3423 = vmatpush1.msra.mxu0 %v1644
    %3424 = vmatprep.subr.mxu0 %v1647
    %3425 = vmatpush1.msra.mxu0 %v1646
    %3426 = vmatprep.subr.mxu0 %v1649
    %3427 = vmatpush1.msra.mxu0 %v1648
    %3428 = vmatprep.subr.mxu0 %v1651
    %3429 = vmatpush1.msra.mxu0 %v1650
    %3430 = vmatprep.subr.mxu0 %v1653
    %3431 = vmatpush1.msra.mxu0 %v1652
    %3432 = vmatprep.subr.mxu0 %v1655
    %3433 = vmatpush1.msra.mxu0 %v1654
    %3434 = vmatprep.subr.mxu0 %v1657
    %3435 = vmatpush1.msra.mxu0 %v1656
    %3436 = vmatprep.subr.mxu0 %v1659
    %3437 = vmatpush1.msra.mxu0 %v1658
    %3438 = vmatprep.subr.mxu0 %v1661
    %3439 = vmatpush1.msra.mxu0 %v1660
    %3440 = vmatprep.subr.mxu0 %v1663
    %3441 = vmatpush1.msra.mxu0 %v1662
    %3442 = vmatprep.subr.mxu0 %v1665
    %3443 = vmatpush1.msra.mxu0 %v1664
    %3444 = vmatprep.subr.mxu0 %v1667
    %3445 = vmatpush1.msra.mxu0 %v1666
    %3446 = vmatprep.subr.mxu0 %v1669
    %3447 = vmatpush1.msra.mxu0 %v1668
    %3448 = vmatprep.subr.mxu0 %v1671
    %3449 = vmatpush1.msra.mxu0 %v1670
    %3450 = vmatprep.subr.mxu0 %v1673
    %3451 = vmatpush1.msra.mxu0 %v1672
    %3452 = vmatprep.subr.mxu0 %v1675
    %3453 = vmatpush1.msra.mxu0 %v1674
    %3454 = vmatprep.subr.mxu0 %v1677
    %3455 = vmatpush1.msra.mxu0 %v1676
    %3456 = vmatprep.subr.mxu0 %v1679
    %3457 = vmatpush1.msra.mxu0 %v1678
    %3458 = vmatprep.subr.mxu0 %v1681
    %3459 = vmatpush1.msra.mxu0 %v1680
    %3460 = vmatprep.subr.mxu0 %v1683
    %3461 = vmatpush1.msra.mxu0 %v1682
    %3462 = vmatprep.subr.mxu0 %v1685
    %3463 = vmatpush1.msra.mxu0 %v1684
    %3464 = vmatprep.subr.mxu0 %v1687
    %3465 = vmatpush1.msra.mxu0 %v1686
    %3466 = vmatprep.subr.mxu0 %v1689
    %3467 = vmatpush1.msra.mxu0 %v1688
    %3468 = vmatprep.subr.mxu0 %v1691
    %3469 = vmatpush1.msra.mxu0 %v1690
    %3470 = vmatprep.subr.mxu0 %v1693
    %3471 = vmatpush1.msra.mxu0 %v1692
    %3472 = vmatprep.subr.mxu0 %v1695
    %3473 = vmatpush1.msra.mxu0 %v1694
    %3474 = vmatprep.subr.mxu0 %v1697
    %3475 = vmatpush1.msra.mxu0 %v1696
    %3476 = vmatprep.subr.mxu0 %v1699
    %3477 = vmatpush1.msra.mxu0 %v1698
    %3478 = vmatprep.subr.mxu0 %v1701
    %3479 = vmatpush1.msra.mxu0 %v1700
    %3480 = vmatprep.subr.mxu0 %v1703
    %3481 = vmatpush1.msra.mxu0 %v1702
    %3482 = vmatprep.subr.mxu0 %v1705
    %3483 = vmatpush1.msra.mxu0 %v1704
    %3484 = vmatprep.mubr.f32.mxu0 %v105
    %3485 = vmatmul.mubr.f32.gmra.mrb[0].mxu0 %v104
    %v3486 = vpop.f32.mrb[0].mxu0
    %v3487 = vadd.f32 %v3416, %v3486
    %v3488 = vpop.f32.mrb[0].mxu0
    %v3489 = vadd.f32 %v3418, %v3488
    %3490 = vdwg.mxu0
    %v3491 = vadd.f32 %v3487, %v3489
    %3492 = vadd.xlane.f32.xlu0 %v3491
    %v3493 = vpop.xlane.xlu0 %3492
    %v3494 = vrcp.pop 256.0
    %v3495 = vmul.f32 %v3493, %v3494
    %v3496 = vsub.f32 %v3487, %v3495
    %v3497 = vsub.f32 %v3489, %v3495
    %v3498 = vmul.f32 %v3496, %v3496
    %v3499 = vmul.f32 %v3497, %v3497
    %v3500 = vadd.f32 %v3498, %v3499
    %3501 = vadd.xlane.f32.xlu0 %v3500
    %v3502 = vpop.xlane.xlu0 %3501
    %v3503 = vmul.f32 %v3502, %v3494
    %v3504 = vadd.f32 %v3503, 1e-05
    %v3505 = vrsqrt.pop %v3504
    %v3506 = vmul.f32 %v3496, %v3505
    %v3507 = vmul.f32 %v3497, %v3505
    %v3508 = vlaneseq
    %v3509 = vshrl.u32 %v3508, 7
    %v3510 = vsub.s32 1, %v3509
    %v3511 = vrot.slane %v1706, %v3510
    %v3512 = vlaneseq
    %v3513 = vshrl.u32 %v3512, 7
    %v3514 = vsub.s32 1, %v3513
    %v3515 = vrot.slane %v1707, %v3514
    %v3516 = vmul.f32 %v3506, %v3511
    %v3517 = vmul.f32 %v3507, %v3515
    %v3518 = vlaneseq
    %v3519 = vshrl.u32 %v3518, 7
    %v3520 = vsub.s32 2, %v3519
    %v3521 = vrot.slane %v1706, %v3520
    %v3522 = vlaneseq
    %v3523 = vshrl.u32 %v3522, 7
    %v3524 = vsub.s32 2, %v3523
    %v3525 = vrot.slane %v1707, %v3524
    %v3526 = vadd.f32 %v3516, %v3521
    %v3527 = vadd.f32 %v3517, %v3525
    %v3528 = vmax.f32 %v3526, 0.0
    %v3529 = vmax.f32 %v3527, 0.0
    %v3530 = vld [vmem:[#allocation6] sm:$0xff]
    %v3531 = vld [vmem:[#allocation6 + $0x8] sm:$0xff]
    %v3532 = vld [vmem:[#allocation6 + $0x10] sm:$0xff]
    %v3533 = vld [vmem:[#allocation6 + $0x18] sm:$0xff]
    %v3534 = vld [vmem:[#allocation6 + $0x20] sm:$0xff]
    %v3535 = vld [vmem:[#allocation6 + $0x28] sm:$0xff]
    %v3536 = vld [vmem:[#allocation6 + $0x30] sm:$0xff]
    %v3537 = vld [vmem:[#allocation6 + $0x38] sm:$0xff]
    %v3538 = vld [vmem:[#allocation6 + $0x40] sm:$0xff]
    %v3539 = vld [vmem:[#allocation6 + $0x48] sm:$0xff]
    %v3540 = vld [vmem:[#allocation6 + $0x50] sm:$0xff]
    %v3541 = vld [vmem:[#allocation6 + $0x58] sm:$0xff]
    %v3542 = vld [vmem:[#allocation6 + $0x60] sm:$0xff]
    %v3543 = vld [vmem:[#allocation6 + $0x68] sm:$0xff]
    %v3544 = vld [vmem:[#allocation6 + $0x70] sm:$0xff]
    %v3545 = vld [vmem:[#allocation6 + $0x78] sm:$0xff]
    %v3546 = vld [vmem:[#allocation6 + $0x80] sm:$0xff]
    %v3547 = vld [vmem:[#allocation6 + $0x88] sm:$0xff]
    %v3548 = vld [vmem:[#allocation6 + $0x90] sm:$0xff]
    %v3549 = vld [vmem:[#allocation6 + $0x98] sm:$0xff]
    %v3550 = vld [vmem:[#allocation6 + $0xa0] sm:$0xff]
    %v3551 = vld [vmem:[#allocation6 + $0xa8] sm:$0xff]
    %v3552 = vld [vmem:[#allocation6 + $0xb0] sm:$0xff]
    %v3553 = vld [vmem:[#allocation6 + $0xb8] sm:$0xff]
    %v3554 = vld [vmem:[#allocation6 + $0xc0] sm:$0xff]
    %v3555 = vld [vmem:[#allocation6 + $0xc8] sm:$0xff]
    %v3556 = vld [vmem:[#allocation6 + $0xd0] sm:$0xff]
    %v3557 = vld [vmem:[#allocation6 + $0xd8] sm:$0xff]
    %v3558 = vld [vmem:[#allocation6 + $0xe0] sm:$0xff]
    %v3559 = vld [vmem:[#allocation6 + $0xe8] sm:$0xff]
    %v3560 = vld [vmem:[#allocation6 + $0xf0] sm:$0xff]
    %v3561 = vld [vmem:[#allocation6 + $0xf8] sm:$0xff]
    %v3562 = vlaneseq
    %v3563 = vshrl.u32 %v3562, 7
    %v3564 = vsub.s32 3, %v3563
    %v3565 = vrot.slane %v1706, %v3564
    %3566 = vmatprep.subr.mxu0 0.0
    %3567 = vmatpush1.msra.mxu0 %v3530
    %3568 = vmatprep.subr.mxu0 0.0
    %3569 = vmatpush1.msra.mxu0 %v3531
    %3570 = vmatprep.subr.mxu0 0.0
    %3571 = vmatpush1.msra.mxu0 %v3532
    %3572 = vmatprep.subr.mxu0 0.0
    %3573 = vmatpush1.msra.mxu0 %v3533
    %3574 = vmatprep.subr.mxu0 0.0
    %3575 = vmatpush1.msra.mxu0 %v3534
    %3576 = vmatprep.subr.mxu0 0.0
    %3577 = vmatpush1.msra.mxu0 %v3535
    %3578 = vmatprep.subr.mxu0 0.0
    %3579 = vmatpush1.msra.mxu0 %v3536
    %3580 = vmatprep.subr.mxu0 0.0
    %3581 = vmatpush1.msra.mxu0 %v3537
    %3582 = vmatprep.subr.mxu0 0.0
    %3583 = vmatpush1.msra.mxu0 %v3538
    %3584 = vmatprep.subr.mxu0 0.0
    %3585 = vmatpush1.msra.mxu0 %v3539
    %3586 = vmatprep.subr.mxu0 0.0
    %3587 = vmatpush1.msra.mxu0 %v3540
    %3588 = vmatprep.subr.mxu0 0.0
    %3589 = vmatpush1.msra.mxu0 %v3541
    %3590 = vmatprep.subr.mxu0 0.0
    %3591 = vmatpush1.msra.mxu0 %v3542
    %3592 = vmatprep.subr.mxu0 0.0
    %3593 = vmatpush1.msra.mxu0 %v3543
    %3594 = vmatprep.subr.mxu0 0.0
    %3595 = vmatpush1.msra.mxu0 %v3544
    %3596 = vmatprep.subr.mxu0 0.0
    %3597 = vmatpush1.msra.mxu0 %v3545
    %3598 = vmatprep.subr.mxu0 0.0
    %3599 = vmatpush1.msra.mxu0 %v3546
    %3600 = vmatprep.subr.mxu0 0.0
    %3601 = vmatpush1.msra.mxu0 %v3547
    %3602 = vmatprep.subr.mxu0 0.0
    %3603 = vmatpush1.msra.mxu0 %v3548
    %3604 = vmatprep.subr.mxu0 0.0
    %3605 = vmatpush1.msra.mxu0 %v3549
    %3606 = vmatprep.subr.mxu0 0.0
    %3607 = vmatpush1.msra.mxu0 %v3550
    %3608 = vmatprep.subr.mxu0 0.0
    %3609 = vmatpush1.msra.mxu0 %v3551
    %3610 = vmatprep.subr.mxu0 0.0
    %3611 = vmatpush1.msra.mxu0 %v3552
    %3612 = vmatprep.subr.mxu0 0.0
    %3613 = vmatpush1.msra.mxu0 %v3553
    %3614 = vmatprep.subr.mxu0 0.0
    %3615 = vmatpush1.msra.mxu0 %v3554
    %3616 = vmatprep.subr.mxu0 0.0
    %3617 = vmatpush1.msra.mxu0 %v3555
    %3618 = vmatprep.subr.mxu0 0.0
    %3619 = vmatpush1.msra.mxu0 %v3556
    %3620 = vmatprep.subr.mxu0 0.0
    %3621 = vmatpush1.msra.mxu0 %v3557
    %3622 = vmatprep.subr.mxu0 0.0
    %3623 = vmatpush1.msra.mxu0 %v3558
    %3624 = vmatprep.subr.mxu0 0.0
    %3625 = vmatpush1.msra.mxu0 %v3559
    %3626 = vmatprep.subr.mxu0 0.0
    %3627 = vmatpush1.msra.mxu0 %v3560
    %3628 = vmatprep.subr.mxu0 0.0
    %3629 = vmatpush1.msra.mxu0 %v3561
    %3630 = vmatprep.mubr.f32.mxu0 %v3529
    %3631 = vmatmul.mubr.f32.gmra.mrb[0].mxu0 %v3528
    %v3632 = vpop.f32.mrb[0].mxu0
    %v3633 = vadd.f32 %v3565, %v3632
    %v3634 = vpop.f32.mrb[0].mxu0
    %3635 = vdwg.mxu0
    %3636 = vst [vmem:[%s4] sm:$0xff] %v3633
    // Predicated region
    $region30: #{audio_open_smile_forward.1} parent=1 // pred_check
      _
    $region31: #{audio_open_smile_forward.1} parent=1 // pred_check_branch
      %3638 = sbr.rel (0) target = $region33
    $region32: #{audio_open_smile_forward.1} parent=1 // pred_region
      _
    $region33: #{audio_open_smile_forward.1} parent=1 // pred_fallthru
      _
    // Predicated region
    $region34: #{audio_open_smile_forward.1} parent=1 // pred_check
      _
    $region35: #{audio_open_smile_forward.1} parent=1 // pred_check_branch
      %3640 = sbr.rel (0) target = $region37
    $region36: #{audio_open_smile_forward.1} parent=1 // pred_region
      _
    $region37: #{audio_open_smile_forward.1} parent=1 // pred_fallthru
      _
    %3641 = vsyncpa [#allocation3], 1
    %3642 = vsyncpa [#allocation5], 1

</llo_original>
